<compile_context>
chip_gen: v5e
topology: v5e:2x2
jax: 0.10.0
libtpu: 0.0.40
codegen_flags: <defaults>
</compile_context>

<pallas_src>
import jax
import jax.numpy as jnp
from jax.experimental import pallas as pl
from jax.experimental.pallas import tpu as pltpu

NEG_SLOPE = 0.01


def _leaky(v):
    return jnp.where(v > 0, v, NEG_SLOPE * v)


@jax.jit
def basic_block_sep(x, params):
    """x: (N, H, W, C) NHWC float32. Returns (N, H, W, C)."""
    (wdw1, s1, b1, wpw1, s2, b2, wdw2, s3, b3, wpw2, s4, b4) = params
    N, H, W, C = x.shape
    P = wpw1.shape[1]
    assert C == P, "residual path requires inplanes == planes (downsample=None)"

    f32 = jnp.float32
    LC = W * C            # packed lane width of activations  (multiple of 128)
    LPAD = (W + 2) * C    # packed lane width of the zero-padded scratch

    # ---- fold BN scale into the conv weights (inference semantics) ----------
    wdw1f = wdw1 * s1.reshape(1, 1, C)            # (3, 3, C)
    wpw1f = wpw1 * s2.reshape(1, P)               # (C, P)
    wdw2f = wdw2 * s3.reshape(1, 1, P)            # (3, 3, P)
    wpw2f = wpw2 * s4.reshape(1, P)               # (P, P)

    # ---- lane-dense packing: collapse (W, C) into the last (lane) dim -------
    xp = x.reshape(N, H, LC)
    wdw1t = jnp.tile(wdw1f, (1, 1, W))            # (3, 3, W*C)
    wdw2t = jnp.tile(wdw2f, (1, 1, W))            # (3, 3, W*P)
    b1t = jnp.tile(b1.reshape(1, C), (1, W))      # (1, W*C)
    b2t = jnp.tile(b2.reshape(1, P), (1, W))
    b3t = jnp.tile(b3.reshape(1, P), (1, W))
    b4t = jnp.tile(b4.reshape(1, P), (1, W))
    eye_w = jnp.eye(W, dtype=f32)
    # Block-diagonal pointwise weights: keeps the 1x1 convs as one matmul in
    # the packed layout (no in-kernel reshape). MXU is idle at this size, so
    # the extra FLOPs are free.
    wpw1big = jnp.kron(eye_w, wpw1f.astype(f32))  # (W*C, W*P)
    wpw2big = jnp.kron(eye_w, wpw2f.astype(f32))  # (W*P, W*P)

    def kernel(x_ref, wdw1_ref, b1_ref, wpw1_ref, b2_ref,
               wdw2_ref, b3_ref, wpw2_ref, b4_ref, out_ref,
               pad1_ref, pad2_ref):
        # Re-zero only the 1-wide halo border each step (cheap, and correct
        # regardless of which megacore TC executes which grid step). The
        # interior is fully overwritten below.
        for pad_ref in (pad1_ref, pad2_ref):
            pad_ref[0:1, :] = jnp.zeros((1, LPAD), f32)
            pad_ref[H + 1:H + 2, :] = jnp.zeros((1, LPAD), f32)
            pad_ref[1:H + 1, 0:C] = jnp.zeros((H, C), f32)
            pad_ref[1:H + 1, LPAD - C:LPAD] = jnp.zeros((H, C), f32)

        def dw3x3(pad_ref, val, wdw):
            # val: (H, W*ch) packed activation; wdw: (3, 3, W*ch) channel-tiled,
            # BN-scale already folded in.
            pad_ref[1:H + 1, C:C + LC] = val
            acc = jnp.zeros((H, LC), f32)
            for kh in range(3):
                for kw in range(3):
                    tap = pad_ref[kh:kh + H, kw * C:kw * C + LC]
                    acc = acc + tap * wdw[kh, kw]
            return acc

        # conv_sep1: depthwise 3x3 -> BN(shift) -> leaky -> 1x1 (MXU) -> BN -> leaky
        y = _leaky(dw3x3(pad1_ref, x_ref[0].astype(f32), wdw1_ref[...])
                   + b1_ref[...])
        # NOTE: on v6e/v7x these matmul operands could be cast to bf16 (native
        # MXU path); kept f32 here to stay within the 1e-3 tolerance vs. the
        # f32 reference — the MXU is not the binding unit at this size.
        z = _leaky(jnp.dot(y, wpw1_ref[...], preferred_element_type=f32)
                   + b2_ref[...])

        # conv2: depthwise 3x3 -> BN(shift) -> leaky -> 1x1 (MXU) -> BN (no relu)
        u = _leaky(dw3x3(pad2_ref, z, wdw2_ref[...]) + b3_ref[...])
        v = jnp.dot(u, wpw2_ref[...], preferred_element_type=f32) + b4_ref[...]

        # Residual add (re-read x from VMEM to keep vreg pressure low) + leaky.
        out_ref[0] = _leaky(v + x_ref[0].astype(f32)).astype(out_ref.dtype)

    def full(arr):
        nd = arr.ndim
        return pl.BlockSpec(arr.shape, lambda n, _nd=nd: (0,) * _nd)

    # TODO(synk): for production-sized H*W*C, tile H into halo'd bands so the
    # resident VMEM stays well under v7x's 64 MiB and both TCs get work at N=1.
    grid_spec = pltpu.PrefetchScalarGridSpec(
        num_scalar_prefetch=0,
        grid=(N,),
        in_specs=[
            pl.BlockSpec((1, H, LC), lambda n: (n, 0, 0)),
            full(wdw1t), full(b1t), full(wpw1big), full(b2t),
            full(wdw2t), full(b3t), full(wpw2big), full(b4t),
        ],
        out_specs=pl.BlockSpec((1, H, LC), lambda n: (n, 0, 0)),
        scratch_shapes=[
            pltpu.VMEM((H + 2, LPAD), f32),
            pltpu.VMEM((H + 2, LPAD), f32),
        ],
    )

    out_packed = pl.pallas_call(
        kernel,
        out_shape=jax.ShapeDtypeStruct((N, H, LC), x.dtype),
        grid_spec=grid_spec,
        compiler_params=pltpu.CompilerParams(
            dimension_semantics=("parallel",)),
    )(xp, wdw1t, b1t, wpw1big, b2t, wdw2t, b3t, wpw2big, b4t)
    return out_packed.reshape(N, H, W, P)


def make_params(key, C, P):
    ks = jax.random.split(key, 20)
    eps = 1e-5

    def bn_fold(kg, kb, km, kv, ch):
        gamma = 1.0 + 0.1 * jax.random.normal(kg, (ch,), jnp.float32)
        beta = 0.1 * jax.random.normal(kb, (ch,), jnp.float32)
        mean = 0.1 * jax.random.normal(km, (ch,), jnp.float32)
        var = jax.nn.softplus(jax.random.normal(kv, (ch,), jnp.float32)) + 0.5
        scale = gamma / jnp.sqrt(var + eps)
        shift = beta - mean * scale
        return scale.reshape(1, ch), shift.reshape(1, ch)

    wdw1 = 0.2 * jax.random.normal(ks[0], (3, 3, C), jnp.float32)
    s1, b1 = bn_fold(ks[1], ks[2], ks[3], ks[4], C)
    wpw1 = 0.2 * jax.random.normal(ks[5], (C, P), jnp.float32)
    s2, b2 = bn_fold(ks[6], ks[7], ks[8], ks[9], P)
    wdw2 = 0.2 * jax.random.normal(ks[10], (3, 3, P), jnp.float32)
    s3, b3 = bn_fold(ks[11], ks[12], ks[13], ks[14], P)
    wpw2 = 0.2 * jax.random.normal(ks[15], (P, P), jnp.float32)
    s4, b4 = bn_fold(ks[16], ks[17], ks[18], ks[19], P)
    return (wdw1, s1, b1, wpw1, s2, b2, wdw2, s3, b3, wpw2, s4, b4)


def reference(x, params):
    (wdw1, s1, b1, wpw1, s2, b2, wdw2, s3, b3, wpw2, s4, b4) = params
    leaky = lambda v: jnp.where(v > 0, v, NEG_SLOPE * v)

    def dw(inp, w):  # depthwise 3x3, pad 1
        ch = inp.shape[-1]
        wk = w.reshape(3, 3, 1, ch)
        return jax.lax.conv_general_dilated(
            inp, wk, window_strides=(1, 1), padding=((1, 1), (1, 1)),
            dimension_numbers=("NHWC", "HWIO", "NHWC"),
            feature_group_count=ch)

    y = leaky(dw(x, wdw1) * s1 + b1)
    z = leaky(jnp.einsum("nhwc,cp->nhwp", y, wpw1) * s2 + b2)
    u = leaky(dw(z, wdw2) * s3 + b3)
    v = jnp.einsum("nhwc,cp->nhwp", u, wpw2) * s4 + b4
    return leaky(v + x)


if __name__ == "__main__":
    key = jax.random.PRNGKey(0)
    kx, kp = jax.random.split(key)

    # inplanes = planes = 32, stride=1, dilation=1, downsample=None
    N, H, W, C = 2, 16, 16, 32
    x = jax.random.normal(kx, (N, H, W, C), jnp.float32)
    params = make_params(kp, C, C)

    out = jax.block_until_ready(basic_block_sep(x, params))
    ref = jax.block_until_ready(reference(x, params))

    assert out.shape == ref.shape == (N, H, W, C)
    err = float(jnp.max(jnp.abs(out - ref)))
    if err < 1e-3:
        print("KERNEL_OK")
    else:
        raise SystemExit(f"mismatch: max abs err = {err}")
</pallas_src>

<mosaic_0001>
module attributes {stable_mosaic.version = 11 : i64} {
  func.func @kernel(%arg0: i32, %arg1: memref<1x16x512xf32, #tpu.memory_space<vmem>>, %arg2: memref<3x3x512xf32, #tpu.memory_space<vmem>>, %arg3: memref<1x512xf32, #tpu.memory_space<vmem>>, %arg4: memref<512x512xf32, #tpu.memory_space<vmem>>, %arg5: memref<1x512xf32, #tpu.memory_space<vmem>>, %arg6: memref<3x3x512xf32, #tpu.memory_space<vmem>>, %arg7: memref<1x512xf32, #tpu.memory_space<vmem>>, %arg8: memref<512x512xf32, #tpu.memory_space<vmem>>, %arg9: memref<1x512xf32, #tpu.memory_space<vmem>>, %arg10: memref<1x16x512xf32, #tpu.memory_space<vmem>>, %arg11: memref<18x576xf32, #tpu.memory_space<vmem>>, %arg12: memref<18x576xf32, #tpu.memory_space<vmem>>) attributes {dimension_semantics = [#tpu.dimension_semantics<parallel>], iteration_bounds = array<i64: 2>, scalar_prefetch = 0 : i64, scratch_operands = 2 : i64, tpu.core_type = #tpu.core_type<tc>, window_params = [{transform_indices = @transform_0, window_bounds = array<i64: 1, 16, 512>}, {pipeline_mode = #tpu.pipeline_mode<synchronous>, transform_indices = @transform_1, window_bounds = array<i64: 3, 3, 512>}, {pipeline_mode = #tpu.pipeline_mode<synchronous>, transform_indices = @transform_2, window_bounds = array<i64: 1, 512>}, {pipeline_mode = #tpu.pipeline_mode<synchronous>, transform_indices = @transform_3, window_bounds = array<i64: 512, 512>}, {pipeline_mode = #tpu.pipeline_mode<synchronous>, transform_indices = @transform_4, window_bounds = array<i64: 1, 512>}, {pipeline_mode = #tpu.pipeline_mode<synchronous>, transform_indices = @transform_5, window_bounds = array<i64: 3, 3, 512>}, {pipeline_mode = #tpu.pipeline_mode<synchronous>, transform_indices = @transform_6, window_bounds = array<i64: 1, 512>}, {pipeline_mode = #tpu.pipeline_mode<synchronous>, transform_indices = @transform_7, window_bounds = array<i64: 512, 512>}, {pipeline_mode = #tpu.pipeline_mode<synchronous>, transform_indices = @transform_8, window_bounds = array<i64: 1, 512>}, {transform_indices = @transform_9, window_bounds = array<i64: 1, 16, 512>}]} {
    %cst = arith.constant 0.000000e+00 : f32
    %0 = vector.broadcast %cst : f32 to vector<1x576xf32>
    %c0 = arith.constant 0 : index
    %c0_0 = arith.constant 0 : index
    %1 = vector.load %arg11[%c0, %c0_0] : memref<18x576xf32, #tpu.memory_space<vmem>>, vector<1x576xf32>
    tpu.vector_store %arg11[%c0, %c0_0], %0 {strides = array<i32>} : memref<18x576xf32, #tpu.memory_space<vmem>>, vector<1x576xf32>,
    %cst_1 = arith.constant 0.000000e+00 : f32
    %2 = vector.broadcast %cst_1 : f32 to vector<1x576xf32>
    %c17 = arith.constant 17 : index
    %c0_2 = arith.constant 0 : index
    %3 = vector.load %arg11[%c17, %c0_2] : memref<18x576xf32, #tpu.memory_space<vmem>>, vector<1x576xf32>
    tpu.vector_store %arg11[%c17, %c0_2], %2 {strides = array<i32>} : memref<18x576xf32, #tpu.memory_space<vmem>>, vector<1x576xf32>,
    %cst_3 = arith.constant 0.000000e+00 : f32
    %4 = vector.broadcast %cst_3 : f32 to vector<16x32xf32>
    %c1 = arith.constant 1 : index
    %c0_4 = arith.constant 0 : index
    %5 = vector.load %arg11[%c1, %c0_4] : memref<18x576xf32, #tpu.memory_space<vmem>>, vector<16x32xf32>
    tpu.vector_store %arg11[%c1, %c0_4], %4 {strides = array<i32>} : memref<18x576xf32, #tpu.memory_space<vmem>>, vector<16x32xf32>,
    %cst_5 = arith.constant 0.000000e+00 : f32
    %6 = vector.broadcast %cst_5 : f32 to vector<16x32xf32>
    %c1_6 = arith.constant 1 : index
    %c544 = arith.constant 544 : index
    %7 = vector.load %arg11[%c1_6, %c544] : memref<18x576xf32, #tpu.memory_space<vmem>>, vector<16x32xf32>
    tpu.vector_store %arg11[%c1_6, %c544], %6 {strides = array<i32>} : memref<18x576xf32, #tpu.memory_space<vmem>>, vector<16x32xf32>,
    %cst_7 = arith.constant 0.000000e+00 : f32
    %8 = vector.broadcast %cst_7 : f32 to vector<1x576xf32>
    %c0_8 = arith.constant 0 : index
    %c0_9 = arith.constant 0 : index
    %9 = vector.load %arg12[%c0_8, %c0_9] : memref<18x576xf32, #tpu.memory_space<vmem>>, vector<1x576xf32>
    tpu.vector_store %arg12[%c0_8, %c0_9], %8 {strides = array<i32>} : memref<18x576xf32, #tpu.memory_space<vmem>>, vector<1x576xf32>,
    %cst_10 = arith.constant 0.000000e+00 : f32
    %10 = vector.broadcast %cst_10 : f32 to vector<1x576xf32>
    %c17_11 = arith.constant 17 : index
    %c0_12 = arith.constant 0 : index
    %11 = vector.load %arg12[%c17_11, %c0_12] : memref<18x576xf32, #tpu.memory_space<vmem>>, vector<1x576xf32>
    tpu.vector_store %arg12[%c17_11, %c0_12], %10 {strides = array<i32>} : memref<18x576xf32, #tpu.memory_space<vmem>>, vector<1x576xf32>,
    %cst_13 = arith.constant 0.000000e+00 : f32
    %12 = vector.broadcast %cst_13 : f32 to vector<16x32xf32>
    %c1_14 = arith.constant 1 : index
    %c0_15 = arith.constant 0 : index
    %13 = vector.load %arg12[%c1_14, %c0_15] : memref<18x576xf32, #tpu.memory_space<vmem>>, vector<16x32xf32>
    tpu.vector_store %arg12[%c1_14, %c0_15], %12 {strides = array<i32>} : memref<18x576xf32, #tpu.memory_space<vmem>>, vector<16x32xf32>,
    %cst_16 = arith.constant 0.000000e+00 : f32
    %14 = vector.broadcast %cst_16 : f32 to vector<16x32xf32>
    %c1_17 = arith.constant 1 : index
    %c544_18 = arith.constant 544 : index
    %15 = vector.load %arg12[%c1_17, %c544_18] : memref<18x576xf32, #tpu.memory_space<vmem>>, vector<16x32xf32>
    tpu.vector_store %arg12[%c1_17, %c544_18], %14 {strides = array<i32>} : memref<18x576xf32, #tpu.memory_space<vmem>>, vector<16x32xf32>,
    %c0_19 = arith.constant 0 : index
    %c0_20 = arith.constant 0 : index
    %c0_21 = arith.constant 0 : index
    %16 = vector.load %arg1[%c0_19, %c0_20, %c0_21] : memref<1x16x512xf32, #tpu.memory_space<vmem>>, vector<1x16x512xf32>
    %17 = vector.shape_cast %16 : vector<1x16x512xf32> to vector<16x512xf32>
    %c0_22 = arith.constant 0 : index
    %c0_23 = arith.constant 0 : index
    %c0_24 = arith.constant 0 : index
    %18 = vector.load %arg2[%c0_22, %c0_23, %c0_24] : memref<3x3x512xf32, #tpu.memory_space<vmem>>, vector<3x3x512xf32>
    %c1_25 = arith.constant 1 : index
    %c32 = arith.constant 32 : index
    %19 = vector.load %arg11[%c1_25, %c32] : memref<18x576xf32, #tpu.memory_space<vmem>>, vector<16x512xf32>
    tpu.vector_store %arg11[%c1_25, %c32], %17 {strides = array<i32>} : memref<18x576xf32, #tpu.memory_space<vmem>>, vector<16x512xf32>,
    %cst_26 = arith.constant 0.000000e+00 : f32
    %20 = vector.broadcast %cst_26 : f32 to vector<16x512xf32>
    %c0_27 = arith.constant 0 : index
    %c0_28 = arith.constant 0 : index
    %21 = vector.load %arg11[%c0_27, %c0_28] : memref<18x576xf32, #tpu.memory_space<vmem>>, vector<16x512xf32>
    %22 = vector.extract_strided_slice %18 {offsets = [0, 0, 0], sizes = [1, 1, 512], strides = [1, 1, 1]} : vector<3x3x512xf32> to vector<1x1x512xf32>
    %23 = vector.shape_cast %22 : vector<1x1x512xf32> to vector<512xf32>
    %24 = vector.shape_cast %23 : vector<512xf32> to vector<1x512xf32>
    %25 = vector.broadcast %24 : vector<1x512xf32> to vector<16x512xf32>
    %26 = arith.mulf %21, %25 : vector<16x512xf32>
    %27 = arith.addf %20, %26 : vector<16x512xf32>
    %c0_29 = arith.constant 0 : index
    %c32_30 = arith.constant 32 : index
    %28 = vector.load %arg11[%c0_29, %c32_30] : memref<18x576xf32, #tpu.memory_space<vmem>>, vector<16x512xf32>
    %29 = vector.extract_strided_slice %18 {offsets = [0, 1, 0], sizes = [1, 1, 512], strides = [1, 1, 1]} : vector<3x3x512xf32> to vector<1x1x512xf32>
    %30 = vector.shape_cast %29 : vector<1x1x512xf32> to vector<512xf32>
    %31 = vector.shape_cast %30 : vector<512xf32> to vector<1x512xf32>
    %32 = vector.broadcast %31 : vector<1x512xf32> to vector<16x512xf32>
    %33 = arith.mulf %28, %32 : vector<16x512xf32>
    %34 = arith.addf %27, %33 : vector<16x512xf32>
    %c0_31 = arith.constant 0 : index
    %c64 = arith.constant 64 : index
    %35 = vector.load %arg11[%c0_31, %c64] : memref<18x576xf32, #tpu.memory_space<vmem>>, vector<16x512xf32>
    %36 = vector.extract_strided_slice %18 {offsets = [0, 2, 0], sizes = [1, 1, 512], strides = [1, 1, 1]} : vector<3x3x512xf32> to vector<1x1x512xf32>
    %37 = vector.shape_cast %36 : vector<1x1x512xf32> to vector<512xf32>
    %38 = vector.shape_cast %37 : vector<512xf32> to vector<1x512xf32>
    %39 = vector.broadcast %38 : vector<1x512xf32> to vector<16x512xf32>
    %40 = arith.mulf %35, %39 : vector<16x512xf32>
    %41 = arith.addf %34, %40 : vector<16x512xf32>
    %c1_32 = arith.constant 1 : index
    %c0_33 = arith.constant 0 : index
    %42 = vector.load %arg11[%c1_32, %c0_33] : memref<18x576xf32, #tpu.memory_space<vmem>>, vector<16x512xf32>
    %43 = vector.extract_strided_slice %18 {offsets = [1, 0, 0], sizes = [1, 1, 512], strides = [1, 1, 1]} : vector<3x3x512xf32> to vector<1x1x512xf32>
    %44 = vector.shape_cast %43 : vector<1x1x512xf32> to vector<512xf32>
    %45 = vector.shape_cast %44 : vector<512xf32> to vector<1x512xf32>
    %46 = vector.broadcast %45 : vector<1x512xf32> to vector<16x512xf32>
    %47 = arith.mulf %42, %46 : vector<16x512xf32>
    %48 = arith.addf %41, %47 : vector<16x512xf32>
    %c1_34 = arith.constant 1 : index
    %c32_35 = arith.constant 32 : index
    %49 = vector.load %arg11[%c1_34, %c32_35] : memref<18x576xf32, #tpu.memory_space<vmem>>, vector<16x512xf32>
    %50 = vector.extract_strided_slice %18 {offsets = [1, 1, 0], sizes = [1, 1, 512], strides = [1, 1, 1]} : vector<3x3x512xf32> to vector<1x1x512xf32>
    %51 = vector.shape_cast %50 : vector<1x1x512xf32> to vector<512xf32>
    %52 = vector.shape_cast %51 : vector<512xf32> to vector<1x512xf32>
    %53 = vector.broadcast %52 : vector<1x512xf32> to vector<16x512xf32>
    %54 = arith.mulf %49, %53 : vector<16x512xf32>
    %55 = arith.addf %48, %54 : vector<16x512xf32>
    %c1_36 = arith.constant 1 : index
    %c64_37 = arith.constant 64 : index
    %56 = vector.load %arg11[%c1_36, %c64_37] : memref<18x576xf32, #tpu.memory_space<vmem>>, vector<16x512xf32>
    %57 = vector.extract_strided_slice %18 {offsets = [1, 2, 0], sizes = [1, 1, 512], strides = [1, 1, 1]} : vector<3x3x512xf32> to vector<1x1x512xf32>
    %58 = vector.shape_cast %57 : vector<1x1x512xf32> to vector<512xf32>
    %59 = vector.shape_cast %58 : vector<512xf32> to vector<1x512xf32>
    %60 = vector.broadcast %59 : vector<1x512xf32> to vector<16x512xf32>
    %61 = arith.mulf %56, %60 : vector<16x512xf32>
    %62 = arith.addf %55, %61 : vector<16x512xf32>
    %c2 = arith.constant 2 : index
    %c0_38 = arith.constant 0 : index
    %63 = vector.load %arg11[%c2, %c0_38] : memref<18x576xf32, #tpu.memory_space<vmem>>, vector<16x512xf32>
    %64 = vector.extract_strided_slice %18 {offsets = [2, 0, 0], sizes = [1, 1, 512], strides = [1, 1, 1]} : vector<3x3x512xf32> to vector<1x1x512xf32>
    %65 = vector.shape_cast %64 : vector<1x1x512xf32> to vector<512xf32>
    %66 = vector.shape_cast %65 : vector<512xf32> to vector<1x512xf32>
    %67 = vector.broadcast %66 : vector<1x512xf32> to vector<16x512xf32>
    %68 = arith.mulf %63, %67 : vector<16x512xf32>
    %69 = arith.addf %62, %68 : vector<16x512xf32>
    %c2_39 = arith.constant 2 : index
    %c32_40 = arith.constant 32 : index
    %70 = vector.load %arg11[%c2_39, %c32_40] : memref<18x576xf32, #tpu.memory_space<vmem>>, vector<16x512xf32>
    %71 = vector.extract_strided_slice %18 {offsets = [2, 1, 0], sizes = [1, 1, 512], strides = [1, 1, 1]} : vector<3x3x512xf32> to vector<1x1x512xf32>
    %72 = vector.shape_cast %71 : vector<1x1x512xf32> to vector<512xf32>
    %73 = vector.shape_cast %72 : vector<512xf32> to vector<1x512xf32>
    %74 = vector.broadcast %73 : vector<1x512xf32> to vector<16x512xf32>
    %75 = arith.mulf %70, %74 : vector<16x512xf32>
    %76 = arith.addf %69, %75 : vector<16x512xf32>
    %c2_41 = arith.constant 2 : index
    %c64_42 = arith.constant 64 : index
    %77 = vector.load %arg11[%c2_41, %c64_42] : memref<18x576xf32, #tpu.memory_space<vmem>>, vector<16x512xf32>
    %78 = vector.extract_strided_slice %18 {offsets = [2, 2, 0], sizes = [1, 1, 512], strides = [1, 1, 1]} : vector<3x3x512xf32> to vector<1x1x512xf32>
    %79 = vector.shape_cast %78 : vector<1x1x512xf32> to vector<512xf32>
    %80 = vector.shape_cast %79 : vector<512xf32> to vector<1x512xf32>
    %81 = vector.broadcast %80 : vector<1x512xf32> to vector<16x512xf32>
    %82 = arith.mulf %77, %81 : vector<16x512xf32>
    %83 = arith.addf %76, %82 : vector<16x512xf32>
    %c0_43 = arith.constant 0 : index
    %c0_44 = arith.constant 0 : index
    %84 = vector.load %arg3[%c0_43, %c0_44] : memref<1x512xf32, #tpu.memory_space<vmem>>, vector<1x512xf32>
    %85 = vector.broadcast %84 : vector<1x512xf32> to vector<16x512xf32>
    %86 = arith.addf %83, %85 : vector<16x512xf32>
    %cst_45 = arith.constant 0.000000e+00 : f32
    %87 = vector.broadcast %cst_45 : f32 to vector<16x512xf32>
    %88 = arith.cmpf ogt, %86, %87 : vector<16x512xf32>
    %cst_46 = arith.constant 0.00999999977 : f32
    %89 = vector.broadcast %cst_46 : f32 to vector<16x512xf32>
    %90 = arith.mulf %89, %86 : vector<16x512xf32>
    %91 = arith.select %88, %86, %90 : vector<16x512xi1>, vector<16x512xf32>
    %c0_47 = arith.constant 0 : index
    %c0_48 = arith.constant 0 : index
    %92 = vector.load %arg4[%c0_47, %c0_48] : memref<512x512xf32, #tpu.memory_space<vmem>>, vector<512x512xf32>
    %cst_49 = arith.constant dense<0.000000e+00> : vector<16x512xf32>
    %93 = tpu.matmul %91, %92, %cst_49 {dimension_numbers = #tpu.dot_dimension_numbers<[1], [0], [0], [1], [0, 0, 1, 1], [], []>} : vector<16x512xf32>, vector<512x512xf32>, vector<16x512xf32> -> vector<16x512xf32>
    %c0_50 = arith.constant 0 : index
    %c0_51 = arith.constant 0 : index
    %94 = vector.load %arg5[%c0_50, %c0_51] : memref<1x512xf32, #tpu.memory_space<vmem>>, vector<1x512xf32>
    %95 = vector.broadcast %94 : vector<1x512xf32> to vector<16x512xf32>
    %96 = arith.addf %93, %95 : vector<16x512xf32>
    %cst_52 = arith.constant 0.000000e+00 : f32
    %97 = vector.broadcast %cst_52 : f32 to vector<16x512xf32>
    %98 = arith.cmpf ogt, %96, %97 : vector<16x512xf32>
    %cst_53 = arith.constant 0.00999999977 : f32
    %99 = vector.broadcast %cst_53 : f32 to vector<16x512xf32>
    %100 = arith.mulf %99, %96 : vector<16x512xf32>
    %101 = arith.select %98, %96, %100 : vector<16x512xi1>, vector<16x512xf32>
    %c0_54 = arith.constant 0 : index
    %c0_55 = arith.constant 0 : index
    %c0_56 = arith.constant 0 : index
    %102 = vector.load %arg6[%c0_54, %c0_55, %c0_56] : memref<3x3x512xf32, #tpu.memory_space<vmem>>, vector<3x3x512xf32>
    %c1_57 = arith.constant 1 : index
    %c32_58 = arith.constant 32 : index
    %103 = vector.load %arg12[%c1_57, %c32_58] : memref<18x576xf32, #tpu.memory_space<vmem>>, vector<16x512xf32>
    tpu.vector_store %arg12[%c1_57, %c32_58], %101 {strides = array<i32>} : memref<18x576xf32, #tpu.memory_space<vmem>>, vector<16x512xf32>,
    %cst_59 = arith.constant 0.000000e+00 : f32
    %104 = vector.broadcast %cst_59 : f32 to vector<16x512xf32>
    %c0_60 = arith.constant 0 : index
    %c0_61 = arith.constant 0 : index
    %105 = vector.load %arg12[%c0_60, %c0_61] : memref<18x576xf32, #tpu.memory_space<vmem>>, vector<16x512xf32>
    %106 = vector.extract_strided_slice %102 {offsets = [0, 0, 0], sizes = [1, 1, 512], strides = [1, 1, 1]} : vector<3x3x512xf32> to vector<1x1x512xf32>
    %107 = vector.shape_cast %106 : vector<1x1x512xf32> to vector<512xf32>
    %108 = vector.shape_cast %107 : vector<512xf32> to vector<1x512xf32>
    %109 = vector.broadcast %108 : vector<1x512xf32> to vector<16x512xf32>
    %110 = arith.mulf %105, %109 : vector<16x512xf32>
    %111 = arith.addf %104, %110 : vector<16x512xf32>
    %c0_62 = arith.constant 0 : index
    %c32_63 = arith.constant 32 : index
    %112 = vector.load %arg12[%c0_62, %c32_63] : memref<18x576xf32, #tpu.memory_space<vmem>>, vector<16x512xf32>
    %113 = vector.extract_strided_slice %102 {offsets = [0, 1, 0], sizes = [1, 1, 512], strides = [1, 1, 1]} : vector<3x3x512xf32> to vector<1x1x512xf32>
    %114 = vector.shape_cast %113 : vector<1x1x512xf32> to vector<512xf32>
    %115 = vector.shape_cast %114 : vector<512xf32> to vector<1x512xf32>
    %116 = vector.broadcast %115 : vector<1x512xf32> to vector<16x512xf32>
    %117 = arith.mulf %112, %116 : vector<16x512xf32>
    %118 = arith.addf %111, %117 : vector<16x512xf32>
    %c0_64 = arith.constant 0 : index
    %c64_65 = arith.constant 64 : index
    %119 = vector.load %arg12[%c0_64, %c64_65] : memref<18x576xf32, #tpu.memory_space<vmem>>, vector<16x512xf32>
    %120 = vector.extract_strided_slice %102 {offsets = [0, 2, 0], sizes = [1, 1, 512], strides = [1, 1, 1]} : vector<3x3x512xf32> to vector<1x1x512xf32>
    %121 = vector.shape_cast %120 : vector<1x1x512xf32> to vector<512xf32>
    %122 = vector.shape_cast %121 : vector<512xf32> to vector<1x512xf32>
    %123 = vector.broadcast %122 : vector<1x512xf32> to vector<16x512xf32>
    %124 = arith.mulf %119, %123 : vector<16x512xf32>
    %125 = arith.addf %118, %124 : vector<16x512xf32>
    %c1_66 = arith.constant 1 : index
    %c0_67 = arith.constant 0 : index
    %126 = vector.load %arg12[%c1_66, %c0_67] : memref<18x576xf32, #tpu.memory_space<vmem>>, vector<16x512xf32>
    %127 = vector.extract_strided_slice %102 {offsets = [1, 0, 0], sizes = [1, 1, 512], strides = [1, 1, 1]} : vector<3x3x512xf32> to vector<1x1x512xf32>
    %128 = vector.shape_cast %127 : vector<1x1x512xf32> to vector<512xf32>
    %129 = vector.shape_cast %128 : vector<512xf32> to vector<1x512xf32>
    %130 = vector.broadcast %129 : vector<1x512xf32> to vector<16x512xf32>
    %131 = arith.mulf %126, %130 : vector<16x512xf32>
    %132 = arith.addf %125, %131 : vector<16x512xf32>
    %c1_68 = arith.constant 1 : index
    %c32_69 = arith.constant 32 : index
    %133 = vector.load %arg12[%c1_68, %c32_69] : memref<18x576xf32, #tpu.memory_space<vmem>>, vector<16x512xf32>
    %134 = vector.extract_strided_slice %102 {offsets = [1, 1, 0], sizes = [1, 1, 512], strides = [1, 1, 1]} : vector<3x3x512xf32> to vector<1x1x512xf32>
    %135 = vector.shape_cast %134 : vector<1x1x512xf32> to vector<512xf32>
    %136 = vector.shape_cast %135 : vector<512xf32> to vector<1x512xf32>
    %137 = vector.broadcast %136 : vector<1x512xf32> to vector<16x512xf32>
    %138 = arith.mulf %133, %137 : vector<16x512xf32>
    %139 = arith.addf %132, %138 : vector<16x512xf32>
    %c1_70 = arith.constant 1 : index
    %c64_71 = arith.constant 64 : index
    %140 = vector.load %arg12[%c1_70, %c64_71] : memref<18x576xf32, #tpu.memory_space<vmem>>, vector<16x512xf32>
    %141 = vector.extract_strided_slice %102 {offsets = [1, 2, 0], sizes = [1, 1, 512], strides = [1, 1, 1]} : vector<3x3x512xf32> to vector<1x1x512xf32>
    %142 = vector.shape_cast %141 : vector<1x1x512xf32> to vector<512xf32>
    %143 = vector.shape_cast %142 : vector<512xf32> to vector<1x512xf32>
    %144 = vector.broadcast %143 : vector<1x512xf32> to vector<16x512xf32>
    %145 = arith.mulf %140, %144 : vector<16x512xf32>
    %146 = arith.addf %139, %145 : vector<16x512xf32>
    %c2_72 = arith.constant 2 : index
    %c0_73 = arith.constant 0 : index
    %147 = vector.load %arg12[%c2_72, %c0_73] : memref<18x576xf32, #tpu.memory_space<vmem>>, vector<16x512xf32>
    %148 = vector.extract_strided_slice %102 {offsets = [2, 0, 0], sizes = [1, 1, 512], strides = [1, 1, 1]} : vector<3x3x512xf32> to vector<1x1x512xf32>
    %149 = vector.shape_cast %148 : vector<1x1x512xf32> to vector<512xf32>
    %150 = vector.shape_cast %149 : vector<512xf32> to vector<1x512xf32>
    %151 = vector.broadcast %150 : vector<1x512xf32> to vector<16x512xf32>
    %152 = arith.mulf %147, %151 : vector<16x512xf32>
    %153 = arith.addf %146, %152 : vector<16x512xf32>
    %c2_74 = arith.constant 2 : index
    %c32_75 = arith.constant 32 : index
    %154 = vector.load %arg12[%c2_74, %c32_75] : memref<18x576xf32, #tpu.memory_space<vmem>>, vector<16x512xf32>
    %155 = vector.extract_strided_slice %102 {offsets = [2, 1, 0], sizes = [1, 1, 512], strides = [1, 1, 1]} : vector<3x3x512xf32> to vector<1x1x512xf32>
    %156 = vector.shape_cast %155 : vector<1x1x512xf32> to vector<512xf32>
    %157 = vector.shape_cast %156 : vector<512xf32> to vector<1x512xf32>
    %158 = vector.broadcast %157 : vector<1x512xf32> to vector<16x512xf32>
    %159 = arith.mulf %154, %158 : vector<16x512xf32>
    %160 = arith.addf %153, %159 : vector<16x512xf32>
    %c2_76 = arith.constant 2 : index
    %c64_77 = arith.constant 64 : index
    %161 = vector.load %arg12[%c2_76, %c64_77] : memref<18x576xf32, #tpu.memory_space<vmem>>, vector<16x512xf32>
    %162 = vector.extract_strided_slice %102 {offsets = [2, 2, 0], sizes = [1, 1, 512], strides = [1, 1, 1]} : vector<3x3x512xf32> to vector<1x1x512xf32>
    %163 = vector.shape_cast %162 : vector<1x1x512xf32> to vector<512xf32>
    %164 = vector.shape_cast %163 : vector<512xf32> to vector<1x512xf32>
    %165 = vector.broadcast %164 : vector<1x512xf32> to vector<16x512xf32>
    %166 = arith.mulf %161, %165 : vector<16x512xf32>
    %167 = arith.addf %160, %166 : vector<16x512xf32>
    %c0_78 = arith.constant 0 : index
    %c0_79 = arith.constant 0 : index
    %168 = vector.load %arg7[%c0_78, %c0_79] : memref<1x512xf32, #tpu.memory_space<vmem>>, vector<1x512xf32>
    %169 = vector.broadcast %168 : vector<1x512xf32> to vector<16x512xf32>
    %170 = arith.addf %167, %169 : vector<16x512xf32>
    %cst_80 = arith.constant 0.000000e+00 : f32
    %171 = vector.broadcast %cst_80 : f32 to vector<16x512xf32>
    %172 = arith.cmpf ogt, %170, %171 : vector<16x512xf32>
    %cst_81 = arith.constant 0.00999999977 : f32
    %173 = vector.broadcast %cst_81 : f32 to vector<16x512xf32>
    %174 = arith.mulf %173, %170 : vector<16x512xf32>
    %175 = arith.select %172, %170, %174 : vector<16x512xi1>, vector<16x512xf32>
    %c0_82 = arith.constant 0 : index
    %c0_83 = arith.constant 0 : index
    %176 = vector.load %arg8[%c0_82, %c0_83] : memref<512x512xf32, #tpu.memory_space<vmem>>, vector<512x512xf32>
    %cst_84 = arith.constant dense<0.000000e+00> : vector<16x512xf32>
    %177 = tpu.matmul %175, %176, %cst_84 {dimension_numbers = #tpu.dot_dimension_numbers<[1], [0], [0], [1], [0, 0, 1, 1], [], []>} : vector<16x512xf32>, vector<512x512xf32>, vector<16x512xf32> -> vector<16x512xf32>
    %c0_85 = arith.constant 0 : index
    %c0_86 = arith.constant 0 : index
    %178 = vector.load %arg9[%c0_85, %c0_86] : memref<1x512xf32, #tpu.memory_space<vmem>>, vector<1x512xf32>
    %179 = vector.broadcast %178 : vector<1x512xf32> to vector<16x512xf32>
    %180 = arith.addf %177, %179 : vector<16x512xf32>
    %c0_87 = arith.constant 0 : index
    %c0_88 = arith.constant 0 : index
    %c0_89 = arith.constant 0 : index
    %181 = vector.load %arg1[%c0_87, %c0_88, %c0_89] : memref<1x16x512xf32, #tpu.memory_space<vmem>>, vector<1x16x512xf32>
    %182 = vector.shape_cast %181 : vector<1x16x512xf32> to vector<16x512xf32>
    %183 = arith.addf %180, %182 : vector<16x512xf32>
    %cst_90 = arith.constant 0.000000e+00 : f32
    %184 = vector.broadcast %cst_90 : f32 to vector<16x512xf32>
    %185 = arith.cmpf ogt, %183, %184 : vector<16x512xf32>
    %cst_91 = arith.constant 0.00999999977 : f32
    %186 = vector.broadcast %cst_91 : f32 to vector<16x512xf32>
    %187 = arith.mulf %186, %183 : vector<16x512xf32>
    %188 = arith.select %185, %183, %187 : vector<16x512xi1>, vector<16x512xf32>
    %c0_92 = arith.constant 0 : index
    %c0_93 = arith.constant 0 : index
    %c0_94 = arith.constant 0 : index
    %189 = vector.load %arg10[%c0_92, %c0_93, %c0_94] : memref<1x16x512xf32, #tpu.memory_space<vmem>>, vector<1x16x512xf32>
    %190 = vector.shape_cast %189 : vector<1x16x512xf32> to vector<16x512xf32>
    %191 = vector.shape_cast %188 : vector<16x512xf32> to vector<1x16x512xf32>
    tpu.vector_store %arg10[%c0_92, %c0_93, %c0_94], %191 {strides = array<i32>} : memref<1x16x512xf32, #tpu.memory_space<vmem>>, vector<1x16x512xf32>,
    return
  }
  func.func @transform_0(%arg0: i32) -> (i32, i32, i32) {
    %c0_i32 = arith.constant 0 : i32
    %c0_i32_0 = arith.constant 0 : i32
    %c0_i32_1 = arith.constant 0 : i32
    return %arg0, %c0_i32, %c0_i32_0 : i32, i32, i32
  }
  func.func @transform_1(%arg0: i32) -> (i32, i32, i32) {
    %c0_i32 = arith.constant 0 : i32
    %c0_i32_0 = arith.constant 0 : i32
    %c0_i32_1 = arith.constant 0 : i32
    %c0_i32_2 = arith.constant 0 : i32
    return %c0_i32, %c0_i32_0, %c0_i32_1 : i32, i32, i32
  }
  func.func @transform_2(%arg0: i32) -> (i32, i32) {
    %c0_i32 = arith.constant 0 : i32
    %c0_i32_0 = arith.constant 0 : i32
    %c0_i32_1 = arith.constant 0 : i32
    return %c0_i32, %c0_i32_0 : i32, i32
  }
  func.func @transform_3(%arg0: i32) -> (i32, i32) {
    %c0_i32 = arith.constant 0 : i32
    %c0_i32_0 = arith.constant 0 : i32
    %c0_i32_1 = arith.constant 0 : i32
    return %c0_i32, %c0_i32_0 : i32, i32
  }
  func.func @transform_4(%arg0: i32) -> (i32, i32) {
    %c0_i32 = arith.constant 0 : i32
    %c0_i32_0 = arith.constant 0 : i32
    %c0_i32_1 = arith.constant 0 : i32
    return %c0_i32, %c0_i32_0 : i32, i32
  }
  func.func @transform_5(%arg0: i32) -> (i32, i32, i32) {
    %c0_i32 = arith.constant 0 : i32
    %c0_i32_0 = arith.constant 0 : i32
    %c0_i32_1 = arith.constant 0 : i32
    %c0_i32_2 = arith.constant 0 : i32
    return %c0_i32, %c0_i32_0, %c0_i32_1 : i32, i32, i32
  }
  func.func @transform_6(%arg0: i32) -> (i32, i32) {
    %c0_i32 = arith.constant 0 : i32
    %c0_i32_0 = arith.constant 0 : i32
    %c0_i32_1 = arith.constant 0 : i32
    return %c0_i32, %c0_i32_0 : i32, i32
  }
  func.func @transform_7(%arg0: i32) -> (i32, i32) {
    %c0_i32 = arith.constant 0 : i32
    %c0_i32_0 = arith.constant 0 : i32
    %c0_i32_1 = arith.constant 0 : i32
    return %c0_i32, %c0_i32_0 : i32, i32
  }
  func.func @transform_8(%arg0: i32) -> (i32, i32) {
    %c0_i32 = arith.constant 0 : i32
    %c0_i32_0 = arith.constant 0 : i32
    %c0_i32_1 = arith.constant 0 : i32
    return %c0_i32, %c0_i32_0 : i32, i32
  }
  func.func @transform_9(%arg0: i32) -> (i32, i32, i32) {
    %c0_i32 = arith.constant 0 : i32
    %c0_i32_0 = arith.constant 0 : i32
    %c0_i32_1 = arith.constant 0 : i32
    return %arg0, %c0_i32, %c0_i32_0 : i32, i32, i32
  }
}

</mosaic_0001>

<llo_original>
// kernel: tile.34
$region0: #{tile.34}
  %s0 = inlined_call_operand.vmem [shape: f32[3,3,16,32], index: 0, kind: input, shape index: {}]
  %s1 = inlined_call_operand.vmem [shape: f32[3,3,512], index: 1, kind: output, shape index: {}]
  $region1: #{tile.34} parent=0
    #allocation0 [shape = 'u8[49152]{0}', space=vmem, size = 0xc000, scoped, tag = 'scoped mem for output reshape']
    %v2 = vld [vmem:[%s0] ss:$4 sm:$0xff]
    %vm3 = vcmask 261120
    %4 = vst.msk [vmem:[#allocation0] ss:$8 sm:$0xf] %vm3, %v2
    %s5 = scalar_lea.vmem [#allocation0], 4294967265
    %6 = vst.msk [vmem:[%s5] ss:$8 sm:$0xf0] %vm3, %v2
    %s7 = scalar_lea.vmem %s0, 32
    %v8 = vld [vmem:[%s7] ss:$4 sm:$0xff]
    %vm9 = vcmask 261120
    %s10 = scalar_lea.vmem [#allocation0], 2
    %11 = vst.msk [vmem:[%s10] ss:$8 sm:$0xf] %vm9, %v8
    %12 = vst.msk [vmem:[#allocation0] ss:$8 sm:$0xf0] %vm9, %v8
    %s13 = scalar_lea.vmem %s0, 64
    %v14 = vld [vmem:[%s13] ss:$4 sm:$0xff]
    %vm15 = vcmask 261120
    %s16 = scalar_lea.vmem [#allocation0], 33
    %17 = vst.msk [vmem:[%s16] ss:$8 sm:$0xf] %vm15, %v14
    %s18 = scalar_lea.vmem [#allocation0], 2
    %19 = vst.msk [vmem:[%s18] ss:$8 sm:$0xf0] %vm15, %v14
    %s20 = scalar_lea.vmem %s0, 96
    %v21 = vld [vmem:[%s20] ss:$4 sm:$0xff]
    %vm22 = vcmask 261120
    %s23 = scalar_lea.vmem [#allocation0], 64
    %24 = vst.msk [vmem:[%s23] ss:$8 sm:$0xf] %vm22, %v21
    %s25 = scalar_lea.vmem [#allocation0], 33
    %26 = vst.msk [vmem:[%s25] ss:$8 sm:$0xf0] %vm22, %v21
    %s27 = scalar_lea.vmem %s0, 128
    %v28 = vld [vmem:[%s27] ss:$4 sm:$0xf]
    %vm29 = vcmask 261120
    %s30 = scalar_lea.vmem [#allocation0], 66
    %31 = vst.msk [vmem:[%s30] ss:$8 sm:$0xf] %vm29, %v28
    %s32 = scalar_lea.vmem %s0, 3
    %s33 = smov 3
    %v34 = vld [vmem:[%s32] ss:$16 sm:%s33]
    %s35 = scalar_lea.vmem %s0, 91
    %s36 = smov 12
    %v37 = vld [vmem:[%s35] ss:$-28 sm:%s36]
    %vm38 = vcmask 1043458
    %v39 = vsel %vm38, %v37, %v34
    %s40 = scalar_lea.vmem %s0, 4294967255
    %s41 = smov 48
    %v42 = vld [vmem:[%s40] ss:$16 sm:%s41]
    %vm43 = vcmask 1045508
    %v44 = vsel %vm43, %v42, %v39
    %s45 = scalar_lea.vmem %s0, 4294967211
    %s46 = smov 192
    %v47 = vld [vmem:[%s45] ss:$16 sm:%s46]
    %vm48 = vcmask 1047558
    %v49 = vsel %vm48, %v47, %v44
    %50 = vrot.lane.b32.xlu0 %v49, 96
    %v51 = vpop.permute.xlu0 %50
    %vm52 = vcmask 1048320
    %53 = vst.msk [vmem:[#allocation0] sm:$0x7] %vm52, %v51
    %s54 = scalar_lea.vmem [#allocation0], 5
    %55 = vst.msk [vmem:[%s54] sm:$0x38] %vm52, %v51
    %s56 = scalar_lea.vmem [#allocation0], 10
    %57 = vst.msk [vmem:[%s56] sm:$0xc0] %vm52, %v51
    %s58 = scalar_lea.vmem %s0, 51
    %s59 = smov 3
    %v60 = vld [vmem:[%s58] ss:$16 sm:%s59]
    %s61 = scalar_lea.vmem %s0, 139
    %s62 = smov 12
    %v63 = vld [vmem:[%s61] ss:$-28 sm:%s62]
    %vm64 = vcmask 1043458
    %v65 = vsel %vm64, %v63, %v60
    %s66 = scalar_lea.vmem %s0, 7
    %s67 = smov 48
    %v68 = vld [vmem:[%s66] ss:$16 sm:%s67]
    %vm69 = vcmask 1045508
    %v70 = vsel %vm69, %v68, %v65
    %s71 = scalar_lea.vmem %s0, 4294967259
    %s72 = smov 192
    %v73 = vld [vmem:[%s71] ss:$16 sm:%s72]
    %vm74 = vcmask 1047558
    %v75 = vsel %vm74, %v73, %v70
    %76 = vrot.lane.b32.xlu0 %v75, 96
    %v77 = vpop.permute.xlu0 %76
    %vm78 = vcmask 1048320
    %s79 = scalar_lea.vmem [#allocation0], 32
    %80 = vst.msk [vmem:[%s79] sm:$0x7] %vm78, %v77
    %s81 = scalar_lea.vmem [#allocation0], 37
    %82 = vst.msk [vmem:[%s81] sm:$0x38] %vm78, %v77
    %s83 = scalar_lea.vmem [#allocation0], 42
    %84 = vst.msk [vmem:[%s83] sm:$0xc0] %vm78, %v77
    %s85 = scalar_lea.vmem %s0, 99
    %s86 = smov 3
    %v87 = vld [vmem:[%s85] ss:$16 sm:%s86]
    %s88 = scalar_lea.vmem %s0, 187
    %s89 = smov 12
    %v90 = vld [vmem:[%s88] ss:$-28 sm:%s89]
    %vm91 = vcmask 1043458
    %v92 = vsel %vm91, %v90, %v87
    %s93 = scalar_lea.vmem %s0, 55
    %s94 = smov 48
    %v95 = vld [vmem:[%s93] ss:$16 sm:%s94]
    %vm96 = vcmask 1045508
    %v97 = vsel %vm96, %v95, %v92
    %s98 = scalar_lea.vmem %s0, 11
    %s99 = smov 192
    %v100 = vld [vmem:[%s98] ss:$16 sm:%s99]
    %vm101 = vcmask 1047558
    %v102 = vsel %vm101, %v100, %v97
    %103 = vrot.lane.b32.xlu0 %v102, 96
    %v104 = vpop.permute.xlu0 %103
    %vm105 = vcmask 1048320
    %s106 = scalar_lea.vmem [#allocation0], 64
    %107 = vst.msk [vmem:[%s106] sm:$0x7] %vm105, %v104
    %s108 = scalar_lea.vmem [#allocation0], 69
    %109 = vst.msk [vmem:[%s108] sm:$0x38] %vm105, %v104
    %s110 = scalar_lea.vmem [#allocation0], 74
    %111 = vst.msk [vmem:[%s110] sm:$0xc0] %vm105, %v104
    %s112 = scalar_lea.vmem %s0, 43
    %s113 = smov 3
    %v114 = vld [vmem:[%s112] ss:$-28 sm:%s113]
    %s115 = scalar_lea.vmem %s0, 4294967295
    %s116 = smov 12
    %v117 = vld [vmem:[%s115] ss:$16 sm:%s116]
    %vm118 = vcmask 1043458
    %v119 = vsel %vm118, %v117, %v114
    %s120 = scalar_lea.vmem %s0, 203
    %s121 = smov 48
    %v122 = vld [vmem:[%s120] ss:$-28 sm:%s121]
    %vm123 = vcmask 1045508
    %v124 = vsel %vm123, %v122, %v119
    %s125 = scalar_lea.vmem %s0, 4294967279
    %s126 = smov 192
    %v127 = vld [vmem:[%s125] ss:$16 sm:%s126]
    %vm128 = vcmask 1047558
    %v129 = vsel %vm128, %v127, %v124
    %130 = vrot.lane.b32.xlu0 %v129, 96
    %v131 = vpop.permute.xlu0 %130
    %vm132 = vcmask 1048320
    %s133 = scalar_lea.vmem [#allocation0], 18
    %134 = vst.msk [vmem:[%s133] ss:$6 sm:$0x3] %vm132, %v131
    %s135 = scalar_lea.vmem [#allocation0], 23
    %136 = vst.msk [vmem:[%s135] sm:$0xc] %vm132, %v131
    %s137 = scalar_lea.vmem [#allocation0], 26
    %138 = vst.msk [vmem:[%s137] ss:$6 sm:$0x30] %vm132, %v131
    %s139 = scalar_lea.vmem [#allocation0], 51
    %140 = vst.msk [vmem:[%s139] sm:$0xc0] %vm132, %v131
    %s141 = scalar_lea.vmem %s0, 139
    %s142 = smov 3
    %v143 = vld [vmem:[%s141] ss:$-28 sm:%s142]
    %s144 = scalar_lea.vmem %s0, 95
    %s145 = smov 12
    %v146 = vld [vmem:[%s144] ss:$16 sm:%s145]
    %vm147 = vcmask 1043458
    %v148 = vsel %vm147, %v146, %v143
    %149 = vrot.lane.b32.xlu0 %v148, 96
    %v150 = vpop.permute.xlu0 %149
    %vm151 = vcmask 1048320
    %s152 = scalar_lea.vmem [#allocation0], 82
    %153 = vst.msk [vmem:[%s152] ss:$6 sm:$0x3] %vm151, %v150
    %s154 = scalar_lea.vmem [#allocation0], 87
    %155 = vst.msk [vmem:[%s154] sm:$0xc] %vm151, %v150
    %s156 = scalar_lea.vmem %s0, 2
    %s157 = smov 3
    %v158 = vld [vmem:[%s156] ss:$16 sm:%s157]
    %s159 = scalar_lea.vmem %s0, 90
    %s160 = smov 12
    %v161 = vld [vmem:[%s159] ss:$-28 sm:%s160]
    %vm162 = vcmask 1043458
    %v163 = vsel %vm162, %v161, %v158
    %s164 = scalar_lea.vmem %s0, 4294967254
    %s165 = smov 48
    %v166 = vld [vmem:[%s164] ss:$16 sm:%s165]
    %vm167 = vcmask 1045508
    %v168 = vsel %vm167, %v166, %v163
    %s169 = scalar_lea.vmem %s0, 4294967210
    %s170 = smov 192
    %v171 = vld [vmem:[%s169] ss:$16 sm:%s170]
    %vm172 = vcmask 1047558
    %v173 = vsel %vm172, %v171, %v168
    %174 = vrot.lane.b32.xlu0 %v173, 64
    %v175 = vpop.permute.xlu0 %174
    %vm176 = vcmask 785920
    %177 = vst.msk [vmem:[#allocation0] sm:$0x7] %vm176, %v175
    %s178 = scalar_lea.vmem [#allocation0], 5
    %179 = vst.msk [vmem:[%s178] sm:$0x38] %vm176, %v175
    %s180 = scalar_lea.vmem [#allocation0], 10
    %181 = vst.msk [vmem:[%s180] sm:$0xc0] %vm176, %v175
    %s182 = scalar_lea.vmem %s0, 50
    %s183 = smov 3
    %v184 = vld [vmem:[%s182] ss:$16 sm:%s183]
    %s185 = scalar_lea.vmem %s0, 138
    %s186 = smov 12
    %v187 = vld [vmem:[%s185] ss:$-28 sm:%s186]
    %vm188 = vcmask 1043458
    %v189 = vsel %vm188, %v187, %v184
    %s190 = scalar_lea.vmem %s0, 6
    %s191 = smov 48
    %v192 = vld [vmem:[%s190] ss:$16 sm:%s191]
    %vm193 = vcmask 1045508
    %v194 = vsel %vm193, %v192, %v189
    %s195 = scalar_lea.vmem %s0, 4294967258
    %s196 = smov 192
    %v197 = vld [vmem:[%s195] ss:$16 sm:%s196]
    %vm198 = vcmask 1047558
    %v199 = vsel %vm198, %v197, %v194
    %200 = vrot.lane.b32.xlu0 %v199, 64
    %v201 = vpop.permute.xlu0 %200
    %vm202 = vcmask 785920
    %s203 = scalar_lea.vmem [#allocation0], 32
    %204 = vst.msk [vmem:[%s203] sm:$0x7] %vm202, %v201
    %s205 = scalar_lea.vmem [#allocation0], 37
    %206 = vst.msk [vmem:[%s205] sm:$0x38] %vm202, %v201
    %s207 = scalar_lea.vmem [#allocation0], 42
    %208 = vst.msk [vmem:[%s207] sm:$0xc0] %vm202, %v201
    %s209 = scalar_lea.vmem %s0, 98
    %s210 = smov 3
    %v211 = vld [vmem:[%s209] ss:$16 sm:%s210]
    %s212 = scalar_lea.vmem %s0, 186
    %s213 = smov 12
    %v214 = vld [vmem:[%s212] ss:$-28 sm:%s213]
    %vm215 = vcmask 1043458
    %v216 = vsel %vm215, %v214, %v211
    %s217 = scalar_lea.vmem %s0, 54
    %s218 = smov 48
    %v219 = vld [vmem:[%s217] ss:$16 sm:%s218]
    %vm220 = vcmask 1045508
    %v221 = vsel %vm220, %v219, %v216
    %s222 = scalar_lea.vmem %s0, 10
    %s223 = smov 192
    %v224 = vld [vmem:[%s222] ss:$16 sm:%s223]
    %vm225 = vcmask 1047558
    %v226 = vsel %vm225, %v224, %v221
    %227 = vrot.lane.b32.xlu0 %v226, 64
    %v228 = vpop.permute.xlu0 %227
    %vm229 = vcmask 785920
    %s230 = scalar_lea.vmem [#allocation0], 64
    %231 = vst.msk [vmem:[%s230] sm:$0x7] %vm229, %v228
    %s232 = scalar_lea.vmem [#allocation0], 69
    %233 = vst.msk [vmem:[%s232] sm:$0x38] %vm229, %v228
    %s234 = scalar_lea.vmem [#allocation0], 74
    %235 = vst.msk [vmem:[%s234] sm:$0xc0] %vm229, %v228
    %s236 = scalar_lea.vmem %s0, 42
    %s237 = smov 3
    %v238 = vld [vmem:[%s236] ss:$-28 sm:%s237]
    %s239 = scalar_lea.vmem %s0, 4294967294
    %s240 = smov 12
    %v241 = vld [vmem:[%s239] ss:$16 sm:%s240]
    %vm242 = vcmask 1043458
    %v243 = vsel %vm242, %v241, %v238
    %s244 = scalar_lea.vmem %s0, 202
    %s245 = smov 48
    %v246 = vld [vmem:[%s244] ss:$-28 sm:%s245]
    %vm247 = vcmask 1045508
    %v248 = vsel %vm247, %v246, %v243
    %s249 = scalar_lea.vmem %s0, 4294967278
    %s250 = smov 192
    %v251 = vld [vmem:[%s249] ss:$16 sm:%s250]
    %vm252 = vcmask 1047558
    %v253 = vsel %vm252, %v251, %v248
    %254 = vrot.lane.b32.xlu0 %v253, 64
    %v255 = vpop.permute.xlu0 %254
    %vm256 = vcmask 785920
    %s257 = scalar_lea.vmem [#allocation0], 18
    %258 = vst.msk [vmem:[%s257] ss:$6 sm:$0x3] %vm256, %v255
    %s259 = scalar_lea.vmem [#allocation0], 23
    %260 = vst.msk [vmem:[%s259] sm:$0xc] %vm256, %v255
    %s261 = scalar_lea.vmem [#allocation0], 26
    %262 = vst.msk [vmem:[%s261] ss:$6 sm:$0x30] %vm256, %v255
    %s263 = scalar_lea.vmem [#allocation0], 51
    %264 = vst.msk [vmem:[%s263] sm:$0xc0] %vm256, %v255
    %s265 = scalar_lea.vmem %s0, 138
    %s266 = smov 3
    %v267 = vld [vmem:[%s265] ss:$-28 sm:%s266]
    %s268 = scalar_lea.vmem %s0, 94
    %s269 = smov 12
    %v270 = vld [vmem:[%s268] ss:$16 sm:%s269]
    %vm271 = vcmask 1043458
    %v272 = vsel %vm271, %v270, %v267
    %273 = vrot.lane.b32.xlu0 %v272, 64
    %v274 = vpop.permute.xlu0 %273
    %vm275 = vcmask 785920
    %s276 = scalar_lea.vmem [#allocation0], 82
    %277 = vst.msk [vmem:[%s276] ss:$6 sm:$0x3] %vm275, %v274
    %s278 = scalar_lea.vmem [#allocation0], 87
    %279 = vst.msk [vmem:[%s278] sm:$0xc] %vm275, %v274
    %s280 = scalar_lea.vmem %s0, 1
    %s281 = smov 3
    %v282 = vld [vmem:[%s280] ss:$16 sm:%s281]
    %s283 = scalar_lea.vmem %s0, 89
    %s284 = smov 12
    %v285 = vld [vmem:[%s283] ss:$-28 sm:%s284]
    %vm286 = vcmask 1043458
    %v287 = vsel %vm286, %v285, %v282
    %s288 = scalar_lea.vmem %s0, 4294967253
    %s289 = smov 48
    %v290 = vld [vmem:[%s288] ss:$16 sm:%s289]
    %vm291 = vcmask 1045508
    %v292 = vsel %vm291, %v290, %v287
    %s293 = scalar_lea.vmem %s0, 4294967209
    %s294 = smov 192
    %v295 = vld [vmem:[%s293] ss:$16 sm:%s294]
    %vm296 = vcmask 1047558
    %v297 = vsel %vm296, %v295, %v292
    %298 = vrot.lane.b32.xlu0 %v297, 32
    %v299 = vpop.permute.xlu0 %298
    %vm300 = vcmask 523520
    %301 = vst.msk [vmem:[#allocation0] sm:$0x7] %vm300, %v299
    %s302 = scalar_lea.vmem [#allocation0], 5
    %303 = vst.msk [vmem:[%s302] sm:$0x38] %vm300, %v299
    %s304 = scalar_lea.vmem [#allocation0], 10
    %305 = vst.msk [vmem:[%s304] sm:$0xc0] %vm300, %v299
    %s306 = scalar_lea.vmem %s0, 49
    %s307 = smov 3
    %v308 = vld [vmem:[%s306] ss:$16 sm:%s307]
    %s309 = scalar_lea.vmem %s0, 137
    %s310 = smov 12
    %v311 = vld [vmem:[%s309] ss:$-28 sm:%s310]
    %vm312 = vcmask 1043458
    %v313 = vsel %vm312, %v311, %v308
    %s314 = scalar_lea.vmem %s0, 5
    %s315 = smov 48
    %v316 = vld [vmem:[%s314] ss:$16 sm:%s315]
    %vm317 = vcmask 1045508
    %v318 = vsel %vm317, %v316, %v313
    %s319 = scalar_lea.vmem %s0, 4294967257
    %s320 = smov 192
    %v321 = vld [vmem:[%s319] ss:$16 sm:%s320]
    %vm322 = vcmask 1047558
    %v323 = vsel %vm322, %v321, %v318
    %324 = vrot.lane.b32.xlu0 %v323, 32
    %v325 = vpop.permute.xlu0 %324
    %vm326 = vcmask 523520
    %s327 = scalar_lea.vmem [#allocation0], 32
    %328 = vst.msk [vmem:[%s327] sm:$0x7] %vm326, %v325
    %s329 = scalar_lea.vmem [#allocation0], 37
    %330 = vst.msk [vmem:[%s329] sm:$0x38] %vm326, %v325
    %s331 = scalar_lea.vmem [#allocation0], 42
    %332 = vst.msk [vmem:[%s331] sm:$0xc0] %vm326, %v325
    %s333 = scalar_lea.vmem %s0, 97
    %s334 = smov 3
    %v335 = vld [vmem:[%s333] ss:$16 sm:%s334]
    %s336 = scalar_lea.vmem %s0, 185
    %s337 = smov 12
    %v338 = vld [vmem:[%s336] ss:$-28 sm:%s337]
    %vm339 = vcmask 1043458
    %v340 = vsel %vm339, %v338, %v335
    %s341 = scalar_lea.vmem %s0, 53
    %s342 = smov 48
    %v343 = vld [vmem:[%s341] ss:$16 sm:%s342]
    %vm344 = vcmask 1045508
    %v345 = vsel %vm344, %v343, %v340
    %s346 = scalar_lea.vmem %s0, 9
    %s347 = smov 192
    %v348 = vld [vmem:[%s346] ss:$16 sm:%s347]
    %vm349 = vcmask 1047558
    %v350 = vsel %vm349, %v348, %v345
    %351 = vrot.lane.b32.xlu0 %v350, 32
    %v352 = vpop.permute.xlu0 %351
    %vm353 = vcmask 523520
    %s354 = scalar_lea.vmem [#allocation0], 64
    %355 = vst.msk [vmem:[%s354] sm:$0x7] %vm353, %v352
    %s356 = scalar_lea.vmem [#allocation0], 69
    %357 = vst.msk [vmem:[%s356] sm:$0x38] %vm353, %v352
    %s358 = scalar_lea.vmem [#allocation0], 74
    %359 = vst.msk [vmem:[%s358] sm:$0xc0] %vm353, %v352
    %s360 = scalar_lea.vmem %s0, 41
    %s361 = smov 3
    %v362 = vld [vmem:[%s360] ss:$-28 sm:%s361]
    %s363 = scalar_lea.vmem %s0, 4294967293
    %s364 = smov 12
    %v365 = vld [vmem:[%s363] ss:$16 sm:%s364]
    %vm366 = vcmask 1043458
    %v367 = vsel %vm366, %v365, %v362
    %s368 = scalar_lea.vmem %s0, 201
    %s369 = smov 48
    %v370 = vld [vmem:[%s368] ss:$-28 sm:%s369]
    %vm371 = vcmask 1045508
    %v372 = vsel %vm371, %v370, %v367
    %s373 = scalar_lea.vmem %s0, 4294967277
    %s374 = smov 192
    %v375 = vld [vmem:[%s373] ss:$16 sm:%s374]
    %vm376 = vcmask 1047558
    %v377 = vsel %vm376, %v375, %v372
    %378 = vrot.lane.b32.xlu0 %v377, 32
    %v379 = vpop.permute.xlu0 %378
    %vm380 = vcmask 523520
    %s381 = scalar_lea.vmem [#allocation0], 18
    %382 = vst.msk [vmem:[%s381] ss:$6 sm:$0x3] %vm380, %v379
    %s383 = scalar_lea.vmem [#allocation0], 23
    %384 = vst.msk [vmem:[%s383] sm:$0xc] %vm380, %v379
    %s385 = scalar_lea.vmem [#allocation0], 26
    %386 = vst.msk [vmem:[%s385] ss:$6 sm:$0x30] %vm380, %v379
    %s387 = scalar_lea.vmem [#allocation0], 51
    %388 = vst.msk [vmem:[%s387] sm:$0xc0] %vm380, %v379
    %s389 = scalar_lea.vmem %s0, 137
    %s390 = smov 3
    %v391 = vld [vmem:[%s389] ss:$-28 sm:%s390]
    %s392 = scalar_lea.vmem %s0, 93
    %s393 = smov 12
    %v394 = vld [vmem:[%s392] ss:$16 sm:%s393]
    %vm395 = vcmask 1043458
    %v396 = vsel %vm395, %v394, %v391
    %397 = vrot.lane.b32.xlu0 %v396, 32
    %v398 = vpop.permute.xlu0 %397
    %vm399 = vcmask 523520
    %s400 = scalar_lea.vmem [#allocation0], 82
    %401 = vst.msk [vmem:[%s400] ss:$6 sm:$0x3] %vm399, %v398
    %s402 = scalar_lea.vmem [#allocation0], 87
    %403 = vst.msk [vmem:[%s402] sm:$0xc] %vm399, %v398
    %s405 = ssub.s32 16, 1
    %v406 = vld [vmem:[#allocation0] sm:%s405]
    %s408 = ssub.s32 16, 1
    %409 = vst [vmem:[%s1] sm:%s408] %v406
    %s410 = scalar_lea.vmem [#allocation0], 8
    %v411 = vld [vmem:[%s410] sm:%s405]
    %s413 = ssub.s32 16, 1
    %s414 = scalar_lea.vmem %s1, 4
    %415 = vst [vmem:[%s414] sm:%s413] %v411
    %s416 = scalar_lea.vmem [#allocation0], 16
    %v417 = vld [vmem:[%s416] sm:%s405]
    %s419 = ssub.s32 16, 1
    %s420 = scalar_lea.vmem %s1, 8
    %421 = vst [vmem:[%s420] sm:%s419] %v417
    %s422 = scalar_lea.vmem [#allocation0], 24
    %v423 = vld [vmem:[%s422] sm:%s405]
    %s425 = ssub.s32 16, 1
    %s426 = scalar_lea.vmem %s1, 12
    %427 = vst [vmem:[%s426] sm:%s425] %v423
    %s428 = scalar_lea.vmem [#allocation0], 32
    %v429 = vld [vmem:[%s428] sm:%s405]
    %s431 = ssub.s32 16, 1
    %s432 = scalar_lea.vmem %s1, 16
    %433 = vst [vmem:[%s432] sm:%s431] %v429
    %s434 = scalar_lea.vmem [#allocation0], 40
    %v435 = vld [vmem:[%s434] sm:%s405]
    %s437 = ssub.s32 16, 1
    %s438 = scalar_lea.vmem %s1, 20
    %439 = vst [vmem:[%s438] sm:%s437] %v435
    %s440 = scalar_lea.vmem [#allocation0], 48
    %v441 = vld [vmem:[%s440] sm:%s405]
    %s443 = ssub.s32 16, 1
    %s444 = scalar_lea.vmem %s1, 24
    %445 = vst [vmem:[%s444] sm:%s443] %v441
    %s446 = scalar_lea.vmem [#allocation0], 56
    %v447 = vld [vmem:[%s446] sm:%s405]
    %s449 = ssub.s32 16, 1
    %s450 = scalar_lea.vmem %s1, 28
    %451 = vst [vmem:[%s450] sm:%s449] %v447
    %s452 = scalar_lea.vmem [#allocation0], 64
    %v453 = vld [vmem:[%s452] sm:%s405]
    %s455 = ssub.s32 16, 1
    %s456 = scalar_lea.vmem %s1, 32
    %457 = vst [vmem:[%s456] sm:%s455] %v453
    %s458 = scalar_lea.vmem [#allocation0], 72
    %v459 = vld [vmem:[%s458] sm:%s405]
    %s461 = ssub.s32 16, 1
    %s462 = scalar_lea.vmem %s1, 36
    %463 = vst [vmem:[%s462] sm:%s461] %v459
    %s464 = scalar_lea.vmem [#allocation0], 80
    %v465 = vld [vmem:[%s464] sm:%s405]
    %s467 = ssub.s32 16, 1
    %s468 = scalar_lea.vmem %s1, 40
    %469 = vst [vmem:[%s468] sm:%s467] %v465
    %s470 = scalar_lea.vmem [#allocation0], 88
    %v471 = vld [vmem:[%s470] sm:%s405]
    %s473 = ssub.s32 16, 1
    %s474 = scalar_lea.vmem %s1, 44
    %475 = vst [vmem:[%s474] sm:%s473] %v471

// kernel: basic_block_sep.1
$region0: #{basic_block_sep.1}
  #allocation0 [shape = 'u32[]', space=smem, size = 0x4, offset = 0x4, fixed_abs, tag = 'smem constant byte address 0x4 - core index']
  #allocation1 [shape = 'u32[72,128]{1,0:T(1,128)}', space=vmem, size = 0x9000, scoped, tag = 'internal scratch']
  #allocation2 [shape = 'f32[18,576]{1,0:T(8,128)}', space=vmem, size = 0xf000, scoped, tag = 'scratch operand']
  #allocation3 [shape = 'f32[18,576]{1,0:T(8,128)}', space=vmem, size = 0xf000, scoped, tag = 'scratch operand']
  %s0 = inlined_call_operand.vmem [shape: f32[2,16,512], index: 0, kind: input, shape index: {}]
  %s1 = inlined_call_operand.vmem [shape: f32[3,3,512], index: 1, kind: input, shape index: {}]
  %s2 = inlined_call_operand.vmem [shape: f32[1,512], index: 2, kind: input, shape index: {}]
  %s3 = inlined_call_operand.vmem [shape: f32[512,512], index: 3, kind: input, shape index: {}]
  %s4 = inlined_call_operand.vmem [shape: f32[1,512], index: 4, kind: input, shape index: {}]
  %s5 = inlined_call_operand.vmem [shape: f32[3,3,512], index: 5, kind: input, shape index: {}]
  %s6 = inlined_call_operand.vmem [shape: f32[1,512], index: 6, kind: input, shape index: {}]
  %s7 = inlined_call_operand.vmem [shape: f32[512,512], index: 7, kind: input, shape index: {}]
  %s8 = inlined_call_operand.vmem [shape: f32[1,512], index: 8, kind: input, shape index: {}]
  %s9 = inlined_call_operand.vmem [shape: f32[2,16,512], index: 9, kind: output, shape index: {}]
  %s10 = sld [smem:[#allocation0]]
  $region69: #{basic_block_sep.1} parent=0
    _
  %s12 = ssub.s32 1, %s10
  %s13 = scalar_select 0, %s12, %s10
  loop: start=0, step=1, limit=4
  $region2: #{basic_block_sep.1} parent=0 // loop_pre_header
    _
  $region3: #{basic_block_sep.1} parent=0 // loop_header
    %s15 = sphi 0, %s19
    %p16 = scmp.ge.s32.totalorder %s15, 4
    %s25 = sphi 0, %s27
    %s28 = sphi 0, %s25
    %s29 = sphi 0, %s28
    %s45 = sphi 0, %s29
    %s49 = sphi 0, %s49
    %s51 = sphi 0, %s49
    %s52 = sphi 0, %s51
    %s66 = sphi 0, %s52
    %s70 = sphi 0, %s70
    %s72 = sphi 0, %s70
    %s73 = sphi 0, %s72
    %s87 = sphi 0, %s73
    %s91 = sphi 0, %s91
    %s93 = sphi 0, %s91
    %s94 = sphi 0, %s93
    %s108 = sphi 0, %s94
    %s112 = sphi 0, %s112
    %s114 = sphi 0, %s112
    %s115 = sphi 0, %s114
    %s129 = sphi 0, %s115
    %s133 = sphi 0, %s133
    %s135 = sphi 0, %s133
    %s136 = sphi 0, %s135
    %s150 = sphi 0, %s136
    %s154 = sphi 0, %s154
    %s156 = sphi 0, %s154
    %s157 = sphi 0, %s156
    %s171 = sphi 0, %s157
    %s175 = sphi 0, %s175
    %s177 = sphi 0, %s175
    %s178 = sphi 0, %s177
    %s192 = sphi 0, %s178
    %s196 = sphi 0, %s196
    %s198 = sphi 0, %s196
    %s199 = sphi 0, %s198
    %s213 = sphi 0, %s199
    %s219 = sphi 0, %s221
    %s222 = sphi 0, %s219
    %s223 = sphi 0, %s222
    %s239 = sphi 0, %s223
  $region4: #{basic_block_sep.1} parent=0 // loop_header_branch
    %18 = sbr.rel (%p16) target = $region8
  $region5: #{basic_block_sep.1} parent=0 // loop_body
    %s20 = ssub.s32 %s15, 1
    %s21 = ssub.s32 %s15, 2
    %s22 = sadd.s32 %s15, 1
    %s23 = ssub.s32 %s15, %s22
    %p24 = scmp.eq.s32.totalorder %s23, 0
    %s26 = sadd.s32 %s25, 1
    %s27 = scalar_select %p24, %s25, %s26
    %p30 = pneg %p24
    %p31 = scmp.eq.s32.totalorder %s15, 1
    %p32 = por %p30, %p31
    %p33 = scmp.ne.s32.totalorder %s25, %s28
    %p34 = scmp.eq.s32.totalorder %s15, 0
    %p35 = por %p33, %p34
    %p36 = scmp.ne.s32.totalorder %s25, %s28
    %p37 = scmp.eq.s32.totalorder %s20, 1
    %p38 = por %p36, %p37
    %p39 = scmp.ne.s32.totalorder %s28, %s29
    %p40 = scmp.eq.s32.totalorder %s20, 0
    %p41 = por %p39, %p40
    %p42 = scmp.ne.s32.totalorder %s28, %s29
    %p43 = scmp.eq.s32.totalorder %s21, 1
    %p44 = por %p42, %p43
    %p46 = scmp.ne.s32.totalorder %s29, %s45
    %p47 = scmp.eq.s32.totalorder %s21, 0
    %p48 = por %p46, %p47
    %s50 = sadd.s32 %s49, 1
    %p53 = scmp.eq.s32.totalorder %s15, 1
    %p54 = scmp.ne.s32.totalorder %s49, %s51
    %p55 = scmp.eq.s32.totalorder %s15, 0
    %p56 = por %p54, %p55
    %p57 = scmp.ne.s32.totalorder %s49, %s51
    %p58 = scmp.eq.s32.totalorder %s20, 1
    %p59 = por %p57, %p58
    %p60 = scmp.ne.s32.totalorder %s51, %s52
    %p61 = scmp.eq.s32.totalorder %s20, 0
    %p62 = por %p60, %p61
    %p63 = scmp.ne.s32.totalorder %s51, %s52
    %p64 = scmp.eq.s32.totalorder %s21, 1
    %p65 = por %p63, %p64
    %p67 = scmp.ne.s32.totalorder %s52, %s66
    %p68 = scmp.eq.s32.totalorder %s21, 0
    %p69 = por %p67, %p68
    %s71 = sadd.s32 %s70, 1
    %p74 = scmp.eq.s32.totalorder %s15, 1
    %p75 = scmp.ne.s32.totalorder %s70, %s72
    %p76 = scmp.eq.s32.totalorder %s15, 0
    %p77 = por %p75, %p76
    %p78 = scmp.ne.s32.totalorder %s70, %s72
    %p79 = scmp.eq.s32.totalorder %s20, 1
    %p80 = por %p78, %p79
    %p81 = scmp.ne.s32.totalorder %s72, %s73
    %p82 = scmp.eq.s32.totalorder %s20, 0
    %p83 = por %p81, %p82
    %p84 = scmp.ne.s32.totalorder %s72, %s73
    %p85 = scmp.eq.s32.totalorder %s21, 1
    %p86 = por %p84, %p85
    %p88 = scmp.ne.s32.totalorder %s73, %s87
    %p89 = scmp.eq.s32.totalorder %s21, 0
    %p90 = por %p88, %p89
    %s92 = sadd.s32 %s91, 1
    %p95 = scmp.eq.s32.totalorder %s15, 1
    %p96 = scmp.ne.s32.totalorder %s91, %s93
    %p97 = scmp.eq.s32.totalorder %s15, 0
    %p98 = por %p96, %p97
    %p99 = scmp.ne.s32.totalorder %s91, %s93
    %p100 = scmp.eq.s32.totalorder %s20, 1
    %p101 = por %p99, %p100
    %p102 = scmp.ne.s32.totalorder %s93, %s94
    %p103 = scmp.eq.s32.totalorder %s20, 0
    %p104 = por %p102, %p103
    %p105 = scmp.ne.s32.totalorder %s93, %s94
    %p106 = scmp.eq.s32.totalorder %s21, 1
    %p107 = por %p105, %p106
    %p109 = scmp.ne.s32.totalorder %s94, %s108
    %p110 = scmp.eq.s32.totalorder %s21, 0
    %p111 = por %p109, %p110
    %s113 = sadd.s32 %s112, 1
    %p116 = scmp.eq.s32.totalorder %s15, 1
    %p117 = scmp.ne.s32.totalorder %s112, %s114
    %p118 = scmp.eq.s32.totalorder %s15, 0
    %p119 = por %p117, %p118
    %p120 = scmp.ne.s32.totalorder %s112, %s114
    %p121 = scmp.eq.s32.totalorder %s20, 1
    %p122 = por %p120, %p121
    %p123 = scmp.ne.s32.totalorder %s114, %s115
    %p124 = scmp.eq.s32.totalorder %s20, 0
    %p125 = por %p123, %p124
    %p126 = scmp.ne.s32.totalorder %s114, %s115
    %p127 = scmp.eq.s32.totalorder %s21, 1
    %p128 = por %p126, %p127
    %p130 = scmp.ne.s32.totalorder %s115, %s129
    %p131 = scmp.eq.s32.totalorder %s21, 0
    %p132 = por %p130, %p131
    %s134 = sadd.s32 %s133, 1
    %p137 = scmp.eq.s32.totalorder %s15, 1
    %p138 = scmp.ne.s32.totalorder %s133, %s135
    %p139 = scmp.eq.s32.totalorder %s15, 0
    %p140 = por %p138, %p139
    %p141 = scmp.ne.s32.totalorder %s133, %s135
    %p142 = scmp.eq.s32.totalorder %s20, 1
    %p143 = por %p141, %p142
    %p144 = scmp.ne.s32.totalorder %s135, %s136
    %p145 = scmp.eq.s32.totalorder %s20, 0
    %p146 = por %p144, %p145
    %p147 = scmp.ne.s32.totalorder %s135, %s136
    %p148 = scmp.eq.s32.totalorder %s21, 1
    %p149 = por %p147, %p148
    %p151 = scmp.ne.s32.totalorder %s136, %s150
    %p152 = scmp.eq.s32.totalorder %s21, 0
    %p153 = por %p151, %p152
    %s155 = sadd.s32 %s154, 1
    %p158 = scmp.eq.s32.totalorder %s15, 1
    %p159 = scmp.ne.s32.totalorder %s154, %s156
    %p160 = scmp.eq.s32.totalorder %s15, 0
    %p161 = por %p159, %p160
    %p162 = scmp.ne.s32.totalorder %s154, %s156
    %p163 = scmp.eq.s32.totalorder %s20, 1
    %p164 = por %p162, %p163
    %p165 = scmp.ne.s32.totalorder %s156, %s157
    %p166 = scmp.eq.s32.totalorder %s20, 0
    %p167 = por %p165, %p166
    %p168 = scmp.ne.s32.totalorder %s156, %s157
    %p169 = scmp.eq.s32.totalorder %s21, 1
    %p170 = por %p168, %p169
    %p172 = scmp.ne.s32.totalorder %s157, %s171
    %p173 = scmp.eq.s32.totalorder %s21, 0
    %p174 = por %p172, %p173
    %s176 = sadd.s32 %s175, 1
    %p179 = scmp.eq.s32.totalorder %s15, 1
    %p180 = scmp.ne.s32.totalorder %s175, %s177
    %p181 = scmp.eq.s32.totalorder %s15, 0
    %p182 = por %p180, %p181
    %p183 = scmp.ne.s32.totalorder %s175, %s177
    %p184 = scmp.eq.s32.totalorder %s20, 1
    %p185 = por %p183, %p184
    %p186 = scmp.ne.s32.totalorder %s177, %s178
    %p187 = scmp.eq.s32.totalorder %s20, 0
    %p188 = por %p186, %p187
    %p189 = scmp.ne.s32.totalorder %s177, %s178
    %p190 = scmp.eq.s32.totalorder %s21, 1
    %p191 = por %p189, %p190
    %p193 = scmp.ne.s32.totalorder %s178, %s192
    %p194 = scmp.eq.s32.totalorder %s21, 0
    %p195 = por %p193, %p194
    %s197 = sadd.s32 %s196, 1
    %p200 = scmp.eq.s32.totalorder %s15, 1
    %p201 = scmp.ne.s32.totalorder %s196, %s198
    %p202 = scmp.eq.s32.totalorder %s15, 0
    %p203 = por %p201, %p202
    %p204 = scmp.ne.s32.totalorder %s196, %s198
    %p205 = scmp.eq.s32.totalorder %s20, 1
    %p206 = por %p204, %p205
    %p207 = scmp.ne.s32.totalorder %s198, %s199
    %p208 = scmp.eq.s32.totalorder %s20, 0
    %p209 = por %p207, %p208
    %p210 = scmp.ne.s32.totalorder %s198, %s199
    %p211 = scmp.eq.s32.totalorder %s21, 1
    %p212 = por %p210, %p211
    %p214 = scmp.ne.s32.totalorder %s199, %s213
    %p215 = scmp.eq.s32.totalorder %s21, 0
    %p216 = por %p214, %p215
    %s217 = ssub.s32 %s15, %s22
    %p218 = scmp.eq.s32.totalorder %s217, 0
    %s220 = sadd.s32 %s219, 1
    %s221 = scalar_select %p218, %s219, %s220
    %p224 = pneg %p218
    %p225 = scmp.eq.s32.totalorder %s15, 1
    %p226 = por %p224, %p225
    %p227 = scmp.ne.s32.totalorder %s219, %s222
    %p228 = scmp.eq.s32.totalorder %s15, 0
    %p229 = por %p227, %p228
    %p230 = scmp.ne.s32.totalorder %s219, %s222
    %p231 = scmp.eq.s32.totalorder %s20, 1
    %p232 = por %p230, %p231
    %p233 = scmp.ne.s32.totalorder %s222, %s223
    %p234 = scmp.eq.s32.totalorder %s20, 0
    %p235 = por %p233, %p234
    %p236 = scmp.ne.s32.totalorder %s222, %s223
    %p237 = scmp.eq.s32.totalorder %s21, 1
    %p238 = por %p236, %p237
    %p240 = scmp.ne.s32.totalorder %s223, %s239
    %p241 = scmp.eq.s32.totalorder %s21, 0
    %p242 = por %p240, %p241
    %p243 = scmp.le.s32.totalorder 1, %s15
    %p244 = scmp.lt.s32.totalorder %s15, 3
    %p245 = pnand %p243, %p244
    %p246 = pneg %p245
    // Predicated region
    $region9: #{basic_block_sep.1} parent=5 // pred_check
      _
    $region10: #{basic_block_sep.1} parent=5 // pred_check_branch
      %248 = sbr.rel (%p245) target = $region12
    $region11: #{basic_block_sep.1} parent=5 // pred_region
      %s249 = ssub.s32 %s15, 1
      // Predicated region
      $region13: #{basic_block_sep.1} parent=11 // pred_check
        %p250 = pneg %p62
      $region14: #{basic_block_sep.1} parent=11 // pred_check_branch
        %252 = sbr.rel (%p250) target = $region16
      $region15: #{basic_block_sep.1} parent=11 // pred_region
        _
      $region16: #{basic_block_sep.1} parent=11 // pred_fallthru
        _
      // Predicated region
      $region17: #{basic_block_sep.1} parent=11 // pred_check
        %p253 = pneg %p83
      $region18: #{basic_block_sep.1} parent=11 // pred_check_branch
        %255 = sbr.rel (%p253) target = $region20
      $region19: #{basic_block_sep.1} parent=11 // pred_region
        _
      $region20: #{basic_block_sep.1} parent=11 // pred_fallthru
        _
      // Predicated region
      $region21: #{basic_block_sep.1} parent=11 // pred_check
        %p256 = pneg %p104
      $region22: #{basic_block_sep.1} parent=11 // pred_check_branch
        %258 = sbr.rel (%p256) target = $region24
      $region23: #{basic_block_sep.1} parent=11 // pred_region
        _
      $region24: #{basic_block_sep.1} parent=11 // pred_fallthru
        _
      // Predicated region
      $region25: #{basic_block_sep.1} parent=11 // pred_check
        %p259 = pneg %p125
      $region26: #{basic_block_sep.1} parent=11 // pred_check_branch
        %261 = sbr.rel (%p259) target = $region28
      $region27: #{basic_block_sep.1} parent=11 // pred_region
        _
      $region28: #{basic_block_sep.1} parent=11 // pred_fallthru
        _
      // Predicated region
      $region29: #{basic_block_sep.1} parent=11 // pred_check
        %p262 = pneg %p146
      $region30: #{basic_block_sep.1} parent=11 // pred_check_branch
        %264 = sbr.rel (%p262) target = $region32
      $region31: #{basic_block_sep.1} parent=11 // pred_region
        _
      $region32: #{basic_block_sep.1} parent=11 // pred_fallthru
        _
      // Predicated region
      $region33: #{basic_block_sep.1} parent=11 // pred_check
        %p265 = pneg %p167
      $region34: #{basic_block_sep.1} parent=11 // pred_check_branch
        %267 = sbr.rel (%p265) target = $region36
      $region35: #{basic_block_sep.1} parent=11 // pred_region
        _
      $region36: #{basic_block_sep.1} parent=11 // pred_fallthru
        _
      // Predicated region
      $region37: #{basic_block_sep.1} parent=11 // pred_check
        %p268 = pneg %p188
      $region38: #{basic_block_sep.1} parent=11 // pred_check_branch
        %270 = sbr.rel (%p268) target = $region40
      $region39: #{basic_block_sep.1} parent=11 // pred_region
        _
      $region40: #{basic_block_sep.1} parent=11 // pred_fallthru
        _
      // Predicated region
      $region41: #{basic_block_sep.1} parent=11 // pred_check
        %p271 = pneg %p209
      $region42: #{basic_block_sep.1} parent=11 // pred_check_branch
        %273 = sbr.rel (%p271) target = $region44
      $region43: #{basic_block_sep.1} parent=11 // pred_region
        _
      $region44: #{basic_block_sep.1} parent=11 // pred_fallthru
        _
    $region12: #{basic_block_sep.1} parent=5 // pred_fallthru
      _
    %p274 = scmp.lt.s32.totalorder %s15, 2
    // Predicated region
    $region45: #{basic_block_sep.1} parent=5 // pred_check
      %p275 = pneg %p274
    $region46: #{basic_block_sep.1} parent=5 // pred_check_branch
      %277 = sbr.rel (%p275) target = $region48
    $region47: #{basic_block_sep.1} parent=5 // pred_region
      // Predicated region
      $region49: #{basic_block_sep.1} parent=47 // pred_check
        %p278 = pneg %p35
      $region50: #{basic_block_sep.1} parent=47 // pred_check_branch
        %280 = sbr.rel (%p278) target = $region52
      $region51: #{basic_block_sep.1} parent=47 // pred_region
        %p281 = scmp.lt.s32.totalorder %s15, 1
        %s282 = scalar_select %p281, %s15, 1
        %s283 = smul.addr %s282, 8
        %s284 = smul.addr %s283, 8
        %s285 = scalar_lea.vmem %s0, %s284
      $region52: #{basic_block_sep.1} parent=47 // pred_fallthru
        _
    $region48: #{basic_block_sep.1} parent=5 // pred_fallthru
      _
    %p286 = scmp.le.s32.totalorder 1, %s15
    %p287 = scmp.lt.s32.totalorder %s15, 3
    %p288 = pnand %p286, %p287
    %p289 = pneg %p288
    // Predicated region
    $region53: #{basic_block_sep.1} parent=5 // pred_check
      _
    $region54: #{basic_block_sep.1} parent=5 // pred_check_branch
      %291 = sbr.rel (%p288) target = $region56
    $region55: #{basic_block_sep.1} parent=5 // pred_region
      %s292 = ssub.s32 %s15, 1
      %p293 = scmp.lt.s32.totalorder %s20, 1
      %s294 = scalar_select %p293, %s20, 1
      %s295 = smul.addr %s294, 8
      %s296 = smul.addr %s295, 8
      %s297 = scalar_lea.vmem %s0, %s296
      %p298 = pneg %p41
      %p299 = pneg %p38
      %p300 = pneg %p62
      %p301 = pneg %p59
      %p302 = pneg %p83
      %p303 = pneg %p80
      %p304 = pneg %p104
      %p305 = pneg %p101
      %p306 = pneg %p125
      %p307 = pneg %p122
      %p308 = pneg %p146
      %p309 = pneg %p143
      %p310 = pneg %p167
      %p311 = pneg %p164
      %p312 = pneg %p188
      %p313 = pneg %p185
      %p314 = pneg %p209
      %p315 = pneg %p206
      %p316 = pneg %p235
      %p317 = pneg %p232
      %p318 = scmp.lt.s32.totalorder %s20, 1
      %s319 = scalar_select %p318, %s20, 1
      %s320 = smul.addr %s319, 8
      %s321 = smul.addr %s320, 8
      %s322 = scalar_lea.vmem %s9, %s321
      %p323 = scmp.lt.s32.totalorder %s20, 1
      %s324 = scalar_select %p323, %s20, 1
      %s325 = smul.addr %s324, 8
      %s326 = smul.addr %s325, 8
      %s327 = scalar_lea.vmem %s0, %s326
      %p328 = scmp.lt.s32.totalorder %s20, 1
      %s329 = scalar_select %p328, %s20, 1
      %s330 = smul.addr %s329, 8
      %s331 = smul.addr %s330, 8
      %s332 = scalar_lea.vmem %s9, %s331
      %v333 = vlaneseq
      %vm334 = vcmp.ge.s32.totalorder %v333, 0
      %vm335 = vcmp.lt.s32.totalorder %v333, 576
      %vm336 = vmand %vm334, %vm335
      %337 = vst.msk [vmem:[#allocation2] ss:$8 sm:$0xf] %vm336, 0.0
      %338 = vst.msk [vmem:[#allocation2] ss:$8 sm:$0x10] %vm336, 0.0
      %s339 = scalar_lea.vmem [#allocation2], 81
      %340 = vst.msk [vmem:[%s339] ss:$8 sm:$0xf] %vm336, 0.0
      %341 = vst.msk [vmem:[%s339] ss:$8 sm:$0x10] %vm336, 0.0
      %vm342 = vcmask 261121
      %343 = vst.msk [vmem:[#allocation2] sm:$0xfe] %vm342, 0.0
      %vm344 = vcmask 261120
      %345 = vst.msk [vmem:[#allocation2 + $0x28] sm:$0xff] %vm344, 0.0
      %vm346 = vcmask 253952
      %347 = vst.msk [vmem:[#allocation2 + $0x50] sm:$0x1] %vm346, 0.0
      %vm348 = vcmask 523521
      %349 = vst.msk [vmem:[#allocation2 + $0x20] sm:$0xfe] %vm348, 0.0
      %vm350 = vcmask 523520
      %351 = vst.msk [vmem:[#allocation2 + $0x48] sm:$0xff] %vm350, 0.0
      %vm352 = vcmask 516352
      %353 = vst.msk [vmem:[#allocation2 + $0x70] sm:$0x1] %vm352, 0.0
      %354 = vst.msk [vmem:[#allocation3] ss:$8 sm:$0xf] %vm336, 0.0
      %355 = vst.msk [vmem:[#allocation3] ss:$8 sm:$0x10] %vm336, 0.0
      %s356 = scalar_lea.vmem [#allocation3], 81
      %357 = vst.msk [vmem:[%s356] ss:$8 sm:$0xf] %vm336, 0.0
      %358 = vst.msk [vmem:[%s356] ss:$8 sm:$0x10] %vm336, 0.0
      %359 = vst.msk [vmem:[#allocation3] sm:$0xfe] %vm342, 0.0
      %360 = vst.msk [vmem:[#allocation3 + $0x28] sm:$0xff] %vm344, 0.0
      %361 = vst.msk [vmem:[#allocation3 + $0x50] sm:$0x1] %vm346, 0.0
      %362 = vst.msk [vmem:[#allocation3 + $0x20] sm:$0xfe] %vm348, 0.0
      %363 = vst.msk [vmem:[#allocation3 + $0x48] sm:$0xff] %vm350, 0.0
      %364 = vst.msk [vmem:[#allocation3 + $0x70] sm:$0x1] %vm352, 0.0
      %v365 = vld [vmem:[%s327] sm:$0xff]
      %v366 = vld [vmem:[%s327 + $0x8] sm:$0xff]
      %v367 = vld [vmem:[%s327 + $0x10] sm:$0xff]
      %v368 = vld [vmem:[%s327 + $0x18] sm:$0xff]
      %v369 = vld [vmem:[%s327 + $0x20] sm:$0xff]
      %v370 = vld [vmem:[%s327 + $0x28] sm:$0xff]
      %v371 = vld [vmem:[%s327 + $0x30] sm:$0xff]
      %v372 = vld [vmem:[%s327 + $0x38] sm:$0xff]
      %v373 = vld [vmem:[%s1] sm:$0x77]
      %v374 = vld [vmem:[%s1 + $0x8] sm:$0x77]
      %v375 = vld [vmem:[%s1 + $0x10] sm:$0x77]
      %v376 = vld [vmem:[%s1 + $0x18] sm:$0x77]
      %v377 = vld [vmem:[%s1 + $0x20] sm:$0x77]
      %v378 = vld [vmem:[%s1 + $0x28] sm:$0x77]
      %vm387 = vcmask 1040384
      %v388 = vrot.slane %v365, 7
      %v389 = vrot.slane %v366, 7
      %v390 = vrot.slane %v367, 7
      %v391 = vrot.slane %v368, 7
      %v392 = vrot.slane %v369, 7
      %v393 = vsel %vm387, %v388, %v392
      %v394 = vrot.slane %v370, 7
      %v395 = vsel %vm387, %v389, %v394
      %v396 = vrot.slane %v371, 7
      %v397 = vsel %vm387, %v390, %v396
      %v398 = vrot.slane %v372, 7
      %v399 = vsel %vm387, %v391, %v398
      %400 = vrot.lane.b32.xlu0 %v388, 32
      %v401 = vpop.permute.xlu0 %400
      %402 = vrot.lane.b32.xlu0 %v389, 32
      %v403 = vpop.permute.xlu0 %402
      %404 = vrot.lane.b32.xlu0 %v390, 32
      %v405 = vpop.permute.xlu0 %404
      %406 = vrot.lane.b32.xlu0 %v391, 32
      %v407 = vpop.permute.xlu0 %406
      %408 = vrot.lane.b32.xlu0 %v393, 32
      %v409 = vpop.permute.xlu0 %408
      %410 = vrot.lane.b32.xlu0 %v395, 32
      %v411 = vpop.permute.xlu0 %410
      %412 = vrot.lane.b32.xlu0 %v397, 32
      %v413 = vpop.permute.xlu0 %412
      %414 = vrot.lane.b32.xlu0 %v399, 32
      %v415 = vpop.permute.xlu0 %414
      %416 = vrot.lane.b32.xlu0 %v392, 32
      %v417 = vpop.permute.xlu0 %416
      %418 = vrot.lane.b32.xlu0 %v394, 32
      %v419 = vpop.permute.xlu0 %418
      %420 = vrot.lane.b32.xlu0 %v396, 32
      %v421 = vpop.permute.xlu0 %420
      %422 = vrot.lane.b32.xlu0 %v398, 32
      %v423 = vpop.permute.xlu0 %422
      %v424 = vsel %vm344, %v401, %v403
      %v425 = vsel %vm344, %v403, %v405
      %v426 = vsel %vm344, %v405, %v407
      %v427 = vsel %vm344, %v409, %v411
      %v428 = vsel %vm344, %v411, %v413
      %v429 = vsel %vm344, %v413, %v415
      %v430 = vsel %vm344, %v417, %v419
      %v431 = vsel %vm344, %v419, %v421
      %v432 = vsel %vm344, %v421, %v423
      %vm448 = vcmask 1047809
      %449 = vst.msk [vmem:[#allocation2] sm:$0xfe] %vm448, %v401
      %450 = vst [vmem:[#allocation2 + $0x8] sm:$0xfe] %v424
      %451 = vst [vmem:[#allocation2 + $0x10] sm:$0xfe] %v425
      %452 = vst [vmem:[#allocation2 + $0x18] sm:$0xfe] %v426
      %453 = vst.msk [vmem:[#allocation2 + $0x20] sm:$0xfe] %vm342, %v407
      %vm454 = vcmask 1047808
      %455 = vst.msk [vmem:[#allocation2 + $0x28] sm:$0xff] %vm454, %v409
      %456 = vst [vmem:[#allocation2 + $0x30] sm:$0xff] %v427
      %457 = vst [vmem:[#allocation2 + $0x38] sm:$0xff] %v428
      %458 = vst [vmem:[#allocation2 + $0x40] sm:$0xff] %v429
      %459 = vst.msk [vmem:[#allocation2 + $0x48] sm:$0xff] %vm344, %v415
      %vm460 = vcmask 1040640
      %461 = vst.msk [vmem:[#allocation2 + $0x50] sm:$0x1] %vm460, %v417
      %462 = vst [vmem:[#allocation2 + $0x58] sm:$0x1] %v430
      %463 = vst [vmem:[#allocation2 + $0x60] sm:$0x1] %v431
      %464 = vst [vmem:[#allocation2 + $0x68] sm:$0x1] %v432
      %465 = vst.msk [vmem:[#allocation2 + $0x70] sm:$0x1] %vm346, %v423
      %v466 = vld [vmem:[#allocation2] sm:$0xff]
      %v467 = vld [vmem:[#allocation2 + $0x8] sm:$0xff]
      %v468 = vld [vmem:[#allocation2 + $0x10] sm:$0xff]
      %v469 = vld [vmem:[#allocation2 + $0x18] sm:$0xff]
      %v470 = vld [vmem:[#allocation2 + $0x28] sm:$0xff]
      %v471 = vld [vmem:[#allocation2 + $0x30] sm:$0xff]
      %v472 = vld [vmem:[#allocation2 + $0x38] sm:$0xff]
      %v473 = vld [vmem:[#allocation2 + $0x40] sm:$0xff]
      %v476 = vperm.slane %v373, 0
      %v477 = vperm.slane %v373, 4
      %v478 = vperm.slane %v374, 0
      %v479 = vperm.slane %v374, 4
      %v484 = vperm.slane %v476, 0
      %v485 = vperm.slane %v477, 0
      %v486 = vperm.slane %v478, 0
      %v487 = vperm.slane %v479, 0
      %v488 = vmul.f32 %v466, %v484
      %v489 = vmul.f32 %v467, %v485
      %v490 = vmul.f32 %v468, %v486
      %v491 = vmul.f32 %v469, %v487
      %v492 = vmul.f32 %v470, %v484
      %v493 = vmul.f32 %v471, %v485
      %v494 = vmul.f32 %v472, %v486
      %v495 = vmul.f32 %v473, %v487
      %v496 = vadd.f32 %v488, 0.0
      %v497 = vadd.f32 %v489, 0.0
      %v498 = vadd.f32 %v490, 0.0
      %v499 = vadd.f32 %v491, 0.0
      %v500 = vadd.f32 %v492, 0.0
      %v501 = vadd.f32 %v493, 0.0
      %v502 = vadd.f32 %v494, 0.0
      %v503 = vadd.f32 %v495, 0.0
      %v504 = vld [vmem:[#allocation2 + $0x20] sm:$0xff]
      %v505 = vld [vmem:[#allocation2 + $0x48] sm:$0xff]
      %v506 = vperm.slane %v373, 1
      %v507 = vperm.slane %v373, 5
      %v508 = vperm.slane %v374, 1
      %v509 = vperm.slane %v374, 5
      %v514 = vperm.slane %v506, 1
      %v515 = vperm.slane %v507, 1
      %v516 = vperm.slane %v508, 1
      %v517 = vperm.slane %v509, 1
      %522 = vrot.lane.b32.xlu0 %v514, 32
      %v523 = vpop.permute.xlu0 %522
      %524 = vrot.lane.b32.xlu0 %v515, 32
      %v525 = vpop.permute.xlu0 %524
      %526 = vrot.lane.b32.xlu0 %v516, 32
      %v527 = vpop.permute.xlu0 %526
      %528 = vrot.lane.b32.xlu0 %v517, 32
      %v529 = vpop.permute.xlu0 %528
      %v530 = vsel %vm344, %v523, %v525
      %v531 = vsel %vm344, %v525, %v527
      %v532 = vsel %vm344, %v527, %v529
      %v538 = vmul.f32 %v466, %v523
      %v539 = vmul.f32 %v467, %v530
      %v540 = vmul.f32 %v468, %v531
      %v541 = vmul.f32 %v469, %v532
      %v542 = vmul.f32 %v504, %v529
      %v543 = vmul.f32 %v470, %v523
      %v544 = vmul.f32 %v471, %v530
      %v545 = vmul.f32 %v472, %v531
      %v546 = vmul.f32 %v473, %v532
      %v547 = vmul.f32 %v505, %v529
      %558 = vrot.lane.b32.xlu0 %v538, 96
      %v559 = vpop.permute.xlu0 %558
      %560 = vrot.lane.b32.xlu0 %v539, 96
      %v561 = vpop.permute.xlu0 %560
      %562 = vrot.lane.b32.xlu0 %v540, 96
      %v563 = vpop.permute.xlu0 %562
      %564 = vrot.lane.b32.xlu0 %v541, 96
      %v565 = vpop.permute.xlu0 %564
      %566 = vrot.lane.b32.xlu0 %v542, 96
      %v567 = vpop.permute.xlu0 %566
      %568 = vrot.lane.b32.xlu0 %v543, 96
      %v569 = vpop.permute.xlu0 %568
      %570 = vrot.lane.b32.xlu0 %v544, 96
      %v571 = vpop.permute.xlu0 %570
      %572 = vrot.lane.b32.xlu0 %v545, 96
      %v573 = vpop.permute.xlu0 %572
      %574 = vrot.lane.b32.xlu0 %v546, 96
      %v575 = vpop.permute.xlu0 %574
      %576 = vrot.lane.b32.xlu0 %v547, 96
      %v577 = vpop.permute.xlu0 %576
      %vm578 = vcmask 785408
      %v579 = vsel %vm578, %v559, %v561
      %v580 = vsel %vm578, %v561, %v563
      %v581 = vsel %vm578, %v563, %v565
      %v582 = vsel %vm578, %v565, %v567
      %v583 = vsel %vm578, %v569, %v571
      %v584 = vsel %vm578, %v571, %v573
      %v585 = vsel %vm578, %v573, %v575
      %v586 = vsel %vm578, %v575, %v577
      %v595 = vadd.f32 %v496, %v579
      %v596 = vadd.f32 %v497, %v580
      %v597 = vadd.f32 %v498, %v581
      %v598 = vadd.f32 %v499, %v582
      %v599 = vadd.f32 %v500, %v583
      %v600 = vadd.f32 %v501, %v584
      %v601 = vadd.f32 %v502, %v585
      %v602 = vadd.f32 %v503, %v586
      %v603 = vperm.slane %v373, 2
      %v604 = vperm.slane %v373, 6
      %v605 = vperm.slane %v374, 2
      %v606 = vperm.slane %v374, 6
      %v611 = vperm.slane %v603, 2
      %v612 = vperm.slane %v604, 2
      %v613 = vperm.slane %v605, 2
      %v614 = vperm.slane %v606, 2
      %619 = vrot.lane.b32.xlu0 %v611, 64
      %v620 = vpop.permute.xlu0 %619
      %621 = vrot.lane.b32.xlu0 %v612, 64
      %v622 = vpop.permute.xlu0 %621
      %623 = vrot.lane.b32.xlu0 %v613, 64
      %v624 = vpop.permute.xlu0 %623
      %625 = vrot.lane.b32.xlu0 %v614, 64
      %v626 = vpop.permute.xlu0 %625
      %vm627 = vcmask 523264
      %v628 = vsel %vm627, %v620, %v622
      %v629 = vsel %vm627, %v622, %v624
      %v630 = vsel %vm627, %v624, %v626
      %v636 = vmul.f32 %v466, %v620
      %v637 = vmul.f32 %v467, %v628
      %v638 = vmul.f32 %v468, %v629
      %v639 = vmul.f32 %v469, %v630
      %v640 = vmul.f32 %v504, %v626
      %v641 = vmul.f32 %v470, %v620
      %v642 = vmul.f32 %v471, %v628
      %v643 = vmul.f32 %v472, %v629
      %v644 = vmul.f32 %v473, %v630
      %v645 = vmul.f32 %v505, %v626
      %656 = vrot.lane.b32.xlu0 %v636, 64
      %v657 = vpop.permute.xlu0 %656
      %658 = vrot.lane.b32.xlu0 %v637, 64
      %v659 = vpop.permute.xlu0 %658
      %660 = vrot.lane.b32.xlu0 %v638, 64
      %v661 = vpop.permute.xlu0 %660
      %662 = vrot.lane.b32.xlu0 %v639, 64
      %v663 = vpop.permute.xlu0 %662
      %664 = vrot.lane.b32.xlu0 %v640, 64
      %v665 = vpop.permute.xlu0 %664
      %666 = vrot.lane.b32.xlu0 %v641, 64
      %v667 = vpop.permute.xlu0 %666
      %668 = vrot.lane.b32.xlu0 %v642, 64
      %v669 = vpop.permute.xlu0 %668
      %670 = vrot.lane.b32.xlu0 %v643, 64
      %v671 = vpop.permute.xlu0 %670
      %672 = vrot.lane.b32.xlu0 %v644, 64
      %v673 = vpop.permute.xlu0 %672
      %674 = vrot.lane.b32.xlu0 %v645, 64
      %v675 = vpop.permute.xlu0 %674
      %v676 = vsel %vm627, %v657, %v659
      %v677 = vsel %vm627, %v659, %v661
      %v678 = vsel %vm627, %v661, %v663
      %v679 = vsel %vm627, %v663, %v665
      %v680 = vsel %vm627, %v667, %v669
      %v681 = vsel %vm627, %v669, %v671
      %v682 = vsel %vm627, %v671, %v673
      %v683 = vsel %vm627, %v673, %v675
      %v692 = vadd.f32 %v595, %v676
      %v693 = vadd.f32 %v596, %v677
      %v694 = vadd.f32 %v597, %v678
      %v695 = vadd.f32 %v598, %v679
      %v696 = vadd.f32 %v599, %v680
      %v697 = vadd.f32 %v600, %v681
      %v698 = vadd.f32 %v601, %v682
      %v699 = vadd.f32 %v602, %v683
      %v700 = vld [vmem:[#allocation2] sm:$0xfe]
      %v701 = vld [vmem:[#allocation2 + $0x8] sm:$0xfe]
      %v702 = vld [vmem:[#allocation2 + $0x10] sm:$0xfe]
      %v703 = vld [vmem:[#allocation2 + $0x18] sm:$0xfe]
      %v704 = vld [vmem:[#allocation2 + $0x50] sm:$0x1]
      %v705 = vld [vmem:[#allocation2 + $0x58] sm:$0x1]
      %v706 = vld [vmem:[#allocation2 + $0x60] sm:$0x1]
      %v707 = vld [vmem:[#allocation2 + $0x68] sm:$0x1]
      %v710 = vperm.slane %v375, 0
      %v711 = vperm.slane %v375, 4
      %v712 = vperm.slane %v376, 0
      %v713 = vperm.slane %v376, 4
      %v718 = vperm.slane %v710, 0
      %v719 = vperm.slane %v711, 0
      %v720 = vperm.slane %v712, 0
      %v721 = vperm.slane %v713, 0
      %v722 = vmul.f32 %v700, %v718
      %v723 = vmul.f32 %v701, %v719
      %v724 = vmul.f32 %v702, %v720
      %v725 = vmul.f32 %v703, %v721
      %v726 = vmul.f32 %v470, %v718
      %v727 = vmul.f32 %v471, %v719
      %v728 = vmul.f32 %v472, %v720
      %v729 = vmul.f32 %v473, %v721
      %v730 = vmul.f32 %v704, %v718
      %v731 = vmul.f32 %v705, %v719
      %v732 = vmul.f32 %v706, %v720
      %v733 = vmul.f32 %v707, %v721
      %vm746 = vcmask 1046528
      %v747 = vrot.slane %v722, 1
      %v748 = vrot.slane %v726, 1
      %v749 = vsel %vm746, %v747, %v748
      %v750 = vrot.slane %v723, 1
      %v751 = vrot.slane %v727, 1
      %v752 = vsel %vm746, %v750, %v751
      %v753 = vrot.slane %v724, 1
      %v754 = vrot.slane %v728, 1
      %v755 = vsel %vm746, %v753, %v754
      %v756 = vrot.slane %v725, 1
      %v757 = vrot.slane %v729, 1
      %v758 = vsel %vm746, %v756, %v757
      %v759 = vrot.slane %v730, 1
      %v760 = vsel %vm746, %v748, %v759
      %v761 = vrot.slane %v731, 1
      %v762 = vsel %vm746, %v751, %v761
      %v763 = vrot.slane %v732, 1
      %v764 = vsel %vm746, %v754, %v763
      %v765 = vrot.slane %v733, 1
      %v766 = vsel %vm746, %v757, %v765
      %v775 = vadd.f32 %v692, %v749
      %v776 = vadd.f32 %v693, %v752
      %v777 = vadd.f32 %v694, %v755
      %v778 = vadd.f32 %v695, %v758
      %v779 = vadd.f32 %v696, %v760
      %v780 = vadd.f32 %v697, %v762
      %v781 = vadd.f32 %v698, %v764
      %v782 = vadd.f32 %v699, %v766
      %v783 = vld [vmem:[#allocation2 + $0x20] sm:$0xfe]
      %v784 = vld [vmem:[#allocation2 + $0x70] sm:$0x1]
      %v785 = vperm.slane %v375, 1
      %v786 = vperm.slane %v375, 5
      %v787 = vperm.slane %v376, 1
      %v788 = vperm.slane %v376, 5
      %v793 = vperm.slane %v785, 1
      %v794 = vperm.slane %v786, 1
      %v795 = vperm.slane %v787, 1
      %v796 = vperm.slane %v788, 1
      %801 = vrot.lane.b32.xlu0 %v793, 32
      %v802 = vpop.permute.xlu0 %801
      %803 = vrot.lane.b32.xlu0 %v794, 32
      %v804 = vpop.permute.xlu0 %803
      %805 = vrot.lane.b32.xlu0 %v795, 32
      %v806 = vpop.permute.xlu0 %805
      %807 = vrot.lane.b32.xlu0 %v796, 32
      %v808 = vpop.permute.xlu0 %807
      %v809 = vsel %vm344, %v802, %v804
      %v810 = vsel %vm344, %v804, %v806
      %v811 = vsel %vm344, %v806, %v808
      %v817 = vmul.f32 %v700, %v802
      %v818 = vmul.f32 %v701, %v809
      %v819 = vmul.f32 %v702, %v810
      %v820 = vmul.f32 %v703, %v811
      %v821 = vmul.f32 %v783, %v808
      %v822 = vmul.f32 %v470, %v802
      %v823 = vmul.f32 %v471, %v809
      %v824 = vmul.f32 %v472, %v810
      %v825 = vmul.f32 %v473, %v811
      %v826 = vmul.f32 %v505, %v808
      %v827 = vmul.f32 %v704, %v802
      %v828 = vmul.f32 %v705, %v809
      %v829 = vmul.f32 %v706, %v810
      %v830 = vmul.f32 %v707, %v811
      %v831 = vmul.f32 %v784, %v808
      %v847 = vrot.slane %v817, 1
      %v848 = vrot.slane %v822, 1
      %v849 = vsel %vm746, %v847, %v848
      %v850 = vrot.slane %v818, 1
      %v851 = vrot.slane %v823, 1
      %v852 = vsel %vm746, %v850, %v851
      %v853 = vrot.slane %v819, 1
      %v854 = vrot.slane %v824, 1
      %v855 = vsel %vm746, %v853, %v854
      %v856 = vrot.slane %v820, 1
      %v857 = vrot.slane %v825, 1
      %v858 = vsel %vm746, %v856, %v857
      %v859 = vrot.slane %v821, 1
      %v860 = vrot.slane %v826, 1
      %v861 = vsel %vm746, %v859, %v860
      %v862 = vrot.slane %v827, 1
      %v863 = vsel %vm746, %v848, %v862
      %v864 = vrot.slane %v828, 1
      %v865 = vsel %vm746, %v851, %v864
      %v866 = vrot.slane %v829, 1
      %v867 = vsel %vm746, %v854, %v866
      %v868 = vrot.slane %v830, 1
      %v869 = vsel %vm746, %v857, %v868
      %v870 = vrot.slane %v831, 1
      %v871 = vsel %vm746, %v860, %v870
      %872 = vrot.lane.b32.xlu0 %v849, 96
      %v873 = vpop.permute.xlu0 %872
      %874 = vrot.lane.b32.xlu0 %v852, 96
      %v875 = vpop.permute.xlu0 %874
      %876 = vrot.lane.b32.xlu0 %v855, 96
      %v877 = vpop.permute.xlu0 %876
      %878 = vrot.lane.b32.xlu0 %v858, 96
      %v879 = vpop.permute.xlu0 %878
      %880 = vrot.lane.b32.xlu0 %v861, 96
      %v881 = vpop.permute.xlu0 %880
      %882 = vrot.lane.b32.xlu0 %v863, 96
      %v883 = vpop.permute.xlu0 %882
      %884 = vrot.lane.b32.xlu0 %v865, 96
      %v885 = vpop.permute.xlu0 %884
      %886 = vrot.lane.b32.xlu0 %v867, 96
      %v887 = vpop.permute.xlu0 %886
      %888 = vrot.lane.b32.xlu0 %v869, 96
      %v889 = vpop.permute.xlu0 %888
      %890 = vrot.lane.b32.xlu0 %v871, 96
      %v891 = vpop.permute.xlu0 %890
      %v892 = vsel %vm578, %v873, %v875
      %v893 = vsel %vm578, %v875, %v877
      %v894 = vsel %vm578, %v877, %v879
      %v895 = vsel %vm578, %v879, %v881
      %v896 = vsel %vm578, %v883, %v885
      %v897 = vsel %vm578, %v885, %v887
      %v898 = vsel %vm578, %v887, %v889
      %v899 = vsel %vm578, %v889, %v891
      %v908 = vadd.f32 %v775, %v892
      %v909 = vadd.f32 %v776, %v893
      %v910 = vadd.f32 %v777, %v894
      %v911 = vadd.f32 %v778, %v895
      %v912 = vadd.f32 %v779, %v896
      %v913 = vadd.f32 %v780, %v897
      %v914 = vadd.f32 %v781, %v898
      %v915 = vadd.f32 %v782, %v899
      %v916 = vperm.slane %v375, 2
      %v917 = vperm.slane %v375, 6
      %v918 = vperm.slane %v376, 2
      %v919 = vperm.slane %v376, 6
      %v924 = vperm.slane %v916, 2
      %v925 = vperm.slane %v917, 2
      %v926 = vperm.slane %v918, 2
      %v927 = vperm.slane %v919, 2
      %932 = vrot.lane.b32.xlu0 %v924, 64
      %v933 = vpop.permute.xlu0 %932
      %934 = vrot.lane.b32.xlu0 %v925, 64
      %v935 = vpop.permute.xlu0 %934
      %936 = vrot.lane.b32.xlu0 %v926, 64
      %v937 = vpop.permute.xlu0 %936
      %938 = vrot.lane.b32.xlu0 %v927, 64
      %v939 = vpop.permute.xlu0 %938
      %v940 = vsel %vm627, %v933, %v935
      %v941 = vsel %vm627, %v935, %v937
      %v942 = vsel %vm627, %v937, %v939
      %v948 = vmul.f32 %v700, %v933
      %v949 = vmul.f32 %v701, %v940
      %v950 = vmul.f32 %v702, %v941
      %v951 = vmul.f32 %v703, %v942
      %v952 = vmul.f32 %v783, %v939
      %v953 = vmul.f32 %v470, %v933
      %v954 = vmul.f32 %v471, %v940
      %v955 = vmul.f32 %v472, %v941
      %v956 = vmul.f32 %v473, %v942
      %v957 = vmul.f32 %v505, %v939
      %v958 = vmul.f32 %v704, %v933
      %v959 = vmul.f32 %v705, %v940
      %v960 = vmul.f32 %v706, %v941
      %v961 = vmul.f32 %v707, %v942
      %v962 = vmul.f32 %v784, %v939
      %v978 = vrot.slane %v948, 1
      %v979 = vrot.slane %v953, 1
      %v980 = vsel %vm746, %v978, %v979
      %v981 = vrot.slane %v949, 1
      %v982 = vrot.slane %v954, 1
      %v983 = vsel %vm746, %v981, %v982
      %v984 = vrot.slane %v950, 1
      %v985 = vrot.slane %v955, 1
      %v986 = vsel %vm746, %v984, %v985
      %v987 = vrot.slane %v951, 1
      %v988 = vrot.slane %v956, 1
      %v989 = vsel %vm746, %v987, %v988
      %v990 = vrot.slane %v952, 1
      %v991 = vrot.slane %v957, 1
      %v992 = vsel %vm746, %v990, %v991
      %v993 = vrot.slane %v958, 1
      %v994 = vsel %vm746, %v979, %v993
      %v995 = vrot.slane %v959, 1
      %v996 = vsel %vm746, %v982, %v995
      %v997 = vrot.slane %v960, 1
      %v998 = vsel %vm746, %v985, %v997
      %v999 = vrot.slane %v961, 1
      %v1000 = vsel %vm746, %v988, %v999
      %v1001 = vrot.slane %v962, 1
      %v1002 = vsel %vm746, %v991, %v1001
      %1003 = vrot.lane.b32.xlu0 %v980, 64
      %v1004 = vpop.permute.xlu0 %1003
      %1005 = vrot.lane.b32.xlu0 %v983, 64
      %v1006 = vpop.permute.xlu0 %1005
      %1007 = vrot.lane.b32.xlu0 %v986, 64
      %v1008 = vpop.permute.xlu0 %1007
      %1009 = vrot.lane.b32.xlu0 %v989, 64
      %v1010 = vpop.permute.xlu0 %1009
      %1011 = vrot.lane.b32.xlu0 %v992, 64
      %v1012 = vpop.permute.xlu0 %1011
      %1013 = vrot.lane.b32.xlu0 %v994, 64
      %v1014 = vpop.permute.xlu0 %1013
      %1015 = vrot.lane.b32.xlu0 %v996, 64
      %v1016 = vpop.permute.xlu0 %1015
      %1017 = vrot.lane.b32.xlu0 %v998, 64
      %v1018 = vpop.permute.xlu0 %1017
      %1019 = vrot.lane.b32.xlu0 %v1000, 64
      %v1020 = vpop.permute.xlu0 %1019
      %1021 = vrot.lane.b32.xlu0 %v1002, 64
      %v1022 = vpop.permute.xlu0 %1021
      %v1023 = vsel %vm627, %v1004, %v1006
      %v1024 = vsel %vm627, %v1006, %v1008
      %v1025 = vsel %vm627, %v1008, %v1010
      %v1026 = vsel %vm627, %v1010, %v1012
      %v1027 = vsel %vm627, %v1014, %v1016
      %v1028 = vsel %vm627, %v1016, %v1018
      %v1029 = vsel %vm627, %v1018, %v1020
      %v1030 = vsel %vm627, %v1020, %v1022
      %v1039 = vadd.f32 %v908, %v1023
      %v1040 = vadd.f32 %v909, %v1024
      %v1041 = vadd.f32 %v910, %v1025
      %v1042 = vadd.f32 %v911, %v1026
      %v1043 = vadd.f32 %v912, %v1027
      %v1044 = vadd.f32 %v913, %v1028
      %v1045 = vadd.f32 %v914, %v1029
      %v1046 = vadd.f32 %v915, %v1030
      %v1047 = vld [vmem:[#allocation2] sm:$0xfc]
      %v1048 = vld [vmem:[#allocation2 + $0x8] sm:$0xfc]
      %v1049 = vld [vmem:[#allocation2 + $0x10] sm:$0xfc]
      %v1050 = vld [vmem:[#allocation2 + $0x18] sm:$0xfc]
      %v1051 = vld [vmem:[#allocation2 + $0x50] sm:$0x3]
      %v1052 = vld [vmem:[#allocation2 + $0x58] sm:$0x3]
      %v1053 = vld [vmem:[#allocation2 + $0x60] sm:$0x3]
      %v1054 = vld [vmem:[#allocation2 + $0x68] sm:$0x3]
      %v1057 = vperm.slane %v377, 0
      %v1058 = vperm.slane %v377, 4
      %v1059 = vperm.slane %v378, 0
      %v1060 = vperm.slane %v378, 4
      %v1065 = vperm.slane %v1057, 0
      %v1066 = vperm.slane %v1058, 0
      %v1067 = vperm.slane %v1059, 0
      %v1068 = vperm.slane %v1060, 0
      %v1069 = vmul.f32 %v1047, %v1065
      %v1070 = vmul.f32 %v1048, %v1066
      %v1071 = vmul.f32 %v1049, %v1067
      %v1072 = vmul.f32 %v1050, %v1068
      %v1073 = vmul.f32 %v470, %v1065
      %v1074 = vmul.f32 %v471, %v1066
      %v1075 = vmul.f32 %v472, %v1067
      %v1076 = vmul.f32 %v473, %v1068
      %v1077 = vmul.f32 %v1051, %v1065
      %v1078 = vmul.f32 %v1052, %v1066
      %v1079 = vmul.f32 %v1053, %v1067
      %v1080 = vmul.f32 %v1054, %v1068
      %vm1093 = vcmask 1045504
      %v1094 = vrot.slane %v1069, 2
      %v1095 = vrot.slane %v1073, 2
      %v1096 = vsel %vm1093, %v1094, %v1095
      %v1097 = vrot.slane %v1070, 2
      %v1098 = vrot.slane %v1074, 2
      %v1099 = vsel %vm1093, %v1097, %v1098
      %v1100 = vrot.slane %v1071, 2
      %v1101 = vrot.slane %v1075, 2
      %v1102 = vsel %vm1093, %v1100, %v1101
      %v1103 = vrot.slane %v1072, 2
      %v1104 = vrot.slane %v1076, 2
      %v1105 = vsel %vm1093, %v1103, %v1104
      %v1106 = vrot.slane %v1077, 2
      %v1107 = vsel %vm1093, %v1095, %v1106
      %v1108 = vrot.slane %v1078, 2
      %v1109 = vsel %vm1093, %v1098, %v1108
      %v1110 = vrot.slane %v1079, 2
      %v1111 = vsel %vm1093, %v1101, %v1110
      %v1112 = vrot.slane %v1080, 2
      %v1113 = vsel %vm1093, %v1104, %v1112
      %v1122 = vadd.f32 %v1039, %v1096
      %v1123 = vadd.f32 %v1040, %v1099
      %v1124 = vadd.f32 %v1041, %v1102
      %v1125 = vadd.f32 %v1042, %v1105
      %v1126 = vadd.f32 %v1043, %v1107
      %v1127 = vadd.f32 %v1044, %v1109
      %v1128 = vadd.f32 %v1045, %v1111
      %v1129 = vadd.f32 %v1046, %v1113
      %v1130 = vld [vmem:[#allocation2 + $0x20] sm:$0xfc]
      %v1131 = vld [vmem:[#allocation2 + $0x70] sm:$0x3]
      %v1132 = vperm.slane %v377, 1
      %v1133 = vperm.slane %v377, 5
      %v1134 = vperm.slane %v378, 1
      %v1135 = vperm.slane %v378, 5
      %v1140 = vperm.slane %v1132, 1
      %v1141 = vperm.slane %v1133, 1
      %v1142 = vperm.slane %v1134, 1
      %v1143 = vperm.slane %v1135, 1
      %1148 = vrot.lane.b32.xlu0 %v1140, 32
      %v1149 = vpop.permute.xlu0 %1148
      %1150 = vrot.lane.b32.xlu0 %v1141, 32
      %v1151 = vpop.permute.xlu0 %1150
      %1152 = vrot.lane.b32.xlu0 %v1142, 32
      %v1153 = vpop.permute.xlu0 %1152
      %1154 = vrot.lane.b32.xlu0 %v1143, 32
      %v1155 = vpop.permute.xlu0 %1154
      %v1156 = vsel %vm344, %v1149, %v1151
      %v1157 = vsel %vm344, %v1151, %v1153
      %v1158 = vsel %vm344, %v1153, %v1155
      %v1164 = vmul.f32 %v1047, %v1149
      %v1165 = vmul.f32 %v1048, %v1156
      %v1166 = vmul.f32 %v1049, %v1157
      %v1167 = vmul.f32 %v1050, %v1158
      %v1168 = vmul.f32 %v1130, %v1155
      %v1169 = vmul.f32 %v470, %v1149
      %v1170 = vmul.f32 %v471, %v1156
      %v1171 = vmul.f32 %v472, %v1157
      %v1172 = vmul.f32 %v473, %v1158
      %v1173 = vmul.f32 %v505, %v1155
      %v1174 = vmul.f32 %v1051, %v1149
      %v1175 = vmul.f32 %v1052, %v1156
      %v1176 = vmul.f32 %v1053, %v1157
      %v1177 = vmul.f32 %v1054, %v1158
      %v1178 = vmul.f32 %v1131, %v1155
      %v1194 = vrot.slane %v1164, 2
      %v1195 = vrot.slane %v1169, 2
      %v1196 = vsel %vm1093, %v1194, %v1195
      %v1197 = vrot.slane %v1165, 2
      %v1198 = vrot.slane %v1170, 2
      %v1199 = vsel %vm1093, %v1197, %v1198
      %v1200 = vrot.slane %v1166, 2
      %v1201 = vrot.slane %v1171, 2
      %v1202 = vsel %vm1093, %v1200, %v1201
      %v1203 = vrot.slane %v1167, 2
      %v1204 = vrot.slane %v1172, 2
      %v1205 = vsel %vm1093, %v1203, %v1204
      %v1206 = vrot.slane %v1168, 2
      %v1207 = vrot.slane %v1173, 2
      %v1208 = vsel %vm1093, %v1206, %v1207
      %v1209 = vrot.slane %v1174, 2
      %v1210 = vsel %vm1093, %v1195, %v1209
      %v1211 = vrot.slane %v1175, 2
      %v1212 = vsel %vm1093, %v1198, %v1211
      %v1213 = vrot.slane %v1176, 2
      %v1214 = vsel %vm1093, %v1201, %v1213
      %v1215 = vrot.slane %v1177, 2
      %v1216 = vsel %vm1093, %v1204, %v1215
      %v1217 = vrot.slane %v1178, 2
      %v1218 = vsel %vm1093, %v1207, %v1217
      %1219 = vrot.lane.b32.xlu0 %v1196, 96
      %v1220 = vpop.permute.xlu0 %1219
      %1221 = vrot.lane.b32.xlu0 %v1199, 96
      %v1222 = vpop.permute.xlu0 %1221
      %1223 = vrot.lane.b32.xlu0 %v1202, 96
      %v1224 = vpop.permute.xlu0 %1223
      %1225 = vrot.lane.b32.xlu0 %v1205, 96
      %v1226 = vpop.permute.xlu0 %1225
      %1227 = vrot.lane.b32.xlu0 %v1208, 96
      %v1228 = vpop.permute.xlu0 %1227
      %1229 = vrot.lane.b32.xlu0 %v1210, 96
      %v1230 = vpop.permute.xlu0 %1229
      %1231 = vrot.lane.b32.xlu0 %v1212, 96
      %v1232 = vpop.permute.xlu0 %1231
      %1233 = vrot.lane.b32.xlu0 %v1214, 96
      %v1234 = vpop.permute.xlu0 %1233
      %1235 = vrot.lane.b32.xlu0 %v1216, 96
      %v1236 = vpop.permute.xlu0 %1235
      %1237 = vrot.lane.b32.xlu0 %v1218, 96
      %v1238 = vpop.permute.xlu0 %1237
      %v1239 = vsel %vm578, %v1220, %v1222
      %v1240 = vsel %vm578, %v1222, %v1224
      %v1241 = vsel %vm578, %v1224, %v1226
      %v1242 = vsel %vm578, %v1226, %v1228
      %v1243 = vsel %vm578, %v1230, %v1232
      %v1244 = vsel %vm578, %v1232, %v1234
      %v1245 = vsel %vm578, %v1234, %v1236
      %v1246 = vsel %vm578, %v1236, %v1238
      %v1255 = vadd.f32 %v1122, %v1239
      %v1256 = vadd.f32 %v1123, %v1240
      %v1257 = vadd.f32 %v1124, %v1241
      %v1258 = vadd.f32 %v1125, %v1242
      %v1259 = vadd.f32 %v1126, %v1243
      %v1260 = vadd.f32 %v1127, %v1244
      %v1261 = vadd.f32 %v1128, %v1245
      %v1262 = vadd.f32 %v1129, %v1246
      %v1263 = vperm.slane %v377, 2
      %v1264 = vperm.slane %v377, 6
      %v1265 = vperm.slane %v378, 2
      %v1266 = vperm.slane %v378, 6
      %v1271 = vperm.slane %v1263, 2
      %v1272 = vperm.slane %v1264, 2
      %v1273 = vperm.slane %v1265, 2
      %v1274 = vperm.slane %v1266, 2
      %1279 = vrot.lane.b32.xlu0 %v1271, 64
      %v1280 = vpop.permute.xlu0 %1279
      %1281 = vrot.lane.b32.xlu0 %v1272, 64
      %v1282 = vpop.permute.xlu0 %1281
      %1283 = vrot.lane.b32.xlu0 %v1273, 64
      %v1284 = vpop.permute.xlu0 %1283
      %1285 = vrot.lane.b32.xlu0 %v1274, 64
      %v1286 = vpop.permute.xlu0 %1285
      %v1287 = vsel %vm627, %v1280, %v1282
      %v1288 = vsel %vm627, %v1282, %v1284
      %v1289 = vsel %vm627, %v1284, %v1286
      %v1295 = vmul.f32 %v1047, %v1280
      %v1296 = vmul.f32 %v1048, %v1287
      %v1297 = vmul.f32 %v1049, %v1288
      %v1298 = vmul.f32 %v1050, %v1289
      %v1299 = vmul.f32 %v1130, %v1286
      %v1300 = vmul.f32 %v470, %v1280
      %v1301 = vmul.f32 %v471, %v1287
      %v1302 = vmul.f32 %v472, %v1288
      %v1303 = vmul.f32 %v473, %v1289
      %v1304 = vmul.f32 %v505, %v1286
      %v1305 = vmul.f32 %v1051, %v1280
      %v1306 = vmul.f32 %v1052, %v1287
      %v1307 = vmul.f32 %v1053, %v1288
      %v1308 = vmul.f32 %v1054, %v1289
      %v1309 = vmul.f32 %v1131, %v1286
      %v1325 = vrot.slane %v1295, 2
      %v1326 = vrot.slane %v1300, 2
      %v1327 = vsel %vm1093, %v1325, %v1326
      %v1328 = vrot.slane %v1296, 2
      %v1329 = vrot.slane %v1301, 2
      %v1330 = vsel %vm1093, %v1328, %v1329
      %v1331 = vrot.slane %v1297, 2
      %v1332 = vrot.slane %v1302, 2
      %v1333 = vsel %vm1093, %v1331, %v1332
      %v1334 = vrot.slane %v1298, 2
      %v1335 = vrot.slane %v1303, 2
      %v1336 = vsel %vm1093, %v1334, %v1335
      %v1337 = vrot.slane %v1299, 2
      %v1338 = vrot.slane %v1304, 2
      %v1339 = vsel %vm1093, %v1337, %v1338
      %v1340 = vrot.slane %v1305, 2
      %v1341 = vsel %vm1093, %v1326, %v1340
      %v1342 = vrot.slane %v1306, 2
      %v1343 = vsel %vm1093, %v1329, %v1342
      %v1344 = vrot.slane %v1307, 2
      %v1345 = vsel %vm1093, %v1332, %v1344
      %v1346 = vrot.slane %v1308, 2
      %v1347 = vsel %vm1093, %v1335, %v1346
      %v1348 = vrot.slane %v1309, 2
      %v1349 = vsel %vm1093, %v1338, %v1348
      %1350 = vrot.lane.b32.xlu0 %v1327, 64
      %v1351 = vpop.permute.xlu0 %1350
      %1352 = vrot.lane.b32.xlu0 %v1330, 64
      %v1353 = vpop.permute.xlu0 %1352
      %1354 = vrot.lane.b32.xlu0 %v1333, 64
      %v1355 = vpop.permute.xlu0 %1354
      %1356 = vrot.lane.b32.xlu0 %v1336, 64
      %v1357 = vpop.permute.xlu0 %1356
      %1358 = vrot.lane.b32.xlu0 %v1339, 64
      %v1359 = vpop.permute.xlu0 %1358
      %1360 = vrot.lane.b32.xlu0 %v1341, 64
      %v1361 = vpop.permute.xlu0 %1360
      %1362 = vrot.lane.b32.xlu0 %v1343, 64
      %v1363 = vpop.permute.xlu0 %1362
      %1364 = vrot.lane.b32.xlu0 %v1345, 64
      %v1365 = vpop.permute.xlu0 %1364
      %1366 = vrot.lane.b32.xlu0 %v1347, 64
      %v1367 = vpop.permute.xlu0 %1366
      %1368 = vrot.lane.b32.xlu0 %v1349, 64
      %v1369 = vpop.permute.xlu0 %1368
      %v1370 = vsel %vm627, %v1351, %v1353
      %v1371 = vsel %vm627, %v1353, %v1355
      %v1372 = vsel %vm627, %v1355, %v1357
      %v1373 = vsel %vm627, %v1357, %v1359
      %v1374 = vsel %vm627, %v1361, %v1363
      %v1375 = vsel %vm627, %v1363, %v1365
      %v1376 = vsel %vm627, %v1365, %v1367
      %v1377 = vsel %vm627, %v1367, %v1369
      %v1386 = vadd.f32 %v1255, %v1370
      %v1387 = vadd.f32 %v1256, %v1371
      %v1388 = vadd.f32 %v1257, %v1372
      %v1389 = vadd.f32 %v1258, %v1373
      %v1390 = vadd.f32 %v1259, %v1374
      %v1391 = vadd.f32 %v1260, %v1375
      %v1392 = vadd.f32 %v1261, %v1376
      %v1393 = vadd.f32 %v1262, %v1377
      %v1394 = vld [vmem:[%s2] sm:$0xf]
      %v1396 = vperm.slane %v1394, 0
      %v1397 = vperm.slane %v1394, 1
      %v1398 = vperm.slane %v1394, 2
      %v1399 = vperm.slane %v1394, 3
      %v1404 = vadd.f32 %v1386, %v1396
      %v1405 = vadd.f32 %v1387, %v1397
      %v1406 = vadd.f32 %v1388, %v1398
      %v1407 = vadd.f32 %v1389, %v1399
      %v1408 = vadd.f32 %v1390, %v1396
      %v1409 = vadd.f32 %v1391, %v1397
      %v1410 = vadd.f32 %v1392, %v1398
      %v1411 = vadd.f32 %v1393, %v1399
      %vm1412 = vcmp.gt.f32.partialorder %v1404, 0.0
      %vm1413 = vcmp.gt.f32.partialorder %v1405, 0.0
      %vm1414 = vcmp.gt.f32.partialorder %v1406, 0.0
      %vm1415 = vcmp.gt.f32.partialorder %v1407, 0.0
      %vm1416 = vcmp.gt.f32.partialorder %v1408, 0.0
      %vm1417 = vcmp.gt.f32.partialorder %v1409, 0.0
      %vm1418 = vcmp.gt.f32.partialorder %v1410, 0.0
      %vm1419 = vcmp.gt.f32.partialorder %v1411, 0.0
      %v1420 = vmul.f32 %v1404, 0.01
      %v1421 = vmul.f32 %v1405, 0.01
      %v1422 = vmul.f32 %v1406, 0.01
      %v1423 = vmul.f32 %v1407, 0.01
      %v1424 = vmul.f32 %v1408, 0.01
      %v1425 = vmul.f32 %v1409, 0.01
      %v1426 = vmul.f32 %v1410, 0.01
      %v1427 = vmul.f32 %v1411, 0.01
      %v1428 = vsel %vm1412, %v1404, %v1420
      %v1429 = vsel %vm1413, %v1405, %v1421
      %v1430 = vsel %vm1414, %v1406, %v1422
      %v1431 = vsel %vm1415, %v1407, %v1423
      %v1432 = vsel %vm1416, %v1408, %v1424
      %v1433 = vsel %vm1417, %v1409, %v1425
      %v1434 = vsel %vm1418, %v1410, %v1426
      %v1435 = vsel %vm1419, %v1411, %v1427
      %v1436 = vld [vmem:[%s3] sm:$0xff]
      %v1437 = vld [vmem:[%s3 + $0x8] sm:$0xff]
      %v1438 = vld [vmem:[%s3 + $0x10] sm:$0xff]
      %v1439 = vld [vmem:[%s3 + $0x18] sm:$0xff]
      %v1440 = vld [vmem:[%s3 + $0x20] sm:$0xff]
      %v1441 = vld [vmem:[%s3 + $0x28] sm:$0xff]
      %v1442 = vld [vmem:[%s3 + $0x30] sm:$0xff]
      %v1443 = vld [vmem:[%s3 + $0x38] sm:$0xff]
      %v1444 = vld [vmem:[%s3 + $0x40] sm:$0xff]
      %v1445 = vld [vmem:[%s3 + $0x48] sm:$0xff]
      %v1446 = vld [vmem:[%s3 + $0x50] sm:$0xff]
      %v1447 = vld [vmem:[%s3 + $0x58] sm:$0xff]
      %v1448 = vld [vmem:[%s3 + $0x60] sm:$0xff]
      %v1449 = vld [vmem:[%s3 + $0x68] sm:$0xff]
      %v1450 = vld [vmem:[%s3 + $0x70] sm:$0xff]
      %v1451 = vld [vmem:[%s3 + $0x78] sm:$0xff]
      %v1452 = vld [vmem:[%s3 + $0x80] sm:$0xff]
      %v1453 = vld [vmem:[%s3 + $0x88] sm:$0xff]
      %v1454 = vld [vmem:[%s3 + $0x90] sm:$0xff]
      %v1455 = vld [vmem:[%s3 + $0x98] sm:$0xff]
      %v1456 = vld [vmem:[%s3 + $0xa0] sm:$0xff]
      %v1457 = vld [vmem:[%s3 + $0xa8] sm:$0xff]
      %v1458 = vld [vmem:[%s3 + $0xb0] sm:$0xff]
      %v1459 = vld [vmem:[%s3 + $0xb8] sm:$0xff]
      %v1460 = vld [vmem:[%s3 + $0xc0] sm:$0xff]
      %v1461 = vld [vmem:[%s3 + $0xc8] sm:$0xff]
      %v1462 = vld [vmem:[%s3 + $0xd0] sm:$0xff]
      %v1463 = vld [vmem:[%s3 + $0xd8] sm:$0xff]
      %v1464 = vld [vmem:[%s3 + $0xe0] sm:$0xff]
      %v1465 = vld [vmem:[%s3 + $0xe8] sm:$0xff]
      %v1466 = vld [vmem:[%s3 + $0xf0] sm:$0xff]
      %v1467 = vld [vmem:[%s3 + $0xf8] sm:$0xff]
      %v1468 = vld [vmem:[%s3 + $0x100] sm:$0xff]
      %v1469 = vld [vmem:[%s3 + $0x108] sm:$0xff]
      %v1470 = vld [vmem:[%s3 + $0x110] sm:$0xff]
      %v1471 = vld [vmem:[%s3 + $0x118] sm:$0xff]
      %v1472 = vld [vmem:[%s3 + $0x120] sm:$0xff]
      %v1473 = vld [vmem:[%s3 + $0x128] sm:$0xff]
      %v1474 = vld [vmem:[%s3 + $0x130] sm:$0xff]
      %v1475 = vld [vmem:[%s3 + $0x138] sm:$0xff]
      %v1476 = vld [vmem:[%s3 + $0x140] sm:$0xff]
      %v1477 = vld [vmem:[%s3 + $0x148] sm:$0xff]
      %v1478 = vld [vmem:[%s3 + $0x150] sm:$0xff]
      %v1479 = vld [vmem:[%s3 + $0x158] sm:$0xff]
      %v1480 = vld [vmem:[%s3 + $0x160] sm:$0xff]
      %v1481 = vld [vmem:[%s3 + $0x168] sm:$0xff]
      %v1482 = vld [vmem:[%s3 + $0x170] sm:$0xff]
      %v1483 = vld [vmem:[%s3 + $0x178] sm:$0xff]
      %v1484 = vld [vmem:[%s3 + $0x180] sm:$0xff]
      %v1485 = vld [vmem:[%s3 + $0x188] sm:$0xff]
      %v1486 = vld [vmem:[%s3 + $0x190] sm:$0xff]
      %v1487 = vld [vmem:[%s3 + $0x198] sm:$0xff]
      %v1488 = vld [vmem:[%s3 + $0x1a0] sm:$0xff]
      %v1489 = vld [vmem:[%s3 + $0x1a8] sm:$0xff]
      %v1490 = vld [vmem:[%s3 + $0x1b0] sm:$0xff]
      %v1491 = vld [vmem:[%s3 + $0x1b8] sm:$0xff]
      %v1492 = vld [vmem:[%s3 + $0x1c0] sm:$0xff]
      %v1493 = vld [vmem:[%s3 + $0x1c8] sm:$0xff]
      %v1494 = vld [vmem:[%s3 + $0x1d0] sm:$0xff]
      %v1495 = vld [vmem:[%s3 + $0x1d8] sm:$0xff]
      %v1496 = vld [vmem:[%s3 + $0x1e0] sm:$0xff]
      %v1497 = vld [vmem:[%s3 + $0x1e8] sm:$0xff]
      %v1498 = vld [vmem:[%s3 + $0x1f0] sm:$0xff]
      %v1499 = vld [vmem:[%s3 + $0x1f8] sm:$0xff]
      %v1500 = vld [vmem:[%s3 + $0x200] sm:$0xff]
      %v1501 = vld [vmem:[%s3 + $0x208] sm:$0xff]
      %v1502 = vld [vmem:[%s3 + $0x210] sm:$0xff]
      %v1503 = vld [vmem:[%s3 + $0x218] sm:$0xff]
      %v1504 = vld [vmem:[%s3 + $0x220] sm:$0xff]
      %v1505 = vld [vmem:[%s3 + $0x228] sm:$0xff]
      %v1506 = vld [vmem:[%s3 + $0x230] sm:$0xff]
      %v1507 = vld [vmem:[%s3 + $0x238] sm:$0xff]
      %v1508 = vld [vmem:[%s3 + $0x240] sm:$0xff]
      %v1509 = vld [vmem:[%s3 + $0x248] sm:$0xff]
      %v1510 = vld [vmem:[%s3 + $0x250] sm:$0xff]
      %v1511 = vld [vmem:[%s3 + $0x258] sm:$0xff]
      %v1512 = vld [vmem:[%s3 + $0x260] sm:$0xff]
      %v1513 = vld [vmem:[%s3 + $0x268] sm:$0xff]
      %v1514 = vld [vmem:[%s3 + $0x270] sm:$0xff]
      %v1515 = vld [vmem:[%s3 + $0x278] sm:$0xff]
      %v1516 = vld [vmem:[%s3 + $0x280] sm:$0xff]
      %v1517 = vld [vmem:[%s3 + $0x288] sm:$0xff]
      %v1518 = vld [vmem:[%s3 + $0x290] sm:$0xff]
      %v1519 = vld [vmem:[%s3 + $0x298] sm:$0xff]
      %v1520 = vld [vmem:[%s3 + $0x2a0] sm:$0xff]
      %v1521 = vld [vmem:[%s3 + $0x2a8] sm:$0xff]
      %v1522 = vld [vmem:[%s3 + $0x2b0] sm:$0xff]
      %v1523 = vld [vmem:[%s3 + $0x2b8] sm:$0xff]
      %v1524 = vld [vmem:[%s3 + $0x2c0] sm:$0xff]
      %v1525 = vld [vmem:[%s3 + $0x2c8] sm:$0xff]
      %v1526 = vld [vmem:[%s3 + $0x2d0] sm:$0xff]
      %v1527 = vld [vmem:[%s3 + $0x2d8] sm:$0xff]
      %v1528 = vld [vmem:[%s3 + $0x2e0] sm:$0xff]
      %v1529 = vld [vmem:[%s3 + $0x2e8] sm:$0xff]
      %v1530 = vld [vmem:[%s3 + $0x2f0] sm:$0xff]
      %v1531 = vld [vmem:[%s3 + $0x2f8] sm:$0xff]
      %v1532 = vld [vmem:[%s3 + $0x300] sm:$0xff]
      %v1533 = vld [vmem:[%s3 + $0x308] sm:$0xff]
      %v1534 = vld [vmem:[%s3 + $0x310] sm:$0xff]
      %v1535 = vld [vmem:[%s3 + $0x318] sm:$0xff]
      %v1536 = vld [vmem:[%s3 + $0x320] sm:$0xff]
      %v1537 = vld [vmem:[%s3 + $0x328] sm:$0xff]
      %v1538 = vld [vmem:[%s3 + $0x330] sm:$0xff]
      %v1539 = vld [vmem:[%s3 + $0x338] sm:$0xff]
      %v1540 = vld [vmem:[%s3 + $0x340] sm:$0xff]
      %v1541 = vld [vmem:[%s3 + $0x348] sm:$0xff]
      %v1542 = vld [vmem:[%s3 + $0x350] sm:$0xff]
      %v1543 = vld [vmem:[%s3 + $0x358] sm:$0xff]
      %v1544 = vld [vmem:[%s3 + $0x360] sm:$0xff]
      %v1545 = vld [vmem:[%s3 + $0x368] sm:$0xff]
      %v1546 = vld [vmem:[%s3 + $0x370] sm:$0xff]
      %v1547 = vld [vmem:[%s3 + $0x378] sm:$0xff]
      %v1548 = vld [vmem:[%s3 + $0x380] sm:$0xff]
      %v1549 = vld [vmem:[%s3 + $0x388] sm:$0xff]
      %v1550 = vld [vmem:[%s3 + $0x390] sm:$0xff]
      %v1551 = vld [vmem:[%s3 + $0x398] sm:$0xff]
      %v1552 = vld [vmem:[%s3 + $0x3a0] sm:$0xff]
      %v1553 = vld [vmem:[%s3 + $0x3a8] sm:$0xff]
      %v1554 = vld [vmem:[%s3 + $0x3b0] sm:$0xff]
      %v1555 = vld [vmem:[%s3 + $0x3b8] sm:$0xff]
      %v1556 = vld [vmem:[%s3 + $0x3c0] sm:$0xff]
      %v1557 = vld [vmem:[%s3 + $0x3c8] sm:$0xff]
      %v1558 = vld [vmem:[%s3 + $0x3d0] sm:$0xff]
      %v1559 = vld [vmem:[%s3 + $0x3d8] sm:$0xff]
      %v1560 = vld [vmem:[%s3 + $0x3e0] sm:$0xff]
      %v1561 = vld [vmem:[%s3 + $0x3e8] sm:$0xff]
      %v1562 = vld [vmem:[%s3 + $0x3f0] sm:$0xff]
      %v1563 = vld [vmem:[%s3 + $0x3f8] sm:$0xff]
      %v1564 = vld [vmem:[%s3 + $0x400] sm:$0xff]
      %v1565 = vld [vmem:[%s3 + $0x408] sm:$0xff]
      %v1566 = vld [vmem:[%s3 + $0x410] sm:$0xff]
      %v1567 = vld [vmem:[%s3 + $0x418] sm:$0xff]
      %v1568 = vld [vmem:[%s3 + $0x420] sm:$0xff]
      %v1569 = vld [vmem:[%s3 + $0x428] sm:$0xff]
      %v1570 = vld [vmem:[%s3 + $0x430] sm:$0xff]
      %v1571 = vld [vmem:[%s3 + $0x438] sm:$0xff]
      %v1572 = vld [vmem:[%s3 + $0x440] sm:$0xff]
      %v1573 = vld [vmem:[%s3 + $0x448] sm:$0xff]
      %v1574 = vld [vmem:[%s3 + $0x450] sm:$0xff]
      %v1575 = vld [vmem:[%s3 + $0x458] sm:$0xff]
      %v1576 = vld [vmem:[%s3 + $0x460] sm:$0xff]
      %v1577 = vld [vmem:[%s3 + $0x468] sm:$0xff]
      %v1578 = vld [vmem:[%s3 + $0x470] sm:$0xff]
      %v1579 = vld [vmem:[%s3 + $0x478] sm:$0xff]
      %v1580 = vld [vmem:[%s3 + $0x480] sm:$0xff]
      %v1581 = vld [vmem:[%s3 + $0x488] sm:$0xff]
      %v1582 = vld [vmem:[%s3 + $0x490] sm:$0xff]
      %v1583 = vld [vmem:[%s3 + $0x498] sm:$0xff]
      %v1584 = vld [vmem:[%s3 + $0x4a0] sm:$0xff]
      %v1585 = vld [vmem:[%s3 + $0x4a8] sm:$0xff]
      %v1586 = vld [vmem:[%s3 + $0x4b0] sm:$0xff]
      %v1587 = vld [vmem:[%s3 + $0x4b8] sm:$0xff]
      %v1588 = vld [vmem:[%s3 + $0x4c0] sm:$0xff]
      %v1589 = vld [vmem:[%s3 + $0x4c8] sm:$0xff]
      %v1590 = vld [vmem:[%s3 + $0x4d0] sm:$0xff]
      %v1591 = vld [vmem:[%s3 + $0x4d8] sm:$0xff]
      %v1592 = vld [vmem:[%s3 + $0x4e0] sm:$0xff]
      %v1593 = vld [vmem:[%s3 + $0x4e8] sm:$0xff]
      %v1594 = vld [vmem:[%s3 + $0x4f0] sm:$0xff]
      %v1595 = vld [vmem:[%s3 + $0x4f8] sm:$0xff]
      %v1596 = vld [vmem:[%s3 + $0x500] sm:$0xff]
      %v1597 = vld [vmem:[%s3 + $0x508] sm:$0xff]
      %v1598 = vld [vmem:[%s3 + $0x510] sm:$0xff]
      %v1599 = vld [vmem:[%s3 + $0x518] sm:$0xff]
      %v1600 = vld [vmem:[%s3 + $0x520] sm:$0xff]
      %v1601 = vld [vmem:[%s3 + $0x528] sm:$0xff]
      %v1602 = vld [vmem:[%s3 + $0x530] sm:$0xff]
      %v1603 = vld [vmem:[%s3 + $0x538] sm:$0xff]
      %v1604 = vld [vmem:[%s3 + $0x540] sm:$0xff]
      %v1605 = vld [vmem:[%s3 + $0x548] sm:$0xff]
      %v1606 = vld [vmem:[%s3 + $0x550] sm:$0xff]
      %v1607 = vld [vmem:[%s3 + $0x558] sm:$0xff]
      %v1608 = vld [vmem:[%s3 + $0x560] sm:$0xff]
      %v1609 = vld [vmem:[%s3 + $0x568] sm:$0xff]
      %v1610 = vld [vmem:[%s3 + $0x570] sm:$0xff]
      %v1611 = vld [vmem:[%s3 + $0x578] sm:$0xff]
      %v1612 = vld [vmem:[%s3 + $0x580] sm:$0xff]
      %v1613 = vld [vmem:[%s3 + $0x588] sm:$0xff]
      %v1614 = vld [vmem:[%s3 + $0x590] sm:$0xff]
      %v1615 = vld [vmem:[%s3 + $0x598] sm:$0xff]
      %v1616 = vld [vmem:[%s3 + $0x5a0] sm:$0xff]
      %v1617 = vld [vmem:[%s3 + $0x5a8] sm:$0xff]
      %v1618 = vld [vmem:[%s3 + $0x5b0] sm:$0xff]
      %v1619 = vld [vmem:[%s3 + $0x5b8] sm:$0xff]
      %v1620 = vld [vmem:[%s3 + $0x5c0] sm:$0xff]
      %v1621 = vld [vmem:[%s3 + $0x5c8] sm:$0xff]
      %v1622 = vld [vmem:[%s3 + $0x5d0] sm:$0xff]
      %v1623 = vld [vmem:[%s3 + $0x5d8] sm:$0xff]
      %v1624 = vld [vmem:[%s3 + $0x5e0] sm:$0xff]
      %v1625 = vld [vmem:[%s3 + $0x5e8] sm:$0xff]
      %v1626 = vld [vmem:[%s3 + $0x5f0] sm:$0xff]
      %v1627 = vld [vmem:[%s3 + $0x5f8] sm:$0xff]
      %v1628 = vld [vmem:[%s3 + $0x600] sm:$0xff]
      %v1629 = vld [vmem:[%s3 + $0x608] sm:$0xff]
      %v1630 = vld [vmem:[%s3 + $0x610] sm:$0xff]
      %v1631 = vld [vmem:[%s3 + $0x618] sm:$0xff]
      %v1632 = vld [vmem:[%s3 + $0x620] sm:$0xff]
      %v1633 = vld [vmem:[%s3 + $0x628] sm:$0xff]
      %v1634 = vld [vmem:[%s3 + $0x630] sm:$0xff]
      %v1635 = vld [vmem:[%s3 + $0x638] sm:$0xff]
      %v1636 = vld [vmem:[%s3 + $0x640] sm:$0xff]
      %v1637 = vld [vmem:[%s3 + $0x648] sm:$0xff]
      %v1638 = vld [vmem:[%s3 + $0x650] sm:$0xff]
      %v1639 = vld [vmem:[%s3 + $0x658] sm:$0xff]
      %v1640 = vld [vmem:[%s3 + $0x660] sm:$0xff]
      %v1641 = vld [vmem:[%s3 + $0x668] sm:$0xff]
      %v1642 = vld [vmem:[%s3 + $0x670] sm:$0xff]
      %v1643 = vld [vmem:[%s3 + $0x678] sm:$0xff]
      %v1644 = vld [vmem:[%s3 + $0x680] sm:$0xff]
      %v1645 = vld [vmem:[%s3 + $0x688] sm:$0xff]
      %v1646 = vld [vmem:[%s3 + $0x690] sm:$0xff]
      %v1647 = vld [vmem:[%s3 + $0x698] sm:$0xff]
      %v1648 = vld [vmem:[%s3 + $0x6a0] sm:$0xff]
      %v1649 = vld [vmem:[%s3 + $0x6a8] sm:$0xff]
      %v1650 = vld [vmem:[%s3 + $0x6b0] sm:$0xff]
      %v1651 = vld [vmem:[%s3 + $0x6b8] sm:$0xff]
      %v1652 = vld [vmem:[%s3 + $0x6c0] sm:$0xff]
      %v1653 = vld [vmem:[%s3 + $0x6c8] sm:$0xff]
      %v1654 = vld [vmem:[%s3 + $0x6d0] sm:$0xff]
      %v1655 = vld [vmem:[%s3 + $0x6d8] sm:$0xff]
      %v1656 = vld [vmem:[%s3 + $0x6e0] sm:$0xff]
      %v1657 = vld [vmem:[%s3 + $0x6e8] sm:$0xff]
      %v1658 = vld [vmem:[%s3 + $0x6f0] sm:$0xff]
      %v1659 = vld [vmem:[%s3 + $0x6f8] sm:$0xff]
      %v1660 = vld [vmem:[%s3 + $0x700] sm:$0xff]
      %v1661 = vld [vmem:[%s3 + $0x708] sm:$0xff]
      %v1662 = vld [vmem:[%s3 + $0x710] sm:$0xff]
      %v1663 = vld [vmem:[%s3 + $0x718] sm:$0xff]
      %v1664 = vld [vmem:[%s3 + $0x720] sm:$0xff]
      %v1665 = vld [vmem:[%s3 + $0x728] sm:$0xff]
      %v1666 = vld [vmem:[%s3 + $0x730] sm:$0xff]
      %v1667 = vld [vmem:[%s3 + $0x738] sm:$0xff]
      %v1668 = vld [vmem:[%s3 + $0x740] sm:$0xff]
      %v1669 = vld [vmem:[%s3 + $0x748] sm:$0xff]
      %v1670 = vld [vmem:[%s3 + $0x750] sm:$0xff]
      %v1671 = vld [vmem:[%s3 + $0x758] sm:$0xff]
      %v1672 = vld [vmem:[%s3 + $0x760] sm:$0xff]
      %v1673 = vld [vmem:[%s3 + $0x768] sm:$0xff]
      %v1674 = vld [vmem:[%s3 + $0x770] sm:$0xff]
      %v1675 = vld [vmem:[%s3 + $0x778] sm:$0xff]
      %v1676 = vld [vmem:[%s3 + $0x780] sm:$0xff]
      %v1677 = vld [vmem:[%s3 + $0x788] sm:$0xff]
      %v1678 = vld [vmem:[%s3 + $0x790] sm:$0xff]
      %v1679 = vld [vmem:[%s3 + $0x798] sm:$0xff]
      %v1680 = vld [vmem:[%s3 + $0x7a0] sm:$0xff]
      %v1681 = vld [vmem:[%s3 + $0x7a8] sm:$0xff]
      %v1682 = vld [vmem:[%s3 + $0x7b0] sm:$0xff]
      %v1683 = vld [vmem:[%s3 + $0x7b8] sm:$0xff]
      %v1684 = vld [vmem:[%s3 + $0x7c0] sm:$0xff]
      %v1685 = vld [vmem:[%s3 + $0x7c8] sm:$0xff]
      %v1686 = vld [vmem:[%s3 + $0x7d0] sm:$0xff]
      %v1687 = vld [vmem:[%s3 + $0x7d8] sm:$0xff]
      %v1688 = vld [vmem:[%s3 + $0x7e0] sm:$0xff]
      %v1689 = vld [vmem:[%s3 + $0x7e8] sm:$0xff]
      %v1690 = vld [vmem:[%s3 + $0x7f0] sm:$0xff]
      %v1691 = vld [vmem:[%s3 + $0x7f8] sm:$0xff]
      %v1692 = vld [vmem:[%s4] sm:$0xf]
      %v1694 = vperm.slane %v1692, 0
      %v1695 = vperm.slane %v1692, 1
      %v1696 = vperm.slane %v1692, 2
      %v1697 = vperm.slane %v1692, 3
      %1702 = vmatpush.msra.mxu0 %v1496
      %1703 = vmatpush.msra.mxu0 %v1492
      %1704 = vmatpush.msra.mxu0 %v1488
      %1705 = vmatpush.msra.mxu0 %v1484
      %1706 = vmatpush.msra.mxu0 %v1480
      %1707 = vmatpush.msra.mxu0 %v1476
      %1708 = vmatpush.msra.mxu0 %v1472
      %1709 = vmatpush.msra.mxu0 %v1468
      %1710 = vmatpush.msra.mxu0 %v1464
      %1711 = vmatpush.msra.mxu0 %v1460
      %1712 = vmatpush.msra.mxu0 %v1456
      %1713 = vmatpush.msra.mxu0 %v1452
      %1714 = vmatpush.msra.mxu0 %v1448
      %1715 = vmatpush.msra.mxu0 %v1444
      %1716 = vmatpush.msra.mxu0 %v1440
      %1717 = vmatpush.msra.mxu0 %v1436
      %1718 = vmatmul.f32.gmra.mxu0 %v1428
      %v1719 = vpop.f32.mrf.mxu0
      %v1720 = vadd.f32 %v1694, %v1719
      %1721 = vmatmul.f32.gmra.mxu0 %v1432
      %v1722 = vpop.f32.mrf.mxu0
      %v1723 = vadd.f32 %v1694, %v1722
      %1724 = vdwg.mxu0
      %1725 = vmatpush.msra.mxu0 %v1560
      %1726 = vmatpush.msra.mxu0 %v1556
      %1727 = vmatpush.msra.mxu0 %v1552
      %1728 = vmatpush.msra.mxu0 %v1548
      %1729 = vmatpush.msra.mxu0 %v1544
      %1730 = vmatpush.msra.mxu0 %v1540
      %1731 = vmatpush.msra.mxu0 %v1536
      %1732 = vmatpush.msra.mxu0 %v1532
      %1733 = vmatpush.msra.mxu0 %v1528
      %1734 = vmatpush.msra.mxu0 %v1524
      %1735 = vmatpush.msra.mxu0 %v1520
      %1736 = vmatpush.msra.mxu0 %v1516
      %1737 = vmatpush.msra.mxu0 %v1512
      %1738 = vmatpush.msra.mxu0 %v1508
      %1739 = vmatpush.msra.mxu0 %v1504
      %1740 = vmatpush.msra.mxu0 %v1500
      %1741 = vmatmul.f32.gmra.mxu0 %v1429
      %v1742 = vpop.f32.mrf.mxu0
      %v1743 = vadd.f32 %v1720, %v1742
      %1744 = vmatmul.f32.gmra.mxu0 %v1433
      %v1745 = vpop.f32.mrf.mxu0
      %v1746 = vadd.f32 %v1723, %v1745
      %1747 = vdwg.mxu0
      %1748 = vmatpush.msra.mxu0 %v1624
      %1749 = vmatpush.msra.mxu0 %v1620
      %1750 = vmatpush.msra.mxu0 %v1616
      %1751 = vmatpush.msra.mxu0 %v1612
      %1752 = vmatpush.msra.mxu0 %v1608
      %1753 = vmatpush.msra.mxu0 %v1604
      %1754 = vmatpush.msra.mxu0 %v1600
      %1755 = vmatpush.msra.mxu0 %v1596
      %1756 = vmatpush.msra.mxu0 %v1592
      %1757 = vmatpush.msra.mxu0 %v1588
      %1758 = vmatpush.msra.mxu0 %v1584
      %1759 = vmatpush.msra.mxu0 %v1580
      %1760 = vmatpush.msra.mxu0 %v1576
      %1761 = vmatpush.msra.mxu0 %v1572
      %1762 = vmatpush.msra.mxu0 %v1568
      %1763 = vmatpush.msra.mxu0 %v1564
      %1764 = vmatmul.f32.gmra.mxu0 %v1430
      %v1765 = vpop.f32.mrf.mxu0
      %v1766 = vadd.f32 %v1743, %v1765
      %1767 = vmatmul.f32.gmra.mxu0 %v1434
      %v1768 = vpop.f32.mrf.mxu0
      %v1769 = vadd.f32 %v1746, %v1768
      %1770 = vdwg.mxu0
      %1771 = vmatpush.msra.mxu0 %v1688
      %1772 = vmatpush.msra.mxu0 %v1684
      %1773 = vmatpush.msra.mxu0 %v1680
      %1774 = vmatpush.msra.mxu0 %v1676
      %1775 = vmatpush.msra.mxu0 %v1672
      %1776 = vmatpush.msra.mxu0 %v1668
      %1777 = vmatpush.msra.mxu0 %v1664
      %1778 = vmatpush.msra.mxu0 %v1660
      %1779 = vmatpush.msra.mxu0 %v1656
      %1780 = vmatpush.msra.mxu0 %v1652
      %1781 = vmatpush.msra.mxu0 %v1648
      %1782 = vmatpush.msra.mxu0 %v1644
      %1783 = vmatpush.msra.mxu0 %v1640
      %1784 = vmatpush.msra.mxu0 %v1636
      %1785 = vmatpush.msra.mxu0 %v1632
      %1786 = vmatpush.msra.mxu0 %v1628
      %1787 = vmatmul.f32.gmra.mxu0 %v1431
      %v1788 = vpop.f32.mrf.mxu0
      %v1789 = vadd.f32 %v1766, %v1788
      %1790 = vmatmul.f32.gmra.mxu0 %v1435
      %v1791 = vpop.f32.mrf.mxu0
      %v1792 = vadd.f32 %v1769, %v1791
      %1793 = vdwg.mxu0
      %1794 = vmatpush.msra.mxu0 %v1497
      %1795 = vmatpush.msra.mxu0 %v1493
      %1796 = vmatpush.msra.mxu0 %v1489
      %1797 = vmatpush.msra.mxu0 %v1485
      %1798 = vmatpush.msra.mxu0 %v1481
      %1799 = vmatpush.msra.mxu0 %v1477
      %1800 = vmatpush.msra.mxu0 %v1473
      %1801 = vmatpush.msra.mxu0 %v1469
      %1802 = vmatpush.msra.mxu0 %v1465
      %1803 = vmatpush.msra.mxu0 %v1461
      %1804 = vmatpush.msra.mxu0 %v1457
      %1805 = vmatpush.msra.mxu0 %v1453
      %1806 = vmatpush.msra.mxu0 %v1449
      %1807 = vmatpush.msra.mxu0 %v1445
      %1808 = vmatpush.msra.mxu0 %v1441
      %1809 = vmatpush.msra.mxu0 %v1437
      %1810 = vmatmul.f32.gmra.mxu0 %v1428
      %v1811 = vpop.f32.mrf.mxu0
      %v1812 = vadd.f32 %v1695, %v1811
      %1813 = vmatmul.f32.gmra.mxu0 %v1432
      %v1814 = vpop.f32.mrf.mxu0
      %v1815 = vadd.f32 %v1695, %v1814
      %1816 = vdwg.mxu0
      %1817 = vmatpush.msra.mxu0 %v1561
      %1818 = vmatpush.msra.mxu0 %v1557
      %1819 = vmatpush.msra.mxu0 %v1553
      %1820 = vmatpush.msra.mxu0 %v1549
      %1821 = vmatpush.msra.mxu0 %v1545
      %1822 = vmatpush.msra.mxu0 %v1541
      %1823 = vmatpush.msra.mxu0 %v1537
      %1824 = vmatpush.msra.mxu0 %v1533
      %1825 = vmatpush.msra.mxu0 %v1529
      %1826 = vmatpush.msra.mxu0 %v1525
      %1827 = vmatpush.msra.mxu0 %v1521
      %1828 = vmatpush.msra.mxu0 %v1517
      %1829 = vmatpush.msra.mxu0 %v1513
      %1830 = vmatpush.msra.mxu0 %v1509
      %1831 = vmatpush.msra.mxu0 %v1505
      %1832 = vmatpush.msra.mxu0 %v1501
      %1833 = vmatmul.f32.gmra.mxu0 %v1429
      %v1834 = vpop.f32.mrf.mxu0
      %v1835 = vadd.f32 %v1812, %v1834
      %1836 = vmatmul.f32.gmra.mxu0 %v1433
      %v1837 = vpop.f32.mrf.mxu0
      %v1838 = vadd.f32 %v1815, %v1837
      %1839 = vdwg.mxu0
      %1840 = vmatpush.msra.mxu0 %v1625
      %1841 = vmatpush.msra.mxu0 %v1621
      %1842 = vmatpush.msra.mxu0 %v1617
      %1843 = vmatpush.msra.mxu0 %v1613
      %1844 = vmatpush.msra.mxu0 %v1609
      %1845 = vmatpush.msra.mxu0 %v1605
      %1846 = vmatpush.msra.mxu0 %v1601
      %1847 = vmatpush.msra.mxu0 %v1597
      %1848 = vmatpush.msra.mxu0 %v1593
      %1849 = vmatpush.msra.mxu0 %v1589
      %1850 = vmatpush.msra.mxu0 %v1585
      %1851 = vmatpush.msra.mxu0 %v1581
      %1852 = vmatpush.msra.mxu0 %v1577
      %1853 = vmatpush.msra.mxu0 %v1573
      %1854 = vmatpush.msra.mxu0 %v1569
      %1855 = vmatpush.msra.mxu0 %v1565
      %1856 = vmatmul.f32.gmra.mxu0 %v1430
      %v1857 = vpop.f32.mrf.mxu0
      %v1858 = vadd.f32 %v1835, %v1857
      %1859 = vmatmul.f32.gmra.mxu0 %v1434
      %v1860 = vpop.f32.mrf.mxu0
      %v1861 = vadd.f32 %v1838, %v1860
      %1862 = vdwg.mxu0
      %1863 = vmatpush.msra.mxu0 %v1689
      %1864 = vmatpush.msra.mxu0 %v1685
      %1865 = vmatpush.msra.mxu0 %v1681
      %1866 = vmatpush.msra.mxu0 %v1677
      %1867 = vmatpush.msra.mxu0 %v1673
      %1868 = vmatpush.msra.mxu0 %v1669
      %1869 = vmatpush.msra.mxu0 %v1665
      %1870 = vmatpush.msra.mxu0 %v1661
      %1871 = vmatpush.msra.mxu0 %v1657
      %1872 = vmatpush.msra.mxu0 %v1653
      %1873 = vmatpush.msra.mxu0 %v1649
      %1874 = vmatpush.msra.mxu0 %v1645
      %1875 = vmatpush.msra.mxu0 %v1641
      %1876 = vmatpush.msra.mxu0 %v1637
      %1877 = vmatpush.msra.mxu0 %v1633
      %1878 = vmatpush.msra.mxu0 %v1629
      %1879 = vmatmul.f32.gmra.mxu0 %v1431
      %v1880 = vpop.f32.mrf.mxu0
      %v1881 = vadd.f32 %v1858, %v1880
      %1882 = vmatmul.f32.gmra.mxu0 %v1435
      %v1883 = vpop.f32.mrf.mxu0
      %v1884 = vadd.f32 %v1861, %v1883
      %1885 = vdwg.mxu0
      %1886 = vmatpush.msra.mxu0 %v1498
      %1887 = vmatpush.msra.mxu0 %v1494
      %1888 = vmatpush.msra.mxu0 %v1490
      %1889 = vmatpush.msra.mxu0 %v1486
      %1890 = vmatpush.msra.mxu0 %v1482
      %1891 = vmatpush.msra.mxu0 %v1478
      %1892 = vmatpush.msra.mxu0 %v1474
      %1893 = vmatpush.msra.mxu0 %v1470
      %1894 = vmatpush.msra.mxu0 %v1466
      %1895 = vmatpush.msra.mxu0 %v1462
      %1896 = vmatpush.msra.mxu0 %v1458
      %1897 = vmatpush.msra.mxu0 %v1454
      %1898 = vmatpush.msra.mxu0 %v1450
      %1899 = vmatpush.msra.mxu0 %v1446
      %1900 = vmatpush.msra.mxu0 %v1442
      %1901 = vmatpush.msra.mxu0 %v1438
      %1902 = vmatmul.f32.gmra.mxu0 %v1428
      %v1903 = vpop.f32.mrf.mxu0
      %v1904 = vadd.f32 %v1696, %v1903
      %1905 = vmatmul.f32.gmra.mxu0 %v1432
      %v1906 = vpop.f32.mrf.mxu0
      %v1907 = vadd.f32 %v1696, %v1906
      %1908 = vdwg.mxu0
      %1909 = vmatpush.msra.mxu0 %v1562
      %1910 = vmatpush.msra.mxu0 %v1558
      %1911 = vmatpush.msra.mxu0 %v1554
      %1912 = vmatpush.msra.mxu0 %v1550
      %1913 = vmatpush.msra.mxu0 %v1546
      %1914 = vmatpush.msra.mxu0 %v1542
      %1915 = vmatpush.msra.mxu0 %v1538
      %1916 = vmatpush.msra.mxu0 %v1534
      %1917 = vmatpush.msra.mxu0 %v1530
      %1918 = vmatpush.msra.mxu0 %v1526
      %1919 = vmatpush.msra.mxu0 %v1522
      %1920 = vmatpush.msra.mxu0 %v1518
      %1921 = vmatpush.msra.mxu0 %v1514
      %1922 = vmatpush.msra.mxu0 %v1510
      %1923 = vmatpush.msra.mxu0 %v1506
      %1924 = vmatpush.msra.mxu0 %v1502
      %1925 = vmatmul.f32.gmra.mxu0 %v1429
      %v1926 = vpop.f32.mrf.mxu0
      %v1927 = vadd.f32 %v1904, %v1926
      %1928 = vmatmul.f32.gmra.mxu0 %v1433
      %v1929 = vpop.f32.mrf.mxu0
      %v1930 = vadd.f32 %v1907, %v1929
      %1931 = vdwg.mxu0
      %1932 = vmatpush.msra.mxu0 %v1626
      %1933 = vmatpush.msra.mxu0 %v1622
      %1934 = vmatpush.msra.mxu0 %v1618
      %1935 = vmatpush.msra.mxu0 %v1614
      %1936 = vmatpush.msra.mxu0 %v1610
      %1937 = vmatpush.msra.mxu0 %v1606
      %1938 = vmatpush.msra.mxu0 %v1602
      %1939 = vmatpush.msra.mxu0 %v1598
      %1940 = vmatpush.msra.mxu0 %v1594
      %1941 = vmatpush.msra.mxu0 %v1590
      %1942 = vmatpush.msra.mxu0 %v1586
      %1943 = vmatpush.msra.mxu0 %v1582
      %1944 = vmatpush.msra.mxu0 %v1578
      %1945 = vmatpush.msra.mxu0 %v1574
      %1946 = vmatpush.msra.mxu0 %v1570
      %1947 = vmatpush.msra.mxu0 %v1566
      %1948 = vmatmul.f32.gmra.mxu0 %v1430
      %v1949 = vpop.f32.mrf.mxu0
      %v1950 = vadd.f32 %v1927, %v1949
      %1951 = vmatmul.f32.gmra.mxu0 %v1434
      %v1952 = vpop.f32.mrf.mxu0
      %v1953 = vadd.f32 %v1930, %v1952
      %1954 = vdwg.mxu0
      %1955 = vmatpush.msra.mxu0 %v1690
      %1956 = vmatpush.msra.mxu0 %v1686
      %1957 = vmatpush.msra.mxu0 %v1682
      %1958 = vmatpush.msra.mxu0 %v1678
      %1959 = vmatpush.msra.mxu0 %v1674
      %1960 = vmatpush.msra.mxu0 %v1670
      %1961 = vmatpush.msra.mxu0 %v1666
      %1962 = vmatpush.msra.mxu0 %v1662
      %1963 = vmatpush.msra.mxu0 %v1658
      %1964 = vmatpush.msra.mxu0 %v1654
      %1965 = vmatpush.msra.mxu0 %v1650
      %1966 = vmatpush.msra.mxu0 %v1646
      %1967 = vmatpush.msra.mxu0 %v1642
      %1968 = vmatpush.msra.mxu0 %v1638
      %1969 = vmatpush.msra.mxu0 %v1634
      %1970 = vmatpush.msra.mxu0 %v1630
      %1971 = vmatmul.f32.gmra.mxu0 %v1431
      %v1972 = vpop.f32.mrf.mxu0
      %v1973 = vadd.f32 %v1950, %v1972
      %1974 = vmatmul.f32.gmra.mxu0 %v1435
      %v1975 = vpop.f32.mrf.mxu0
      %v1976 = vadd.f32 %v1953, %v1975
      %1977 = vdwg.mxu0
      %1978 = vmatpush.msra.mxu0 %v1499
      %1979 = vmatpush.msra.mxu0 %v1495
      %1980 = vmatpush.msra.mxu0 %v1491
      %1981 = vmatpush.msra.mxu0 %v1487
      %1982 = vmatpush.msra.mxu0 %v1483
      %1983 = vmatpush.msra.mxu0 %v1479
      %1984 = vmatpush.msra.mxu0 %v1475
      %1985 = vmatpush.msra.mxu0 %v1471
      %1986 = vmatpush.msra.mxu0 %v1467
      %1987 = vmatpush.msra.mxu0 %v1463
      %1988 = vmatpush.msra.mxu0 %v1459
      %1989 = vmatpush.msra.mxu0 %v1455
      %1990 = vmatpush.msra.mxu0 %v1451
      %1991 = vmatpush.msra.mxu0 %v1447
      %1992 = vmatpush.msra.mxu0 %v1443
      %1993 = vmatpush.msra.mxu0 %v1439
      %1994 = vmatmul.f32.gmra.mxu0 %v1428
      %v1995 = vpop.f32.mrf.mxu0
      %v1996 = vadd.f32 %v1697, %v1995
      %1997 = vmatmul.f32.gmra.mxu0 %v1432
      %v1998 = vpop.f32.mrf.mxu0
      %v1999 = vadd.f32 %v1697, %v1998
      %2000 = vdwg.mxu0
      %2001 = vmatpush.msra.mxu0 %v1563
      %2002 = vmatpush.msra.mxu0 %v1559
      %2003 = vmatpush.msra.mxu0 %v1555
      %2004 = vmatpush.msra.mxu0 %v1551
      %2005 = vmatpush.msra.mxu0 %v1547
      %2006 = vmatpush.msra.mxu0 %v1543
      %2007 = vmatpush.msra.mxu0 %v1539
      %2008 = vmatpush.msra.mxu0 %v1535
      %2009 = vmatpush.msra.mxu0 %v1531
      %2010 = vmatpush.msra.mxu0 %v1527
      %2011 = vmatpush.msra.mxu0 %v1523
      %2012 = vmatpush.msra.mxu0 %v1519
      %2013 = vmatpush.msra.mxu0 %v1515
      %2014 = vmatpush.msra.mxu0 %v1511
      %2015 = vmatpush.msra.mxu0 %v1507
      %2016 = vmatpush.msra.mxu0 %v1503
      %2017 = vmatmul.f32.gmra.mxu0 %v1429
      %v2018 = vpop.f32.mrf.mxu0
      %v2019 = vadd.f32 %v1996, %v2018
      %2020 = vmatmul.f32.gmra.mxu0 %v1433
      %v2021 = vpop.f32.mrf.mxu0
      %v2022 = vadd.f32 %v1999, %v2021
      %2023 = vdwg.mxu0
      %2024 = vmatpush.msra.mxu0 %v1627
      %2025 = vmatpush.msra.mxu0 %v1623
      %2026 = vmatpush.msra.mxu0 %v1619
      %2027 = vmatpush.msra.mxu0 %v1615
      %2028 = vmatpush.msra.mxu0 %v1611
      %2029 = vmatpush.msra.mxu0 %v1607
      %2030 = vmatpush.msra.mxu0 %v1603
      %2031 = vmatpush.msra.mxu0 %v1599
      %2032 = vmatpush.msra.mxu0 %v1595
      %2033 = vmatpush.msra.mxu0 %v1591
      %2034 = vmatpush.msra.mxu0 %v1587
      %2035 = vmatpush.msra.mxu0 %v1583
      %2036 = vmatpush.msra.mxu0 %v1579
      %2037 = vmatpush.msra.mxu0 %v1575
      %2038 = vmatpush.msra.mxu0 %v1571
      %2039 = vmatpush.msra.mxu0 %v1567
      %2040 = vmatmul.f32.gmra.mxu0 %v1430
      %v2041 = vpop.f32.mrf.mxu0
      %v2042 = vadd.f32 %v2019, %v2041
      %2043 = vmatmul.f32.gmra.mxu0 %v1434
      %v2044 = vpop.f32.mrf.mxu0
      %v2045 = vadd.f32 %v2022, %v2044
      %2046 = vdwg.mxu0
      %2047 = vmatpush.msra.mxu0 %v1691
      %2048 = vmatpush.msra.mxu0 %v1687
      %2049 = vmatpush.msra.mxu0 %v1683
      %2050 = vmatpush.msra.mxu0 %v1679
      %2051 = vmatpush.msra.mxu0 %v1675
      %2052 = vmatpush.msra.mxu0 %v1671
      %2053 = vmatpush.msra.mxu0 %v1667
      %2054 = vmatpush.msra.mxu0 %v1663
      %2055 = vmatpush.msra.mxu0 %v1659
      %2056 = vmatpush.msra.mxu0 %v1655
      %2057 = vmatpush.msra.mxu0 %v1651
      %2058 = vmatpush.msra.mxu0 %v1647
      %2059 = vmatpush.msra.mxu0 %v1643
      %2060 = vmatpush.msra.mxu0 %v1639
      %2061 = vmatpush.msra.mxu0 %v1635
      %2062 = vmatpush.msra.mxu0 %v1631
      %2063 = vmatmul.f32.gmra.mxu0 %v1431
      %v2064 = vpop.f32.mrf.mxu0
      %v2065 = vadd.f32 %v2042, %v2064
      %2066 = vmatmul.f32.gmra.mxu0 %v1435
      %v2067 = vpop.f32.mrf.mxu0
      %v2068 = vadd.f32 %v2045, %v2067
      %2069 = vdwg.mxu0
      %vm2070 = vcmp.gt.f32.partialorder %v1789, 0.0
      %vm2071 = vcmp.gt.f32.partialorder %v1881, 0.0
      %vm2072 = vcmp.gt.f32.partialorder %v1973, 0.0
      %vm2073 = vcmp.gt.f32.partialorder %v2065, 0.0
      %vm2074 = vcmp.gt.f32.partialorder %v1792, 0.0
      %vm2075 = vcmp.gt.f32.partialorder %v1884, 0.0
      %vm2076 = vcmp.gt.f32.partialorder %v1976, 0.0
      %vm2077 = vcmp.gt.f32.partialorder %v2068, 0.0
      %v2078 = vmul.f32 %v1789, 0.01
      %v2079 = vmul.f32 %v1881, 0.01
      %v2080 = vmul.f32 %v1973, 0.01
      %v2081 = vmul.f32 %v2065, 0.01
      %v2082 = vmul.f32 %v1792, 0.01
      %v2083 = vmul.f32 %v1884, 0.01
      %v2084 = vmul.f32 %v1976, 0.01
      %v2085 = vmul.f32 %v2068, 0.01
      %v2086 = vsel %vm2070, %v1789, %v2078
      %v2087 = vsel %vm2071, %v1881, %v2079
      %v2088 = vsel %vm2072, %v1973, %v2080
      %v2089 = vsel %vm2073, %v2065, %v2081
      %v2090 = vsel %vm2074, %v1792, %v2082
      %v2091 = vsel %vm2075, %v1884, %v2083
      %v2092 = vsel %vm2076, %v1976, %v2084
      %v2093 = vsel %vm2077, %v2068, %v2085
      %v2094 = vld [vmem:[%s5] sm:$0x77]
      %v2095 = vld [vmem:[%s5 + $0x8] sm:$0x77]
      %v2096 = vld [vmem:[%s5 + $0x10] sm:$0x77]
      %v2097 = vld [vmem:[%s5 + $0x18] sm:$0x77]
      %v2098 = vld [vmem:[%s5 + $0x20] sm:$0x77]
      %v2099 = vld [vmem:[%s5 + $0x28] sm:$0x77]
      %v2108 = vrot.slane %v2086, 7
      %v2109 = vrot.slane %v2087, 7
      %v2110 = vrot.slane %v2088, 7
      %v2111 = vrot.slane %v2089, 7
      %v2112 = vrot.slane %v2090, 7
      %v2113 = vsel %vm387, %v2108, %v2112
      %v2114 = vrot.slane %v2091, 7
      %v2115 = vsel %vm387, %v2109, %v2114
      %v2116 = vrot.slane %v2092, 7
      %v2117 = vsel %vm387, %v2110, %v2116
      %v2118 = vrot.slane %v2093, 7
      %v2119 = vsel %vm387, %v2111, %v2118
      %2120 = vrot.lane.b32.xlu0 %v2108, 32
      %v2121 = vpop.permute.xlu0 %2120
      %2122 = vrot.lane.b32.xlu0 %v2109, 32
      %v2123 = vpop.permute.xlu0 %2122
      %2124 = vrot.lane.b32.xlu0 %v2110, 32
      %v2125 = vpop.permute.xlu0 %2124
      %2126 = vrot.lane.b32.xlu0 %v2111, 32
      %v2127 = vpop.permute.xlu0 %2126
      %2128 = vrot.lane.b32.xlu0 %v2113, 32
      %v2129 = vpop.permute.xlu0 %2128
      %2130 = vrot.lane.b32.xlu0 %v2115, 32
      %v2131 = vpop.permute.xlu0 %2130
      %2132 = vrot.lane.b32.xlu0 %v2117, 32
      %v2133 = vpop.permute.xlu0 %2132
      %2134 = vrot.lane.b32.xlu0 %v2119, 32
      %v2135 = vpop.permute.xlu0 %2134
      %2136 = vrot.lane.b32.xlu0 %v2112, 32
      %v2137 = vpop.permute.xlu0 %2136
      %2138 = vrot.lane.b32.xlu0 %v2114, 32
      %v2139 = vpop.permute.xlu0 %2138
      %2140 = vrot.lane.b32.xlu0 %v2116, 32
      %v2141 = vpop.permute.xlu0 %2140
      %2142 = vrot.lane.b32.xlu0 %v2118, 32
      %v2143 = vpop.permute.xlu0 %2142
      %v2144 = vsel %vm344, %v2121, %v2123
      %v2145 = vsel %vm344, %v2123, %v2125
      %v2146 = vsel %vm344, %v2125, %v2127
      %v2147 = vsel %vm344, %v2129, %v2131
      %v2148 = vsel %vm344, %v2131, %v2133
      %v2149 = vsel %vm344, %v2133, %v2135
      %v2150 = vsel %vm344, %v2137, %v2139
      %v2151 = vsel %vm344, %v2139, %v2141
      %v2152 = vsel %vm344, %v2141, %v2143
      %2168 = vst.msk [vmem:[#allocation3] sm:$0xfe] %vm448, %v2121
      %2169 = vst [vmem:[#allocation3 + $0x8] sm:$0xfe] %v2144
      %2170 = vst [vmem:[#allocation3 + $0x10] sm:$0xfe] %v2145
      %2171 = vst [vmem:[#allocation3 + $0x18] sm:$0xfe] %v2146
      %2172 = vst.msk [vmem:[#allocation3 + $0x20] sm:$0xfe] %vm342, %v2127
      %2173 = vst.msk [vmem:[#allocation3 + $0x28] sm:$0xff] %vm454, %v2129
      %2174 = vst [vmem:[#allocation3 + $0x30] sm:$0xff] %v2147
      %2175 = vst [vmem:[#allocation3 + $0x38] sm:$0xff] %v2148
      %2176 = vst [vmem:[#allocation3 + $0x40] sm:$0xff] %v2149
      %2177 = vst.msk [vmem:[#allocation3 + $0x48] sm:$0xff] %vm344, %v2135
      %2178 = vst.msk [vmem:[#allocation3 + $0x50] sm:$0x1] %vm460, %v2137
      %2179 = vst [vmem:[#allocation3 + $0x58] sm:$0x1] %v2150
      %2180 = vst [vmem:[#allocation3 + $0x60] sm:$0x1] %v2151
      %2181 = vst [vmem:[#allocation3 + $0x68] sm:$0x1] %v2152
      %2182 = vst.msk [vmem:[#allocation3 + $0x70] sm:$0x1] %vm346, %v2143
      %v2183 = vld [vmem:[#allocation3] sm:$0xff]
      %v2184 = vld [vmem:[#allocation3 + $0x8] sm:$0xff]
      %v2185 = vld [vmem:[#allocation3 + $0x10] sm:$0xff]
      %v2186 = vld [vmem:[#allocation3 + $0x18] sm:$0xff]
      %v2187 = vld [vmem:[#allocation3 + $0x28] sm:$0xff]
      %v2188 = vld [vmem:[#allocation3 + $0x30] sm:$0xff]
      %v2189 = vld [vmem:[#allocation3 + $0x38] sm:$0xff]
      %v2190 = vld [vmem:[#allocation3 + $0x40] sm:$0xff]
      %v2193 = vperm.slane %v2094, 0
      %v2194 = vperm.slane %v2094, 4
      %v2195 = vperm.slane %v2095, 0
      %v2196 = vperm.slane %v2095, 4
      %v2201 = vperm.slane %v2193, 0
      %v2202 = vperm.slane %v2194, 0
      %v2203 = vperm.slane %v2195, 0
      %v2204 = vperm.slane %v2196, 0
      %v2205 = vmul.f32 %v2183, %v2201
      %v2206 = vmul.f32 %v2184, %v2202
      %v2207 = vmul.f32 %v2185, %v2203
      %v2208 = vmul.f32 %v2186, %v2204
      %v2209 = vmul.f32 %v2187, %v2201
      %v2210 = vmul.f32 %v2188, %v2202
      %v2211 = vmul.f32 %v2189, %v2203
      %v2212 = vmul.f32 %v2190, %v2204
      %v2213 = vadd.f32 %v2205, 0.0
      %v2214 = vadd.f32 %v2206, 0.0
      %v2215 = vadd.f32 %v2207, 0.0
      %v2216 = vadd.f32 %v2208, 0.0
      %v2217 = vadd.f32 %v2209, 0.0
      %v2218 = vadd.f32 %v2210, 0.0
      %v2219 = vadd.f32 %v2211, 0.0
      %v2220 = vadd.f32 %v2212, 0.0
      %v2221 = vld [vmem:[#allocation3 + $0x20] sm:$0xff]
      %v2222 = vld [vmem:[#allocation3 + $0x48] sm:$0xff]
      %v2223 = vperm.slane %v2094, 1
      %v2224 = vperm.slane %v2094, 5
      %v2225 = vperm.slane %v2095, 1
      %v2226 = vperm.slane %v2095, 5
      %v2231 = vperm.slane %v2223, 1
      %v2232 = vperm.slane %v2224, 1
      %v2233 = vperm.slane %v2225, 1
      %v2234 = vperm.slane %v2226, 1
      %2239 = vrot.lane.b32.xlu0 %v2231, 32
      %v2240 = vpop.permute.xlu0 %2239
      %2241 = vrot.lane.b32.xlu0 %v2232, 32
      %v2242 = vpop.permute.xlu0 %2241
      %2243 = vrot.lane.b32.xlu0 %v2233, 32
      %v2244 = vpop.permute.xlu0 %2243
      %2245 = vrot.lane.b32.xlu0 %v2234, 32
      %v2246 = vpop.permute.xlu0 %2245
      %v2247 = vsel %vm344, %v2240, %v2242
      %v2248 = vsel %vm344, %v2242, %v2244
      %v2249 = vsel %vm344, %v2244, %v2246
      %v2255 = vmul.f32 %v2183, %v2240
      %v2256 = vmul.f32 %v2184, %v2247
      %v2257 = vmul.f32 %v2185, %v2248
      %v2258 = vmul.f32 %v2186, %v2249
      %v2259 = vmul.f32 %v2221, %v2246
      %v2260 = vmul.f32 %v2187, %v2240
      %v2261 = vmul.f32 %v2188, %v2247
      %v2262 = vmul.f32 %v2189, %v2248
      %v2263 = vmul.f32 %v2190, %v2249
      %v2264 = vmul.f32 %v2222, %v2246
      %2275 = vrot.lane.b32.xlu0 %v2255, 96
      %v2276 = vpop.permute.xlu0 %2275
      %2277 = vrot.lane.b32.xlu0 %v2256, 96
      %v2278 = vpop.permute.xlu0 %2277
      %2279 = vrot.lane.b32.xlu0 %v2257, 96
      %v2280 = vpop.permute.xlu0 %2279
      %2281 = vrot.lane.b32.xlu0 %v2258, 96
      %v2282 = vpop.permute.xlu0 %2281
      %2283 = vrot.lane.b32.xlu0 %v2259, 96
      %v2284 = vpop.permute.xlu0 %2283
      %2285 = vrot.lane.b32.xlu0 %v2260, 96
      %v2286 = vpop.permute.xlu0 %2285
      %2287 = vrot.lane.b32.xlu0 %v2261, 96
      %v2288 = vpop.permute.xlu0 %2287
      %2289 = vrot.lane.b32.xlu0 %v2262, 96
      %v2290 = vpop.permute.xlu0 %2289
      %2291 = vrot.lane.b32.xlu0 %v2263, 96
      %v2292 = vpop.permute.xlu0 %2291
      %2293 = vrot.lane.b32.xlu0 %v2264, 96
      %v2294 = vpop.permute.xlu0 %2293
      %v2295 = vsel %vm578, %v2276, %v2278
      %v2296 = vsel %vm578, %v2278, %v2280
      %v2297 = vsel %vm578, %v2280, %v2282
      %v2298 = vsel %vm578, %v2282, %v2284
      %v2299 = vsel %vm578, %v2286, %v2288
      %v2300 = vsel %vm578, %v2288, %v2290
      %v2301 = vsel %vm578, %v2290, %v2292
      %v2302 = vsel %vm578, %v2292, %v2294
      %v2311 = vadd.f32 %v2213, %v2295
      %v2312 = vadd.f32 %v2214, %v2296
      %v2313 = vadd.f32 %v2215, %v2297
      %v2314 = vadd.f32 %v2216, %v2298
      %v2315 = vadd.f32 %v2217, %v2299
      %v2316 = vadd.f32 %v2218, %v2300
      %v2317 = vadd.f32 %v2219, %v2301
      %v2318 = vadd.f32 %v2220, %v2302
      %v2319 = vperm.slane %v2094, 2
      %v2320 = vperm.slane %v2094, 6
      %v2321 = vperm.slane %v2095, 2
      %v2322 = vperm.slane %v2095, 6
      %v2327 = vperm.slane %v2319, 2
      %v2328 = vperm.slane %v2320, 2
      %v2329 = vperm.slane %v2321, 2
      %v2330 = vperm.slane %v2322, 2
      %2335 = vrot.lane.b32.xlu0 %v2327, 64
      %v2336 = vpop.permute.xlu0 %2335
      %2337 = vrot.lane.b32.xlu0 %v2328, 64
      %v2338 = vpop.permute.xlu0 %2337
      %2339 = vrot.lane.b32.xlu0 %v2329, 64
      %v2340 = vpop.permute.xlu0 %2339
      %2341 = vrot.lane.b32.xlu0 %v2330, 64
      %v2342 = vpop.permute.xlu0 %2341
      %v2343 = vsel %vm627, %v2336, %v2338
      %v2344 = vsel %vm627, %v2338, %v2340
      %v2345 = vsel %vm627, %v2340, %v2342
      %v2351 = vmul.f32 %v2183, %v2336
      %v2352 = vmul.f32 %v2184, %v2343
      %v2353 = vmul.f32 %v2185, %v2344
      %v2354 = vmul.f32 %v2186, %v2345
      %v2355 = vmul.f32 %v2221, %v2342
      %v2356 = vmul.f32 %v2187, %v2336
      %v2357 = vmul.f32 %v2188, %v2343
      %v2358 = vmul.f32 %v2189, %v2344
      %v2359 = vmul.f32 %v2190, %v2345
      %v2360 = vmul.f32 %v2222, %v2342
      %2371 = vrot.lane.b32.xlu0 %v2351, 64
      %v2372 = vpop.permute.xlu0 %2371
      %2373 = vrot.lane.b32.xlu0 %v2352, 64
      %v2374 = vpop.permute.xlu0 %2373
      %2375 = vrot.lane.b32.xlu0 %v2353, 64
      %v2376 = vpop.permute.xlu0 %2375
      %2377 = vrot.lane.b32.xlu0 %v2354, 64
      %v2378 = vpop.permute.xlu0 %2377
      %2379 = vrot.lane.b32.xlu0 %v2355, 64
      %v2380 = vpop.permute.xlu0 %2379
      %2381 = vrot.lane.b32.xlu0 %v2356, 64
      %v2382 = vpop.permute.xlu0 %2381
      %2383 = vrot.lane.b32.xlu0 %v2357, 64
      %v2384 = vpop.permute.xlu0 %2383
      %2385 = vrot.lane.b32.xlu0 %v2358, 64
      %v2386 = vpop.permute.xlu0 %2385
      %2387 = vrot.lane.b32.xlu0 %v2359, 64
      %v2388 = vpop.permute.xlu0 %2387
      %2389 = vrot.lane.b32.xlu0 %v2360, 64
      %v2390 = vpop.permute.xlu0 %2389
      %v2391 = vsel %vm627, %v2372, %v2374
      %v2392 = vsel %vm627, %v2374, %v2376
      %v2393 = vsel %vm627, %v2376, %v2378
      %v2394 = vsel %vm627, %v2378, %v2380
      %v2395 = vsel %vm627, %v2382, %v2384
      %v2396 = vsel %vm627, %v2384, %v2386
      %v2397 = vsel %vm627, %v2386, %v2388
      %v2398 = vsel %vm627, %v2388, %v2390
      %v2407 = vadd.f32 %v2311, %v2391
      %v2408 = vadd.f32 %v2312, %v2392
      %v2409 = vadd.f32 %v2313, %v2393
      %v2410 = vadd.f32 %v2314, %v2394
      %v2411 = vadd.f32 %v2315, %v2395
      %v2412 = vadd.f32 %v2316, %v2396
      %v2413 = vadd.f32 %v2317, %v2397
      %v2414 = vadd.f32 %v2318, %v2398
      %v2415 = vld [vmem:[#allocation3] sm:$0xfe]
      %v2416 = vld [vmem:[#allocation3 + $0x8] sm:$0xfe]
      %v2417 = vld [vmem:[#allocation3 + $0x10] sm:$0xfe]
      %v2418 = vld [vmem:[#allocation3 + $0x18] sm:$0xfe]
      %v2419 = vld [vmem:[#allocation3 + $0x50] sm:$0x1]
      %v2420 = vld [vmem:[#allocation3 + $0x58] sm:$0x1]
      %v2421 = vld [vmem:[#allocation3 + $0x60] sm:$0x1]
      %v2422 = vld [vmem:[#allocation3 + $0x68] sm:$0x1]
      %v2425 = vperm.slane %v2096, 0
      %v2426 = vperm.slane %v2096, 4
      %v2427 = vperm.slane %v2097, 0
      %v2428 = vperm.slane %v2097, 4
      %v2433 = vperm.slane %v2425, 0
      %v2434 = vperm.slane %v2426, 0
      %v2435 = vperm.slane %v2427, 0
      %v2436 = vperm.slane %v2428, 0
      %v2437 = vmul.f32 %v2415, %v2433
      %v2438 = vmul.f32 %v2416, %v2434
      %v2439 = vmul.f32 %v2417, %v2435
      %v2440 = vmul.f32 %v2418, %v2436
      %v2441 = vmul.f32 %v2187, %v2433
      %v2442 = vmul.f32 %v2188, %v2434
      %v2443 = vmul.f32 %v2189, %v2435
      %v2444 = vmul.f32 %v2190, %v2436
      %v2445 = vmul.f32 %v2419, %v2433
      %v2446 = vmul.f32 %v2420, %v2434
      %v2447 = vmul.f32 %v2421, %v2435
      %v2448 = vmul.f32 %v2422, %v2436
      %v2461 = vrot.slane %v2437, 1
      %v2462 = vrot.slane %v2441, 1
      %v2463 = vsel %vm746, %v2461, %v2462
      %v2464 = vrot.slane %v2438, 1
      %v2465 = vrot.slane %v2442, 1
      %v2466 = vsel %vm746, %v2464, %v2465
      %v2467 = vrot.slane %v2439, 1
      %v2468 = vrot.slane %v2443, 1
      %v2469 = vsel %vm746, %v2467, %v2468
      %v2470 = vrot.slane %v2440, 1
      %v2471 = vrot.slane %v2444, 1
      %v2472 = vsel %vm746, %v2470, %v2471
      %v2473 = vrot.slane %v2445, 1
      %v2474 = vsel %vm746, %v2462, %v2473
      %v2475 = vrot.slane %v2446, 1
      %v2476 = vsel %vm746, %v2465, %v2475
      %v2477 = vrot.slane %v2447, 1
      %v2478 = vsel %vm746, %v2468, %v2477
      %v2479 = vrot.slane %v2448, 1
      %v2480 = vsel %vm746, %v2471, %v2479
      %v2489 = vadd.f32 %v2407, %v2463
      %v2490 = vadd.f32 %v2408, %v2466
      %v2491 = vadd.f32 %v2409, %v2469
      %v2492 = vadd.f32 %v2410, %v2472
      %v2493 = vadd.f32 %v2411, %v2474
      %v2494 = vadd.f32 %v2412, %v2476
      %v2495 = vadd.f32 %v2413, %v2478
      %v2496 = vadd.f32 %v2414, %v2480
      %v2497 = vld [vmem:[#allocation3 + $0x20] sm:$0xfe]
      %v2498 = vld [vmem:[#allocation3 + $0x70] sm:$0x1]
      %v2499 = vperm.slane %v2096, 1
      %v2500 = vperm.slane %v2096, 5
      %v2501 = vperm.slane %v2097, 1
      %v2502 = vperm.slane %v2097, 5
      %v2507 = vperm.slane %v2499, 1
      %v2508 = vperm.slane %v2500, 1
      %v2509 = vperm.slane %v2501, 1
      %v2510 = vperm.slane %v2502, 1
      %2515 = vrot.lane.b32.xlu0 %v2507, 32
      %v2516 = vpop.permute.xlu0 %2515
      %2517 = vrot.lane.b32.xlu0 %v2508, 32
      %v2518 = vpop.permute.xlu0 %2517
      %2519 = vrot.lane.b32.xlu0 %v2509, 32
      %v2520 = vpop.permute.xlu0 %2519
      %2521 = vrot.lane.b32.xlu0 %v2510, 32
      %v2522 = vpop.permute.xlu0 %2521
      %v2523 = vsel %vm344, %v2516, %v2518
      %v2524 = vsel %vm344, %v2518, %v2520
      %v2525 = vsel %vm344, %v2520, %v2522
      %v2531 = vmul.f32 %v2415, %v2516
      %v2532 = vmul.f32 %v2416, %v2523
      %v2533 = vmul.f32 %v2417, %v2524
      %v2534 = vmul.f32 %v2418, %v2525
      %v2535 = vmul.f32 %v2497, %v2522
      %v2536 = vmul.f32 %v2187, %v2516
      %v2537 = vmul.f32 %v2188, %v2523
      %v2538 = vmul.f32 %v2189, %v2524
      %v2539 = vmul.f32 %v2190, %v2525
      %v2540 = vmul.f32 %v2222, %v2522
      %v2541 = vmul.f32 %v2419, %v2516
      %v2542 = vmul.f32 %v2420, %v2523
      %v2543 = vmul.f32 %v2421, %v2524
      %v2544 = vmul.f32 %v2422, %v2525
      %v2545 = vmul.f32 %v2498, %v2522
      %v2561 = vrot.slane %v2531, 1
      %v2562 = vrot.slane %v2536, 1
      %v2563 = vsel %vm746, %v2561, %v2562
      %v2564 = vrot.slane %v2532, 1
      %v2565 = vrot.slane %v2537, 1
      %v2566 = vsel %vm746, %v2564, %v2565
      %v2567 = vrot.slane %v2533, 1
      %v2568 = vrot.slane %v2538, 1
      %v2569 = vsel %vm746, %v2567, %v2568
      %v2570 = vrot.slane %v2534, 1
      %v2571 = vrot.slane %v2539, 1
      %v2572 = vsel %vm746, %v2570, %v2571
      %v2573 = vrot.slane %v2535, 1
      %v2574 = vrot.slane %v2540, 1
      %v2575 = vsel %vm746, %v2573, %v2574
      %v2576 = vrot.slane %v2541, 1
      %v2577 = vsel %vm746, %v2562, %v2576
      %v2578 = vrot.slane %v2542, 1
      %v2579 = vsel %vm746, %v2565, %v2578
      %v2580 = vrot.slane %v2543, 1
      %v2581 = vsel %vm746, %v2568, %v2580
      %v2582 = vrot.slane %v2544, 1
      %v2583 = vsel %vm746, %v2571, %v2582
      %v2584 = vrot.slane %v2545, 1
      %v2585 = vsel %vm746, %v2574, %v2584
      %2586 = vrot.lane.b32.xlu0 %v2563, 96
      %v2587 = vpop.permute.xlu0 %2586
      %2588 = vrot.lane.b32.xlu0 %v2566, 96
      %v2589 = vpop.permute.xlu0 %2588
      %2590 = vrot.lane.b32.xlu0 %v2569, 96
      %v2591 = vpop.permute.xlu0 %2590
      %2592 = vrot.lane.b32.xlu0 %v2572, 96
      %v2593 = vpop.permute.xlu0 %2592
      %2594 = vrot.lane.b32.xlu0 %v2575, 96
      %v2595 = vpop.permute.xlu0 %2594
      %2596 = vrot.lane.b32.xlu0 %v2577, 96
      %v2597 = vpop.permute.xlu0 %2596
      %2598 = vrot.lane.b32.xlu0 %v2579, 96
      %v2599 = vpop.permute.xlu0 %2598
      %2600 = vrot.lane.b32.xlu0 %v2581, 96
      %v2601 = vpop.permute.xlu0 %2600
      %2602 = vrot.lane.b32.xlu0 %v2583, 96
      %v2603 = vpop.permute.xlu0 %2602
      %2604 = vrot.lane.b32.xlu0 %v2585, 96
      %v2605 = vpop.permute.xlu0 %2604
      %v2606 = vsel %vm578, %v2587, %v2589
      %v2607 = vsel %vm578, %v2589, %v2591
      %v2608 = vsel %vm578, %v2591, %v2593
      %v2609 = vsel %vm578, %v2593, %v2595
      %v2610 = vsel %vm578, %v2597, %v2599
      %v2611 = vsel %vm578, %v2599, %v2601
      %v2612 = vsel %vm578, %v2601, %v2603
      %v2613 = vsel %vm578, %v2603, %v2605
      %v2622 = vadd.f32 %v2489, %v2606
      %v2623 = vadd.f32 %v2490, %v2607
      %v2624 = vadd.f32 %v2491, %v2608
      %v2625 = vadd.f32 %v2492, %v2609
      %v2626 = vadd.f32 %v2493, %v2610
      %v2627 = vadd.f32 %v2494, %v2611
      %v2628 = vadd.f32 %v2495, %v2612
      %v2629 = vadd.f32 %v2496, %v2613
      %v2630 = vperm.slane %v2096, 2
      %v2631 = vperm.slane %v2096, 6
      %v2632 = vperm.slane %v2097, 2
      %v2633 = vperm.slane %v2097, 6
      %v2638 = vperm.slane %v2630, 2
      %v2639 = vperm.slane %v2631, 2
      %v2640 = vperm.slane %v2632, 2
      %v2641 = vperm.slane %v2633, 2
      %2646 = vrot.lane.b32.xlu0 %v2638, 64
      %v2647 = vpop.permute.xlu0 %2646
      %2648 = vrot.lane.b32.xlu0 %v2639, 64
      %v2649 = vpop.permute.xlu0 %2648
      %2650 = vrot.lane.b32.xlu0 %v2640, 64
      %v2651 = vpop.permute.xlu0 %2650
      %2652 = vrot.lane.b32.xlu0 %v2641, 64
      %v2653 = vpop.permute.xlu0 %2652
      %v2654 = vsel %vm627, %v2647, %v2649
      %v2655 = vsel %vm627, %v2649, %v2651
      %v2656 = vsel %vm627, %v2651, %v2653
      %v2662 = vmul.f32 %v2415, %v2647
      %v2663 = vmul.f32 %v2416, %v2654
      %v2664 = vmul.f32 %v2417, %v2655
      %v2665 = vmul.f32 %v2418, %v2656
      %v2666 = vmul.f32 %v2497, %v2653
      %v2667 = vmul.f32 %v2187, %v2647
      %v2668 = vmul.f32 %v2188, %v2654
      %v2669 = vmul.f32 %v2189, %v2655
      %v2670 = vmul.f32 %v2190, %v2656
      %v2671 = vmul.f32 %v2222, %v2653
      %v2672 = vmul.f32 %v2419, %v2647
      %v2673 = vmul.f32 %v2420, %v2654
      %v2674 = vmul.f32 %v2421, %v2655
      %v2675 = vmul.f32 %v2422, %v2656
      %v2676 = vmul.f32 %v2498, %v2653
      %v2692 = vrot.slane %v2662, 1
      %v2693 = vrot.slane %v2667, 1
      %v2694 = vsel %vm746, %v2692, %v2693
      %v2695 = vrot.slane %v2663, 1
      %v2696 = vrot.slane %v2668, 1
      %v2697 = vsel %vm746, %v2695, %v2696
      %v2698 = vrot.slane %v2664, 1
      %v2699 = vrot.slane %v2669, 1
      %v2700 = vsel %vm746, %v2698, %v2699
      %v2701 = vrot.slane %v2665, 1
      %v2702 = vrot.slane %v2670, 1
      %v2703 = vsel %vm746, %v2701, %v2702
      %v2704 = vrot.slane %v2666, 1
      %v2705 = vrot.slane %v2671, 1
      %v2706 = vsel %vm746, %v2704, %v2705
      %v2707 = vrot.slane %v2672, 1
      %v2708 = vsel %vm746, %v2693, %v2707
      %v2709 = vrot.slane %v2673, 1
      %v2710 = vsel %vm746, %v2696, %v2709
      %v2711 = vrot.slane %v2674, 1
      %v2712 = vsel %vm746, %v2699, %v2711
      %v2713 = vrot.slane %v2675, 1
      %v2714 = vsel %vm746, %v2702, %v2713
      %v2715 = vrot.slane %v2676, 1
      %v2716 = vsel %vm746, %v2705, %v2715
      %2717 = vrot.lane.b32.xlu0 %v2694, 64
      %v2718 = vpop.permute.xlu0 %2717
      %2719 = vrot.lane.b32.xlu0 %v2697, 64
      %v2720 = vpop.permute.xlu0 %2719
      %2721 = vrot.lane.b32.xlu0 %v2700, 64
      %v2722 = vpop.permute.xlu0 %2721
      %2723 = vrot.lane.b32.xlu0 %v2703, 64
      %v2724 = vpop.permute.xlu0 %2723
      %2725 = vrot.lane.b32.xlu0 %v2706, 64
      %v2726 = vpop.permute.xlu0 %2725
      %2727 = vrot.lane.b32.xlu0 %v2708, 64
      %v2728 = vpop.permute.xlu0 %2727
      %2729 = vrot.lane.b32.xlu0 %v2710, 64
      %v2730 = vpop.permute.xlu0 %2729
      %2731 = vrot.lane.b32.xlu0 %v2712, 64
      %v2732 = vpop.permute.xlu0 %2731
      %2733 = vrot.lane.b32.xlu0 %v2714, 64
      %v2734 = vpop.permute.xlu0 %2733
      %2735 = vrot.lane.b32.xlu0 %v2716, 64
      %v2736 = vpop.permute.xlu0 %2735
      %v2737 = vsel %vm627, %v2718, %v2720
      %v2738 = vsel %vm627, %v2720, %v2722
      %v2739 = vsel %vm627, %v2722, %v2724
      %v2740 = vsel %vm627, %v2724, %v2726
      %v2741 = vsel %vm627, %v2728, %v2730
      %v2742 = vsel %vm627, %v2730, %v2732
      %v2743 = vsel %vm627, %v2732, %v2734
      %v2744 = vsel %vm627, %v2734, %v2736
      %v2753 = vadd.f32 %v2622, %v2737
      %v2754 = vadd.f32 %v2623, %v2738
      %v2755 = vadd.f32 %v2624, %v2739
      %v2756 = vadd.f32 %v2625, %v2740
      %v2757 = vadd.f32 %v2626, %v2741
      %v2758 = vadd.f32 %v2627, %v2742
      %v2759 = vadd.f32 %v2628, %v2743
      %v2760 = vadd.f32 %v2629, %v2744
      %v2761 = vld [vmem:[#allocation3] sm:$0xfc]
      %v2762 = vld [vmem:[#allocation3 + $0x8] sm:$0xfc]
      %v2763 = vld [vmem:[#allocation3 + $0x10] sm:$0xfc]
      %v2764 = vld [vmem:[#allocation3 + $0x18] sm:$0xfc]
      %v2765 = vld [vmem:[#allocation3 + $0x50] sm:$0x3]
      %v2766 = vld [vmem:[#allocation3 + $0x58] sm:$0x3]
      %v2767 = vld [vmem:[#allocation3 + $0x60] sm:$0x3]
      %v2768 = vld [vmem:[#allocation3 + $0x68] sm:$0x3]
      %v2771 = vperm.slane %v2098, 0
      %v2772 = vperm.slane %v2098, 4
      %v2773 = vperm.slane %v2099, 0
      %v2774 = vperm.slane %v2099, 4
      %v2779 = vperm.slane %v2771, 0
      %v2780 = vperm.slane %v2772, 0
      %v2781 = vperm.slane %v2773, 0
      %v2782 = vperm.slane %v2774, 0
      %v2783 = vmul.f32 %v2761, %v2779
      %v2784 = vmul.f32 %v2762, %v2780
      %v2785 = vmul.f32 %v2763, %v2781
      %v2786 = vmul.f32 %v2764, %v2782
      %v2787 = vmul.f32 %v2187, %v2779
      %v2788 = vmul.f32 %v2188, %v2780
      %v2789 = vmul.f32 %v2189, %v2781
      %v2790 = vmul.f32 %v2190, %v2782
      %v2791 = vmul.f32 %v2765, %v2779
      %v2792 = vmul.f32 %v2766, %v2780
      %v2793 = vmul.f32 %v2767, %v2781
      %v2794 = vmul.f32 %v2768, %v2782
      %v2807 = vrot.slane %v2783, 2
      %v2808 = vrot.slane %v2787, 2
      %v2809 = vsel %vm1093, %v2807, %v2808
      %v2810 = vrot.slane %v2784, 2
      %v2811 = vrot.slane %v2788, 2
      %v2812 = vsel %vm1093, %v2810, %v2811
      %v2813 = vrot.slane %v2785, 2
      %v2814 = vrot.slane %v2789, 2
      %v2815 = vsel %vm1093, %v2813, %v2814
      %v2816 = vrot.slane %v2786, 2
      %v2817 = vrot.slane %v2790, 2
      %v2818 = vsel %vm1093, %v2816, %v2817
      %v2819 = vrot.slane %v2791, 2
      %v2820 = vsel %vm1093, %v2808, %v2819
      %v2821 = vrot.slane %v2792, 2
      %v2822 = vsel %vm1093, %v2811, %v2821
      %v2823 = vrot.slane %v2793, 2
      %v2824 = vsel %vm1093, %v2814, %v2823
      %v2825 = vrot.slane %v2794, 2
      %v2826 = vsel %vm1093, %v2817, %v2825
      %v2835 = vadd.f32 %v2753, %v2809
      %v2836 = vadd.f32 %v2754, %v2812
      %v2837 = vadd.f32 %v2755, %v2815
      %v2838 = vadd.f32 %v2756, %v2818
      %v2839 = vadd.f32 %v2757, %v2820
      %v2840 = vadd.f32 %v2758, %v2822
      %v2841 = vadd.f32 %v2759, %v2824
      %v2842 = vadd.f32 %v2760, %v2826
      %v2843 = vld [vmem:[#allocation3 + $0x20] sm:$0xfc]
      %v2844 = vld [vmem:[#allocation3 + $0x70] sm:$0x3]
      %v2845 = vperm.slane %v2098, 1
      %v2846 = vperm.slane %v2098, 5
      %v2847 = vperm.slane %v2099, 1
      %v2848 = vperm.slane %v2099, 5
      %v2853 = vperm.slane %v2845, 1
      %v2854 = vperm.slane %v2846, 1
      %v2855 = vperm.slane %v2847, 1
      %v2856 = vperm.slane %v2848, 1
      %2861 = vrot.lane.b32.xlu0 %v2853, 32
      %v2862 = vpop.permute.xlu0 %2861
      %2863 = vrot.lane.b32.xlu0 %v2854, 32
      %v2864 = vpop.permute.xlu0 %2863
      %2865 = vrot.lane.b32.xlu0 %v2855, 32
      %v2866 = vpop.permute.xlu0 %2865
      %2867 = vrot.lane.b32.xlu0 %v2856, 32
      %v2868 = vpop.permute.xlu0 %2867
      %v2869 = vsel %vm344, %v2862, %v2864
      %v2870 = vsel %vm344, %v2864, %v2866
      %v2871 = vsel %vm344, %v2866, %v2868
      %v2877 = vmul.f32 %v2761, %v2862
      %v2878 = vmul.f32 %v2762, %v2869
      %v2879 = vmul.f32 %v2763, %v2870
      %v2880 = vmul.f32 %v2764, %v2871
      %v2881 = vmul.f32 %v2843, %v2868
      %v2882 = vmul.f32 %v2187, %v2862
      %v2883 = vmul.f32 %v2188, %v2869
      %v2884 = vmul.f32 %v2189, %v2870
      %v2885 = vmul.f32 %v2190, %v2871
      %v2886 = vmul.f32 %v2222, %v2868
      %v2887 = vmul.f32 %v2765, %v2862
      %v2888 = vmul.f32 %v2766, %v2869
      %v2889 = vmul.f32 %v2767, %v2870
      %v2890 = vmul.f32 %v2768, %v2871
      %v2891 = vmul.f32 %v2844, %v2868
      %v2907 = vrot.slane %v2877, 2
      %v2908 = vrot.slane %v2882, 2
      %v2909 = vsel %vm1093, %v2907, %v2908
      %v2910 = vrot.slane %v2878, 2
      %v2911 = vrot.slane %v2883, 2
      %v2912 = vsel %vm1093, %v2910, %v2911
      %v2913 = vrot.slane %v2879, 2
      %v2914 = vrot.slane %v2884, 2
      %v2915 = vsel %vm1093, %v2913, %v2914
      %v2916 = vrot.slane %v2880, 2
      %v2917 = vrot.slane %v2885, 2
      %v2918 = vsel %vm1093, %v2916, %v2917
      %v2919 = vrot.slane %v2881, 2
      %v2920 = vrot.slane %v2886, 2
      %v2921 = vsel %vm1093, %v2919, %v2920
      %v2922 = vrot.slane %v2887, 2
      %v2923 = vsel %vm1093, %v2908, %v2922
      %v2924 = vrot.slane %v2888, 2
      %v2925 = vsel %vm1093, %v2911, %v2924
      %v2926 = vrot.slane %v2889, 2
      %v2927 = vsel %vm1093, %v2914, %v2926
      %v2928 = vrot.slane %v2890, 2
      %v2929 = vsel %vm1093, %v2917, %v2928
      %v2930 = vrot.slane %v2891, 2
      %v2931 = vsel %vm1093, %v2920, %v2930
      %2932 = vrot.lane.b32.xlu0 %v2909, 96
      %v2933 = vpop.permute.xlu0 %2932
      %2934 = vrot.lane.b32.xlu0 %v2912, 96
      %v2935 = vpop.permute.xlu0 %2934
      %2936 = vrot.lane.b32.xlu0 %v2915, 96
      %v2937 = vpop.permute.xlu0 %2936
      %2938 = vrot.lane.b32.xlu0 %v2918, 96
      %v2939 = vpop.permute.xlu0 %2938
      %2940 = vrot.lane.b32.xlu0 %v2921, 96
      %v2941 = vpop.permute.xlu0 %2940
      %2942 = vrot.lane.b32.xlu0 %v2923, 96
      %v2943 = vpop.permute.xlu0 %2942
      %2944 = vrot.lane.b32.xlu0 %v2925, 96
      %v2945 = vpop.permute.xlu0 %2944
      %2946 = vrot.lane.b32.xlu0 %v2927, 96
      %v2947 = vpop.permute.xlu0 %2946
      %2948 = vrot.lane.b32.xlu0 %v2929, 96
      %v2949 = vpop.permute.xlu0 %2948
      %2950 = vrot.lane.b32.xlu0 %v2931, 96
      %v2951 = vpop.permute.xlu0 %2950
      %v2952 = vsel %vm578, %v2933, %v2935
      %v2953 = vsel %vm578, %v2935, %v2937
      %v2954 = vsel %vm578, %v2937, %v2939
      %v2955 = vsel %vm578, %v2939, %v2941
      %v2956 = vsel %vm578, %v2943, %v2945
      %v2957 = vsel %vm578, %v2945, %v2947
      %v2958 = vsel %vm578, %v2947, %v2949
      %v2959 = vsel %vm578, %v2949, %v2951
      %v2968 = vadd.f32 %v2835, %v2952
      %v2969 = vadd.f32 %v2836, %v2953
      %v2970 = vadd.f32 %v2837, %v2954
      %v2971 = vadd.f32 %v2838, %v2955
      %v2972 = vadd.f32 %v2839, %v2956
      %v2973 = vadd.f32 %v2840, %v2957
      %v2974 = vadd.f32 %v2841, %v2958
      %v2975 = vadd.f32 %v2842, %v2959
      %v2976 = vperm.slane %v2098, 2
      %v2977 = vperm.slane %v2098, 6
      %v2978 = vperm.slane %v2099, 2
      %v2979 = vperm.slane %v2099, 6
      %v2984 = vperm.slane %v2976, 2
      %v2985 = vperm.slane %v2977, 2
      %v2986 = vperm.slane %v2978, 2
      %v2987 = vperm.slane %v2979, 2
      %2992 = vrot.lane.b32.xlu0 %v2984, 64
      %v2993 = vpop.permute.xlu0 %2992
      %2994 = vrot.lane.b32.xlu0 %v2985, 64
      %v2995 = vpop.permute.xlu0 %2994
      %2996 = vrot.lane.b32.xlu0 %v2986, 64
      %v2997 = vpop.permute.xlu0 %2996
      %2998 = vrot.lane.b32.xlu0 %v2987, 64
      %v2999 = vpop.permute.xlu0 %2998
      %v3000 = vsel %vm627, %v2993, %v2995
      %v3001 = vsel %vm627, %v2995, %v2997
      %v3002 = vsel %vm627, %v2997, %v2999
      %v3008 = vmul.f32 %v2761, %v2993
      %v3009 = vmul.f32 %v2762, %v3000
      %v3010 = vmul.f32 %v2763, %v3001
      %v3011 = vmul.f32 %v2764, %v3002
      %v3012 = vmul.f32 %v2843, %v2999
      %v3013 = vmul.f32 %v2187, %v2993
      %v3014 = vmul.f32 %v2188, %v3000
      %v3015 = vmul.f32 %v2189, %v3001
      %v3016 = vmul.f32 %v2190, %v3002
      %v3017 = vmul.f32 %v2222, %v2999
      %v3018 = vmul.f32 %v2765, %v2993
      %v3019 = vmul.f32 %v2766, %v3000
      %v3020 = vmul.f32 %v2767, %v3001
      %v3021 = vmul.f32 %v2768, %v3002
      %v3022 = vmul.f32 %v2844, %v2999
      %v3038 = vrot.slane %v3008, 2
      %v3039 = vrot.slane %v3013, 2
      %v3040 = vsel %vm1093, %v3038, %v3039
      %v3041 = vrot.slane %v3009, 2
      %v3042 = vrot.slane %v3014, 2
      %v3043 = vsel %vm1093, %v3041, %v3042
      %v3044 = vrot.slane %v3010, 2
      %v3045 = vrot.slane %v3015, 2
      %v3046 = vsel %vm1093, %v3044, %v3045
      %v3047 = vrot.slane %v3011, 2
      %v3048 = vrot.slane %v3016, 2
      %v3049 = vsel %vm1093, %v3047, %v3048
      %v3050 = vrot.slane %v3012, 2
      %v3051 = vrot.slane %v3017, 2
      %v3052 = vsel %vm1093, %v3050, %v3051
      %v3053 = vrot.slane %v3018, 2
      %v3054 = vsel %vm1093, %v3039, %v3053
      %v3055 = vrot.slane %v3019, 2
      %v3056 = vsel %vm1093, %v3042, %v3055
      %v3057 = vrot.slane %v3020, 2
      %v3058 = vsel %vm1093, %v3045, %v3057
      %v3059 = vrot.slane %v3021, 2
      %v3060 = vsel %vm1093, %v3048, %v3059
      %v3061 = vrot.slane %v3022, 2
      %v3062 = vsel %vm1093, %v3051, %v3061
      %3063 = vrot.lane.b32.xlu0 %v3040, 64
      %v3064 = vpop.permute.xlu0 %3063
      %3065 = vrot.lane.b32.xlu0 %v3043, 64
      %v3066 = vpop.permute.xlu0 %3065
      %3067 = vrot.lane.b32.xlu0 %v3046, 64
      %v3068 = vpop.permute.xlu0 %3067
      %3069 = vrot.lane.b32.xlu0 %v3049, 64
      %v3070 = vpop.permute.xlu0 %3069
      %3071 = vrot.lane.b32.xlu0 %v3052, 64
      %v3072 = vpop.permute.xlu0 %3071
      %3073 = vrot.lane.b32.xlu0 %v3054, 64
      %v3074 = vpop.permute.xlu0 %3073
      %3075 = vrot.lane.b32.xlu0 %v3056, 64
      %v3076 = vpop.permute.xlu0 %3075
      %3077 = vrot.lane.b32.xlu0 %v3058, 64
      %v3078 = vpop.permute.xlu0 %3077
      %3079 = vrot.lane.b32.xlu0 %v3060, 64
      %v3080 = vpop.permute.xlu0 %3079
      %3081 = vrot.lane.b32.xlu0 %v3062, 64
      %v3082 = vpop.permute.xlu0 %3081
      %v3083 = vsel %vm627, %v3064, %v3066
      %v3084 = vsel %vm627, %v3066, %v3068
      %v3085 = vsel %vm627, %v3068, %v3070
      %v3086 = vsel %vm627, %v3070, %v3072
      %v3087 = vsel %vm627, %v3074, %v3076
      %v3088 = vsel %vm627, %v3076, %v3078
      %v3089 = vsel %vm627, %v3078, %v3080
      %v3090 = vsel %vm627, %v3080, %v3082
      %v3099 = vadd.f32 %v2968, %v3083
      %v3100 = vadd.f32 %v2969, %v3084
      %v3101 = vadd.f32 %v2970, %v3085
      %v3102 = vadd.f32 %v2971, %v3086
      %v3103 = vadd.f32 %v2972, %v3087
      %v3104 = vadd.f32 %v2973, %v3088
      %v3105 = vadd.f32 %v2974, %v3089
      %v3106 = vadd.f32 %v2975, %v3090
      %v3107 = vld [vmem:[%s6] sm:$0xf]
      %v3109 = vperm.slane %v3107, 0
      %v3110 = vperm.slane %v3107, 1
      %v3111 = vperm.slane %v3107, 2
      %v3112 = vperm.slane %v3107, 3
      %v3117 = vadd.f32 %v3099, %v3109
      %v3118 = vadd.f32 %v3100, %v3110
      %v3119 = vadd.f32 %v3101, %v3111
      %v3120 = vadd.f32 %v3102, %v3112
      %v3121 = vadd.f32 %v3103, %v3109
      %v3122 = vadd.f32 %v3104, %v3110
      %v3123 = vadd.f32 %v3105, %v3111
      %v3124 = vadd.f32 %v3106, %v3112
      %vm3125 = vcmp.gt.f32.partialorder %v3117, 0.0
      %vm3126 = vcmp.gt.f32.partialorder %v3118, 0.0
      %vm3127 = vcmp.gt.f32.partialorder %v3119, 0.0
      %vm3128 = vcmp.gt.f32.partialorder %v3120, 0.0
      %vm3129 = vcmp.gt.f32.partialorder %v3121, 0.0
      %vm3130 = vcmp.gt.f32.partialorder %v3122, 0.0
      %vm3131 = vcmp.gt.f32.partialorder %v3123, 0.0
      %vm3132 = vcmp.gt.f32.partialorder %v3124, 0.0
      %v3133 = vmul.f32 %v3117, 0.01
      %v3134 = vmul.f32 %v3118, 0.01
      %v3135 = vmul.f32 %v3119, 0.01
      %v3136 = vmul.f32 %v3120, 0.01
      %v3137 = vmul.f32 %v3121, 0.01
      %v3138 = vmul.f32 %v3122, 0.01
      %v3139 = vmul.f32 %v3123, 0.01
      %v3140 = vmul.f32 %v3124, 0.01
      %v3141 = vsel %vm3125, %v3117, %v3133
      %v3142 = vsel %vm3126, %v3118, %v3134
      %v3143 = vsel %vm3127, %v3119, %v3135
      %v3144 = vsel %vm3128, %v3120, %v3136
      %v3145 = vsel %vm3129, %v3121, %v3137
      %v3146 = vsel %vm3130, %v3122, %v3138
      %v3147 = vsel %vm3131, %v3123, %v3139
      %v3148 = vsel %vm3132, %v3124, %v3140
      %v3149 = vld [vmem:[%s7] sm:$0xff]
      %v3150 = vld [vmem:[%s7 + $0x8] sm:$0xff]
      %v3151 = vld [vmem:[%s7 + $0x10] sm:$0xff]
      %v3152 = vld [vmem:[%s7 + $0x18] sm:$0xff]
      %v3153 = vld [vmem:[%s7 + $0x20] sm:$0xff]
      %v3154 = vld [vmem:[%s7 + $0x28] sm:$0xff]
      %v3155 = vld [vmem:[%s7 + $0x30] sm:$0xff]
      %v3156 = vld [vmem:[%s7 + $0x38] sm:$0xff]
      %v3157 = vld [vmem:[%s7 + $0x40] sm:$0xff]
      %v3158 = vld [vmem:[%s7 + $0x48] sm:$0xff]
      %v3159 = vld [vmem:[%s7 + $0x50] sm:$0xff]
      %v3160 = vld [vmem:[%s7 + $0x58] sm:$0xff]
      %v3161 = vld [vmem:[%s7 + $0x60] sm:$0xff]
      %v3162 = vld [vmem:[%s7 + $0x68] sm:$0xff]
      %v3163 = vld [vmem:[%s7 + $0x70] sm:$0xff]
      %v3164 = vld [vmem:[%s7 + $0x78] sm:$0xff]
      %v3165 = vld [vmem:[%s7 + $0x80] sm:$0xff]
      %v3166 = vld [vmem:[%s7 + $0x88] sm:$0xff]
      %v3167 = vld [vmem:[%s7 + $0x90] sm:$0xff]
      %v3168 = vld [vmem:[%s7 + $0x98] sm:$0xff]
      %v3169 = vld [vmem:[%s7 + $0xa0] sm:$0xff]
      %v3170 = vld [vmem:[%s7 + $0xa8] sm:$0xff]
      %v3171 = vld [vmem:[%s7 + $0xb0] sm:$0xff]
      %v3172 = vld [vmem:[%s7 + $0xb8] sm:$0xff]
      %v3173 = vld [vmem:[%s7 + $0xc0] sm:$0xff]
      %v3174 = vld [vmem:[%s7 + $0xc8] sm:$0xff]
      %v3175 = vld [vmem:[%s7 + $0xd0] sm:$0xff]
      %v3176 = vld [vmem:[%s7 + $0xd8] sm:$0xff]
      %v3177 = vld [vmem:[%s7 + $0xe0] sm:$0xff]
      %v3178 = vld [vmem:[%s7 + $0xe8] sm:$0xff]
      %v3179 = vld [vmem:[%s7 + $0xf0] sm:$0xff]
      %v3180 = vld [vmem:[%s7 + $0xf8] sm:$0xff]
      %v3181 = vld [vmem:[%s7 + $0x100] sm:$0xff]
      %v3182 = vld [vmem:[%s7 + $0x108] sm:$0xff]
      %v3183 = vld [vmem:[%s7 + $0x110] sm:$0xff]
      %v3184 = vld [vmem:[%s7 + $0x118] sm:$0xff]
      %v3185 = vld [vmem:[%s7 + $0x120] sm:$0xff]
      %v3186 = vld [vmem:[%s7 + $0x128] sm:$0xff]
      %v3187 = vld [vmem:[%s7 + $0x130] sm:$0xff]
      %v3188 = vld [vmem:[%s7 + $0x138] sm:$0xff]
      %v3189 = vld [vmem:[%s7 + $0x140] sm:$0xff]
      %v3190 = vld [vmem:[%s7 + $0x148] sm:$0xff]
      %v3191 = vld [vmem:[%s7 + $0x150] sm:$0xff]
      %v3192 = vld [vmem:[%s7 + $0x158] sm:$0xff]
      %v3193 = vld [vmem:[%s7 + $0x160] sm:$0xff]
      %v3194 = vld [vmem:[%s7 + $0x168] sm:$0xff]
      %v3195 = vld [vmem:[%s7 + $0x170] sm:$0xff]
      %v3196 = vld [vmem:[%s7 + $0x178] sm:$0xff]
      %v3197 = vld [vmem:[%s7 + $0x180] sm:$0xff]
      %v3198 = vld [vmem:[%s7 + $0x188] sm:$0xff]
      %v3199 = vld [vmem:[%s7 + $0x190] sm:$0xff]
      %v3200 = vld [vmem:[%s7 + $0x198] sm:$0xff]
      %v3201 = vld [vmem:[%s7 + $0x1a0] sm:$0xff]
      %v3202 = vld [vmem:[%s7 + $0x1a8] sm:$0xff]
      %v3203 = vld [vmem:[%s7 + $0x1b0] sm:$0xff]
      %v3204 = vld [vmem:[%s7 + $0x1b8] sm:$0xff]
      %v3205 = vld [vmem:[%s7 + $0x1c0] sm:$0xff]
      %v3206 = vld [vmem:[%s7 + $0x1c8] sm:$0xff]
      %v3207 = vld [vmem:[%s7 + $0x1d0] sm:$0xff]
      %v3208 = vld [vmem:[%s7 + $0x1d8] sm:$0xff]
      %v3209 = vld [vmem:[%s7 + $0x1e0] sm:$0xff]
      %v3210 = vld [vmem:[%s7 + $0x1e8] sm:$0xff]
      %v3211 = vld [vmem:[%s7 + $0x1f0] sm:$0xff]
      %v3212 = vld [vmem:[%s7 + $0x1f8] sm:$0xff]
      %v3213 = vld [vmem:[%s7 + $0x200] sm:$0xff]
      %v3214 = vld [vmem:[%s7 + $0x208] sm:$0xff]
      %v3215 = vld [vmem:[%s7 + $0x210] sm:$0xff]
      %v3216 = vld [vmem:[%s7 + $0x218] sm:$0xff]
      %v3217 = vld [vmem:[%s7 + $0x220] sm:$0xff]
      %v3218 = vld [vmem:[%s7 + $0x228] sm:$0xff]
      %v3219 = vld [vmem:[%s7 + $0x230] sm:$0xff]
      %v3220 = vld [vmem:[%s7 + $0x238] sm:$0xff]
      %v3221 = vld [vmem:[%s7 + $0x240] sm:$0xff]
      %v3222 = vld [vmem:[%s7 + $0x248] sm:$0xff]
      %v3223 = vld [vmem:[%s7 + $0x250] sm:$0xff]
      %v3224 = vld [vmem:[%s7 + $0x258] sm:$0xff]
      %v3225 = vld [vmem:[%s7 + $0x260] sm:$0xff]
      %v3226 = vld [vmem:[%s7 + $0x268] sm:$0xff]
      %v3227 = vld [vmem:[%s7 + $0x270] sm:$0xff]
      %v3228 = vld [vmem:[%s7 + $0x278] sm:$0xff]
      %v3229 = vld [vmem:[%s7 + $0x280] sm:$0xff]
      %v3230 = vld [vmem:[%s7 + $0x288] sm:$0xff]
      %v3231 = vld [vmem:[%s7 + $0x290] sm:$0xff]
      %v3232 = vld [vmem:[%s7 + $0x298] sm:$0xff]
      %v3233 = vld [vmem:[%s7 + $0x2a0] sm:$0xff]
      %v3234 = vld [vmem:[%s7 + $0x2a8] sm:$0xff]
      %v3235 = vld [vmem:[%s7 + $0x2b0] sm:$0xff]
      %v3236 = vld [vmem:[%s7 + $0x2b8] sm:$0xff]
      %v3237 = vld [vmem:[%s7 + $0x2c0] sm:$0xff]
      %v3238 = vld [vmem:[%s7 + $0x2c8] sm:$0xff]
      %v3239 = vld [vmem:[%s7 + $0x2d0] sm:$0xff]
      %v3240 = vld [vmem:[%s7 + $0x2d8] sm:$0xff]
      %v3241 = vld [vmem:[%s7 + $0x2e0] sm:$0xff]
      %v3242 = vld [vmem:[%s7 + $0x2e8] sm:$0xff]
      %v3243 = vld [vmem:[%s7 + $0x2f0] sm:$0xff]
      %v3244 = vld [vmem:[%s7 + $0x2f8] sm:$0xff]
      %v3245 = vld [vmem:[%s7 + $0x300] sm:$0xff]
      %v3246 = vld [vmem:[%s7 + $0x308] sm:$0xff]
      %v3247 = vld [vmem:[%s7 + $0x310] sm:$0xff]
      %v3248 = vld [vmem:[%s7 + $0x318] sm:$0xff]
      %v3249 = vld [vmem:[%s7 + $0x320] sm:$0xff]
      %v3250 = vld [vmem:[%s7 + $0x328] sm:$0xff]
      %v3251 = vld [vmem:[%s7 + $0x330] sm:$0xff]
      %v3252 = vld [vmem:[%s7 + $0x338] sm:$0xff]
      %v3253 = vld [vmem:[%s7 + $0x340] sm:$0xff]
      %v3254 = vld [vmem:[%s7 + $0x348] sm:$0xff]
      %v3255 = vld [vmem:[%s7 + $0x350] sm:$0xff]
      %v3256 = vld [vmem:[%s7 + $0x358] sm:$0xff]
      %v3257 = vld [vmem:[%s7 + $0x360] sm:$0xff]
      %v3258 = vld [vmem:[%s7 + $0x368] sm:$0xff]
      %v3259 = vld [vmem:[%s7 + $0x370] sm:$0xff]
      %v3260 = vld [vmem:[%s7 + $0x378] sm:$0xff]
      %v3261 = vld [vmem:[%s7 + $0x380] sm:$0xff]
      %v3262 = vld [vmem:[%s7 + $0x388] sm:$0xff]
      %v3263 = vld [vmem:[%s7 + $0x390] sm:$0xff]
      %v3264 = vld [vmem:[%s7 + $0x398] sm:$0xff]
      %v3265 = vld [vmem:[%s7 + $0x3a0] sm:$0xff]
      %v3266 = vld [vmem:[%s7 + $0x3a8] sm:$0xff]
      %v3267 = vld [vmem:[%s7 + $0x3b0] sm:$0xff]
      %v3268 = vld [vmem:[%s7 + $0x3b8] sm:$0xff]
      %v3269 = vld [vmem:[%s7 + $0x3c0] sm:$0xff]
      %v3270 = vld [vmem:[%s7 + $0x3c8] sm:$0xff]
      %v3271 = vld [vmem:[%s7 + $0x3d0] sm:$0xff]
      %v3272 = vld [vmem:[%s7 + $0x3d8] sm:$0xff]
      %v3273 = vld [vmem:[%s7 + $0x3e0] sm:$0xff]
      %v3274 = vld [vmem:[%s7 + $0x3e8] sm:$0xff]
      %v3275 = vld [vmem:[%s7 + $0x3f0] sm:$0xff]
      %v3276 = vld [vmem:[%s7 + $0x3f8] sm:$0xff]
      %v3277 = vld [vmem:[%s7 + $0x400] sm:$0xff]
      %v3278 = vld [vmem:[%s7 + $0x408] sm:$0xff]
      %v3279 = vld [vmem:[%s7 + $0x410] sm:$0xff]
      %v3280 = vld [vmem:[%s7 + $0x418] sm:$0xff]
      %v3281 = vld [vmem:[%s7 + $0x420] sm:$0xff]
      %v3282 = vld [vmem:[%s7 + $0x428] sm:$0xff]
      %v3283 = vld [vmem:[%s7 + $0x430] sm:$0xff]
      %v3284 = vld [vmem:[%s7 + $0x438] sm:$0xff]
      %v3285 = vld [vmem:[%s7 + $0x440] sm:$0xff]
      %v3286 = vld [vmem:[%s7 + $0x448] sm:$0xff]
      %v3287 = vld [vmem:[%s7 + $0x450] sm:$0xff]
      %v3288 = vld [vmem:[%s7 + $0x458] sm:$0xff]
      %v3289 = vld [vmem:[%s7 + $0x460] sm:$0xff]
      %v3290 = vld [vmem:[%s7 + $0x468] sm:$0xff]
      %v3291 = vld [vmem:[%s7 + $0x470] sm:$0xff]
      %v3292 = vld [vmem:[%s7 + $0x478] sm:$0xff]
      %v3293 = vld [vmem:[%s7 + $0x480] sm:$0xff]
      %v3294 = vld [vmem:[%s7 + $0x488] sm:$0xff]
      %v3295 = vld [vmem:[%s7 + $0x490] sm:$0xff]
      %v3296 = vld [vmem:[%s7 + $0x498] sm:$0xff]
      %v3297 = vld [vmem:[%s7 + $0x4a0] sm:$0xff]
      %v3298 = vld [vmem:[%s7 + $0x4a8] sm:$0xff]
      %v3299 = vld [vmem:[%s7 + $0x4b0] sm:$0xff]
      %v3300 = vld [vmem:[%s7 + $0x4b8] sm:$0xff]
      %v3301 = vld [vmem:[%s7 + $0x4c0] sm:$0xff]
      %v3302 = vld [vmem:[%s7 + $0x4c8] sm:$0xff]
      %v3303 = vld [vmem:[%s7 + $0x4d0] sm:$0xff]
      %v3304 = vld [vmem:[%s7 + $0x4d8] sm:$0xff]
      %v3305 = vld [vmem:[%s7 + $0x4e0] sm:$0xff]
      %v3306 = vld [vmem:[%s7 + $0x4e8] sm:$0xff]
      %v3307 = vld [vmem:[%s7 + $0x4f0] sm:$0xff]
      %v3308 = vld [vmem:[%s7 + $0x4f8] sm:$0xff]
      %v3309 = vld [vmem:[%s7 + $0x500] sm:$0xff]
      %v3310 = vld [vmem:[%s7 + $0x508] sm:$0xff]
      %v3311 = vld [vmem:[%s7 + $0x510] sm:$0xff]
      %v3312 = vld [vmem:[%s7 + $0x518] sm:$0xff]
      %v3313 = vld [vmem:[%s7 + $0x520] sm:$0xff]
      %v3314 = vld [vmem:[%s7 + $0x528] sm:$0xff]
      %v3315 = vld [vmem:[%s7 + $0x530] sm:$0xff]
      %v3316 = vld [vmem:[%s7 + $0x538] sm:$0xff]
      %v3317 = vld [vmem:[%s7 + $0x540] sm:$0xff]
      %v3318 = vld [vmem:[%s7 + $0x548] sm:$0xff]
      %v3319 = vld [vmem:[%s7 + $0x550] sm:$0xff]
      %v3320 = vld [vmem:[%s7 + $0x558] sm:$0xff]
      %v3321 = vld [vmem:[%s7 + $0x560] sm:$0xff]
      %v3322 = vld [vmem:[%s7 + $0x568] sm:$0xff]
      %v3323 = vld [vmem:[%s7 + $0x570] sm:$0xff]
      %v3324 = vld [vmem:[%s7 + $0x578] sm:$0xff]
      %v3325 = vld [vmem:[%s7 + $0x580] sm:$0xff]
      %v3326 = vld [vmem:[%s7 + $0x588] sm:$0xff]
      %v3327 = vld [vmem:[%s7 + $0x590] sm:$0xff]
      %v3328 = vld [vmem:[%s7 + $0x598] sm:$0xff]
      %v3329 = vld [vmem:[%s7 + $0x5a0] sm:$0xff]
      %v3330 = vld [vmem:[%s7 + $0x5a8] sm:$0xff]
      %v3331 = vld [vmem:[%s7 + $0x5b0] sm:$0xff]
      %v3332 = vld [vmem:[%s7 + $0x5b8] sm:$0xff]
      %v3333 = vld [vmem:[%s7 + $0x5c0] sm:$0xff]
      %v3334 = vld [vmem:[%s7 + $0x5c8] sm:$0xff]
      %v3335 = vld [vmem:[%s7 + $0x5d0] sm:$0xff]
      %v3336 = vld [vmem:[%s7 + $0x5d8] sm:$0xff]
      %v3337 = vld [vmem:[%s7 + $0x5e0] sm:$0xff]
      %v3338 = vld [vmem:[%s7 + $0x5e8] sm:$0xff]
      %v3339 = vld [vmem:[%s7 + $0x5f0] sm:$0xff]
      %v3340 = vld [vmem:[%s7 + $0x5f8] sm:$0xff]
      %v3341 = vld [vmem:[%s7 + $0x600] sm:$0xff]
      %v3342 = vld [vmem:[%s7 + $0x608] sm:$0xff]
      %v3343 = vld [vmem:[%s7 + $0x610] sm:$0xff]
      %v3344 = vld [vmem:[%s7 + $0x618] sm:$0xff]
      %v3345 = vld [vmem:[%s7 + $0x620] sm:$0xff]
      %v3346 = vld [vmem:[%s7 + $0x628] sm:$0xff]
      %v3347 = vld [vmem:[%s7 + $0x630] sm:$0xff]
      %v3348 = vld [vmem:[%s7 + $0x638] sm:$0xff]
      %v3349 = vld [vmem:[%s7 + $0x640] sm:$0xff]
      %v3350 = vld [vmem:[%s7 + $0x648] sm:$0xff]
      %v3351 = vld [vmem:[%s7 + $0x650] sm:$0xff]
      %v3352 = vld [vmem:[%s7 + $0x658] sm:$0xff]
      %v3353 = vld [vmem:[%s7 + $0x660] sm:$0xff]
      %v3354 = vld [vmem:[%s7 + $0x668] sm:$0xff]
      %v3355 = vld [vmem:[%s7 + $0x670] sm:$0xff]
      %v3356 = vld [vmem:[%s7 + $0x678] sm:$0xff]
      %v3357 = vld [vmem:[%s7 + $0x680] sm:$0xff]
      %v3358 = vld [vmem:[%s7 + $0x688] sm:$0xff]
      %v3359 = vld [vmem:[%s7 + $0x690] sm:$0xff]
      %v3360 = vld [vmem:[%s7 + $0x698] sm:$0xff]
      %v3361 = vld [vmem:[%s7 + $0x6a0] sm:$0xff]
      %v3362 = vld [vmem:[%s7 + $0x6a8] sm:$0xff]
      %v3363 = vld [vmem:[%s7 + $0x6b0] sm:$0xff]
      %v3364 = vld [vmem:[%s7 + $0x6b8] sm:$0xff]
      %v3365 = vld [vmem:[%s7 + $0x6c0] sm:$0xff]
      %v3366 = vld [vmem:[%s7 + $0x6c8] sm:$0xff]
      %v3367 = vld [vmem:[%s7 + $0x6d0] sm:$0xff]
      %v3368 = vld [vmem:[%s7 + $0x6d8] sm:$0xff]
      %v3369 = vld [vmem:[%s7 + $0x6e0] sm:$0xff]
      %v3370 = vld [vmem:[%s7 + $0x6e8] sm:$0xff]
      %v3371 = vld [vmem:[%s7 + $0x6f0] sm:$0xff]
      %v3372 = vld [vmem:[%s7 + $0x6f8] sm:$0xff]
      %v3373 = vld [vmem:[%s7 + $0x700] sm:$0xff]
      %v3374 = vld [vmem:[%s7 + $0x708] sm:$0xff]
      %v3375 = vld [vmem:[%s7 + $0x710] sm:$0xff]
      %v3376 = vld [vmem:[%s7 + $0x718] sm:$0xff]
      %v3377 = vld [vmem:[%s7 + $0x720] sm:$0xff]
      %v3378 = vld [vmem:[%s7 + $0x728] sm:$0xff]
      %v3379 = vld [vmem:[%s7 + $0x730] sm:$0xff]
      %v3380 = vld [vmem:[%s7 + $0x738] sm:$0xff]
      %v3381 = vld [vmem:[%s7 + $0x740] sm:$0xff]
      %v3382 = vld [vmem:[%s7 + $0x748] sm:$0xff]
      %v3383 = vld [vmem:[%s7 + $0x750] sm:$0xff]
      %v3384 = vld [vmem:[%s7 + $0x758] sm:$0xff]
      %v3385 = vld [vmem:[%s7 + $0x760] sm:$0xff]
      %v3386 = vld [vmem:[%s7 + $0x768] sm:$0xff]
      %v3387 = vld [vmem:[%s7 + $0x770] sm:$0xff]
      %v3388 = vld [vmem:[%s7 + $0x778] sm:$0xff]
      %v3389 = vld [vmem:[%s7 + $0x780] sm:$0xff]
      %v3390 = vld [vmem:[%s7 + $0x788] sm:$0xff]
      %v3391 = vld [vmem:[%s7 + $0x790] sm:$0xff]
      %v3392 = vld [vmem:[%s7 + $0x798] sm:$0xff]
      %v3393 = vld [vmem:[%s7 + $0x7a0] sm:$0xff]
      %v3394 = vld [vmem:[%s7 + $0x7a8] sm:$0xff]
      %v3395 = vld [vmem:[%s7 + $0x7b0] sm:$0xff]
      %v3396 = vld [vmem:[%s7 + $0x7b8] sm:$0xff]
      %v3397 = vld [vmem:[%s7 + $0x7c0] sm:$0xff]
      %v3398 = vld [vmem:[%s7 + $0x7c8] sm:$0xff]
      %v3399 = vld [vmem:[%s7 + $0x7d0] sm:$0xff]
      %v3400 = vld [vmem:[%s7 + $0x7d8] sm:$0xff]
      %v3401 = vld [vmem:[%s7 + $0x7e0] sm:$0xff]
      %v3402 = vld [vmem:[%s7 + $0x7e8] sm:$0xff]
      %v3403 = vld [vmem:[%s7 + $0x7f0] sm:$0xff]
      %v3404 = vld [vmem:[%s7 + $0x7f8] sm:$0xff]
      %v3405 = vld [vmem:[%s8] sm:$0xf]
      %v3407 = vperm.slane %v3405, 0
      %v3408 = vperm.slane %v3405, 1
      %v3409 = vperm.slane %v3405, 2
      %v3410 = vperm.slane %v3405, 3
      %3415 = vmatpush.msra.mxu0 %v3209
      %3416 = vmatpush.msra.mxu0 %v3205
      %3417 = vmatpush.msra.mxu0 %v3201
      %3418 = vmatpush.msra.mxu0 %v3197
      %3419 = vmatpush.msra.mxu0 %v3193
      %3420 = vmatpush.msra.mxu0 %v3189
      %3421 = vmatpush.msra.mxu0 %v3185
      %3422 = vmatpush.msra.mxu0 %v3181
      %3423 = vmatpush.msra.mxu0 %v3177
      %3424 = vmatpush.msra.mxu0 %v3173
      %3425 = vmatpush.msra.mxu0 %v3169
      %3426 = vmatpush.msra.mxu0 %v3165
      %3427 = vmatpush.msra.mxu0 %v3161
      %3428 = vmatpush.msra.mxu0 %v3157
      %3429 = vmatpush.msra.mxu0 %v3153
      %3430 = vmatpush.msra.mxu0 %v3149
      %3431 = vmatmul.f32.gmra.mxu0 %v3141
      %v3432 = vpop.f32.mrf.mxu0
      %v3433 = vadd.f32 %v3407, %v3432
      %3434 = vmatmul.f32.gmra.mxu0 %v3145
      %v3435 = vpop.f32.mrf.mxu0
      %v3436 = vadd.f32 %v3407, %v3435
      %3437 = vdwg.mxu0
      %3438 = vmatpush.msra.mxu0 %v3273
      %3439 = vmatpush.msra.mxu0 %v3269
      %3440 = vmatpush.msra.mxu0 %v3265
      %3441 = vmatpush.msra.mxu0 %v3261
      %3442 = vmatpush.msra.mxu0 %v3257
      %3443 = vmatpush.msra.mxu0 %v3253
      %3444 = vmatpush.msra.mxu0 %v3249
      %3445 = vmatpush.msra.mxu0 %v3245
      %3446 = vmatpush.msra.mxu0 %v3241
      %3447 = vmatpush.msra.mxu0 %v3237
      %3448 = vmatpush.msra.mxu0 %v3233
      %3449 = vmatpush.msra.mxu0 %v3229
      %3450 = vmatpush.msra.mxu0 %v3225
      %3451 = vmatpush.msra.mxu0 %v3221
      %3452 = vmatpush.msra.mxu0 %v3217
      %3453 = vmatpush.msra.mxu0 %v3213
      %3454 = vmatmul.f32.gmra.mxu0 %v3142
      %v3455 = vpop.f32.mrf.mxu0
      %v3456 = vadd.f32 %v3433, %v3455
      %3457 = vmatmul.f32.gmra.mxu0 %v3146
      %v3458 = vpop.f32.mrf.mxu0
      %v3459 = vadd.f32 %v3436, %v3458
      %3460 = vdwg.mxu0
      %3461 = vmatpush.msra.mxu0 %v3337
      %3462 = vmatpush.msra.mxu0 %v3333
      %3463 = vmatpush.msra.mxu0 %v3329
      %3464 = vmatpush.msra.mxu0 %v3325
      %3465 = vmatpush.msra.mxu0 %v3321
      %3466 = vmatpush.msra.mxu0 %v3317
      %3467 = vmatpush.msra.mxu0 %v3313
      %3468 = vmatpush.msra.mxu0 %v3309
      %3469 = vmatpush.msra.mxu0 %v3305
      %3470 = vmatpush.msra.mxu0 %v3301
      %3471 = vmatpush.msra.mxu0 %v3297
      %3472 = vmatpush.msra.mxu0 %v3293
      %3473 = vmatpush.msra.mxu0 %v3289
      %3474 = vmatpush.msra.mxu0 %v3285
      %3475 = vmatpush.msra.mxu0 %v3281
      %3476 = vmatpush.msra.mxu0 %v3277
      %3477 = vmatmul.f32.gmra.mxu0 %v3143
      %v3478 = vpop.f32.mrf.mxu0
      %v3479 = vadd.f32 %v3456, %v3478
      %3480 = vmatmul.f32.gmra.mxu0 %v3147
      %v3481 = vpop.f32.mrf.mxu0
      %v3482 = vadd.f32 %v3459, %v3481
      %3483 = vdwg.mxu0
      %3484 = vmatpush.msra.mxu0 %v3401
      %3485 = vmatpush.msra.mxu0 %v3397
      %3486 = vmatpush.msra.mxu0 %v3393
      %3487 = vmatpush.msra.mxu0 %v3389
      %3488 = vmatpush.msra.mxu0 %v3385
      %3489 = vmatpush.msra.mxu0 %v3381
      %3490 = vmatpush.msra.mxu0 %v3377
      %3491 = vmatpush.msra.mxu0 %v3373
      %3492 = vmatpush.msra.mxu0 %v3369
      %3493 = vmatpush.msra.mxu0 %v3365
      %3494 = vmatpush.msra.mxu0 %v3361
      %3495 = vmatpush.msra.mxu0 %v3357
      %3496 = vmatpush.msra.mxu0 %v3353
      %3497 = vmatpush.msra.mxu0 %v3349
      %3498 = vmatpush.msra.mxu0 %v3345
      %3499 = vmatpush.msra.mxu0 %v3341
      %3500 = vmatmul.f32.gmra.mxu0 %v3144
      %v3501 = vpop.f32.mrf.mxu0
      %v3502 = vadd.f32 %v3479, %v3501
      %3503 = vmatmul.f32.gmra.mxu0 %v3148
      %v3504 = vpop.f32.mrf.mxu0
      %v3505 = vadd.f32 %v3482, %v3504
      %3506 = vdwg.mxu0
      %3507 = vmatpush.msra.mxu0 %v3210
      %3508 = vmatpush.msra.mxu0 %v3206
      %3509 = vmatpush.msra.mxu0 %v3202
      %3510 = vmatpush.msra.mxu0 %v3198
      %3511 = vmatpush.msra.mxu0 %v3194
      %3512 = vmatpush.msra.mxu0 %v3190
      %3513 = vmatpush.msra.mxu0 %v3186
      %3514 = vmatpush.msra.mxu0 %v3182
      %3515 = vmatpush.msra.mxu0 %v3178
      %3516 = vmatpush.msra.mxu0 %v3174
      %3517 = vmatpush.msra.mxu0 %v3170
      %3518 = vmatpush.msra.mxu0 %v3166
      %3519 = vmatpush.msra.mxu0 %v3162
      %3520 = vmatpush.msra.mxu0 %v3158
      %3521 = vmatpush.msra.mxu0 %v3154
      %3522 = vmatpush.msra.mxu0 %v3150
      %3523 = vmatmul.f32.gmra.mxu0 %v3141
      %v3524 = vpop.f32.mrf.mxu0
      %v3525 = vadd.f32 %v3408, %v3524
      %3526 = vmatmul.f32.gmra.mxu0 %v3145
      %v3527 = vpop.f32.mrf.mxu0
      %v3528 = vadd.f32 %v3408, %v3527
      %3529 = vdwg.mxu0
      %3530 = vmatpush.msra.mxu0 %v3274
      %3531 = vmatpush.msra.mxu0 %v3270
      %3532 = vmatpush.msra.mxu0 %v3266
      %3533 = vmatpush.msra.mxu0 %v3262
      %3534 = vmatpush.msra.mxu0 %v3258
      %3535 = vmatpush.msra.mxu0 %v3254
      %3536 = vmatpush.msra.mxu0 %v3250
      %3537 = vmatpush.msra.mxu0 %v3246
      %3538 = vmatpush.msra.mxu0 %v3242
      %3539 = vmatpush.msra.mxu0 %v3238
      %3540 = vmatpush.msra.mxu0 %v3234
      %3541 = vmatpush.msra.mxu0 %v3230
      %3542 = vmatpush.msra.mxu0 %v3226
      %3543 = vmatpush.msra.mxu0 %v3222
      %3544 = vmatpush.msra.mxu0 %v3218
      %3545 = vmatpush.msra.mxu0 %v3214
      %3546 = vmatmul.f32.gmra.mxu0 %v3142
      %v3547 = vpop.f32.mrf.mxu0
      %v3548 = vadd.f32 %v3525, %v3547
      %3549 = vmatmul.f32.gmra.mxu0 %v3146
      %v3550 = vpop.f32.mrf.mxu0
      %v3551 = vadd.f32 %v3528, %v3550
      %3552 = vdwg.mxu0
      %3553 = vmatpush.msra.mxu0 %v3338
      %3554 = vmatpush.msra.mxu0 %v3334
      %3555 = vmatpush.msra.mxu0 %v3330
      %3556 = vmatpush.msra.mxu0 %v3326
      %3557 = vmatpush.msra.mxu0 %v3322
      %3558 = vmatpush.msra.mxu0 %v3318
      %3559 = vmatpush.msra.mxu0 %v3314
      %3560 = vmatpush.msra.mxu0 %v3310
      %3561 = vmatpush.msra.mxu0 %v3306
      %3562 = vmatpush.msra.mxu0 %v3302
      %3563 = vmatpush.msra.mxu0 %v3298
      %3564 = vmatpush.msra.mxu0 %v3294
      %3565 = vmatpush.msra.mxu0 %v3290
      %3566 = vmatpush.msra.mxu0 %v3286
      %3567 = vmatpush.msra.mxu0 %v3282
      %3568 = vmatpush.msra.mxu0 %v3278
      %3569 = vmatmul.f32.gmra.mxu0 %v3143
      %v3570 = vpop.f32.mrf.mxu0
      %v3571 = vadd.f32 %v3548, %v3570
      %3572 = vmatmul.f32.gmra.mxu0 %v3147
      %v3573 = vpop.f32.mrf.mxu0
      %v3574 = vadd.f32 %v3551, %v3573
      %3575 = vdwg.mxu0
      %3576 = vmatpush.msra.mxu0 %v3402
      %3577 = vmatpush.msra.mxu0 %v3398
      %3578 = vmatpush.msra.mxu0 %v3394
      %3579 = vmatpush.msra.mxu0 %v3390
      %3580 = vmatpush.msra.mxu0 %v3386
      %3581 = vmatpush.msra.mxu0 %v3382
      %3582 = vmatpush.msra.mxu0 %v3378
      %3583 = vmatpush.msra.mxu0 %v3374
      %3584 = vmatpush.msra.mxu0 %v3370
      %3585 = vmatpush.msra.mxu0 %v3366
      %3586 = vmatpush.msra.mxu0 %v3362
      %3587 = vmatpush.msra.mxu0 %v3358
      %3588 = vmatpush.msra.mxu0 %v3354
      %3589 = vmatpush.msra.mxu0 %v3350
      %3590 = vmatpush.msra.mxu0 %v3346
      %3591 = vmatpush.msra.mxu0 %v3342
      %3592 = vmatmul.f32.gmra.mxu0 %v3144
      %v3593 = vpop.f32.mrf.mxu0
      %v3594 = vadd.f32 %v3571, %v3593
      %3595 = vmatmul.f32.gmra.mxu0 %v3148
      %v3596 = vpop.f32.mrf.mxu0
      %v3597 = vadd.f32 %v3574, %v3596
      %3598 = vdwg.mxu0
      %3599 = vmatpush.msra.mxu0 %v3211
      %3600 = vmatpush.msra.mxu0 %v3207
      %3601 = vmatpush.msra.mxu0 %v3203
      %3602 = vmatpush.msra.mxu0 %v3199
      %3603 = vmatpush.msra.mxu0 %v3195
      %3604 = vmatpush.msra.mxu0 %v3191
      %3605 = vmatpush.msra.mxu0 %v3187
      %3606 = vmatpush.msra.mxu0 %v3183
      %3607 = vmatpush.msra.mxu0 %v3179
      %3608 = vmatpush.msra.mxu0 %v3175
      %3609 = vmatpush.msra.mxu0 %v3171
      %3610 = vmatpush.msra.mxu0 %v3167
      %3611 = vmatpush.msra.mxu0 %v3163
      %3612 = vmatpush.msra.mxu0 %v3159
      %3613 = vmatpush.msra.mxu0 %v3155
      %3614 = vmatpush.msra.mxu0 %v3151
      %3615 = vmatmul.f32.gmra.mxu0 %v3141
      %v3616 = vpop.f32.mrf.mxu0
      %v3617 = vadd.f32 %v3409, %v3616
      %3618 = vmatmul.f32.gmra.mxu0 %v3145
      %v3619 = vpop.f32.mrf.mxu0
      %v3620 = vadd.f32 %v3409, %v3619
      %3621 = vdwg.mxu0
      %3622 = vmatpush.msra.mxu0 %v3275
      %3623 = vmatpush.msra.mxu0 %v3271
      %3624 = vmatpush.msra.mxu0 %v3267
      %3625 = vmatpush.msra.mxu0 %v3263
      %3626 = vmatpush.msra.mxu0 %v3259
      %3627 = vmatpush.msra.mxu0 %v3255
      %3628 = vmatpush.msra.mxu0 %v3251
      %3629 = vmatpush.msra.mxu0 %v3247
      %3630 = vmatpush.msra.mxu0 %v3243
      %3631 = vmatpush.msra.mxu0 %v3239
      %3632 = vmatpush.msra.mxu0 %v3235
      %3633 = vmatpush.msra.mxu0 %v3231
      %3634 = vmatpush.msra.mxu0 %v3227
      %3635 = vmatpush.msra.mxu0 %v3223
      %3636 = vmatpush.msra.mxu0 %v3219
      %3637 = vmatpush.msra.mxu0 %v3215
      %3638 = vmatmul.f32.gmra.mxu0 %v3142
      %v3639 = vpop.f32.mrf.mxu0
      %v3640 = vadd.f32 %v3617, %v3639
      %3641 = vmatmul.f32.gmra.mxu0 %v3146
      %v3642 = vpop.f32.mrf.mxu0
      %v3643 = vadd.f32 %v3620, %v3642
      %3644 = vdwg.mxu0
      %3645 = vmatpush.msra.mxu0 %v3339
      %3646 = vmatpush.msra.mxu0 %v3335
      %3647 = vmatpush.msra.mxu0 %v3331
      %3648 = vmatpush.msra.mxu0 %v3327
      %3649 = vmatpush.msra.mxu0 %v3323
      %3650 = vmatpush.msra.mxu0 %v3319
      %3651 = vmatpush.msra.mxu0 %v3315
      %3652 = vmatpush.msra.mxu0 %v3311
      %3653 = vmatpush.msra.mxu0 %v3307
      %3654 = vmatpush.msra.mxu0 %v3303
      %3655 = vmatpush.msra.mxu0 %v3299
      %3656 = vmatpush.msra.mxu0 %v3295
      %3657 = vmatpush.msra.mxu0 %v3291
      %3658 = vmatpush.msra.mxu0 %v3287
      %3659 = vmatpush.msra.mxu0 %v3283
      %3660 = vmatpush.msra.mxu0 %v3279
      %3661 = vmatmul.f32.gmra.mxu0 %v3143
      %v3662 = vpop.f32.mrf.mxu0
      %v3663 = vadd.f32 %v3640, %v3662
      %3664 = vmatmul.f32.gmra.mxu0 %v3147
      %v3665 = vpop.f32.mrf.mxu0
      %v3666 = vadd.f32 %v3643, %v3665
      %3667 = vdwg.mxu0
      %3668 = vmatpush.msra.mxu0 %v3403
      %3669 = vmatpush.msra.mxu0 %v3399
      %3670 = vmatpush.msra.mxu0 %v3395
      %3671 = vmatpush.msra.mxu0 %v3391
      %3672 = vmatpush.msra.mxu0 %v3387
      %3673 = vmatpush.msra.mxu0 %v3383
      %3674 = vmatpush.msra.mxu0 %v3379
      %3675 = vmatpush.msra.mxu0 %v3375
      %3676 = vmatpush.msra.mxu0 %v3371
      %3677 = vmatpush.msra.mxu0 %v3367
      %3678 = vmatpush.msra.mxu0 %v3363
      %3679 = vmatpush.msra.mxu0 %v3359
      %3680 = vmatpush.msra.mxu0 %v3355
      %3681 = vmatpush.msra.mxu0 %v3351
      %3682 = vmatpush.msra.mxu0 %v3347
      %3683 = vmatpush.msra.mxu0 %v3343
      %3684 = vmatmul.f32.gmra.mxu0 %v3144
      %v3685 = vpop.f32.mrf.mxu0
      %v3686 = vadd.f32 %v3663, %v3685
      %3687 = vmatmul.f32.gmra.mxu0 %v3148
      %v3688 = vpop.f32.mrf.mxu0
      %v3689 = vadd.f32 %v3666, %v3688
      %3690 = vdwg.mxu0
      %3691 = vmatpush.msra.mxu0 %v3212
      %3692 = vmatpush.msra.mxu0 %v3208
      %3693 = vmatpush.msra.mxu0 %v3204
      %3694 = vmatpush.msra.mxu0 %v3200
      %3695 = vmatpush.msra.mxu0 %v3196
      %3696 = vmatpush.msra.mxu0 %v3192
      %3697 = vmatpush.msra.mxu0 %v3188
      %3698 = vmatpush.msra.mxu0 %v3184
      %3699 = vmatpush.msra.mxu0 %v3180
      %3700 = vmatpush.msra.mxu0 %v3176
      %3701 = vmatpush.msra.mxu0 %v3172
      %3702 = vmatpush.msra.mxu0 %v3168
      %3703 = vmatpush.msra.mxu0 %v3164
      %3704 = vmatpush.msra.mxu0 %v3160
      %3705 = vmatpush.msra.mxu0 %v3156
      %3706 = vmatpush.msra.mxu0 %v3152
      %3707 = vmatmul.f32.gmra.mxu0 %v3141
      %v3708 = vpop.f32.mrf.mxu0
      %v3709 = vadd.f32 %v3410, %v3708
      %3710 = vmatmul.f32.gmra.mxu0 %v3145
      %v3711 = vpop.f32.mrf.mxu0
      %v3712 = vadd.f32 %v3410, %v3711
      %3713 = vdwg.mxu0
      %3714 = vmatpush.msra.mxu0 %v3276
      %3715 = vmatpush.msra.mxu0 %v3272
      %3716 = vmatpush.msra.mxu0 %v3268
      %3717 = vmatpush.msra.mxu0 %v3264
      %3718 = vmatpush.msra.mxu0 %v3260
      %3719 = vmatpush.msra.mxu0 %v3256
      %3720 = vmatpush.msra.mxu0 %v3252
      %3721 = vmatpush.msra.mxu0 %v3248
      %3722 = vmatpush.msra.mxu0 %v3244
      %3723 = vmatpush.msra.mxu0 %v3240
      %3724 = vmatpush.msra.mxu0 %v3236
      %3725 = vmatpush.msra.mxu0 %v3232
      %3726 = vmatpush.msra.mxu0 %v3228
      %3727 = vmatpush.msra.mxu0 %v3224
      %3728 = vmatpush.msra.mxu0 %v3220
      %3729 = vmatpush.msra.mxu0 %v3216
      %3730 = vmatmul.f32.gmra.mxu0 %v3142
      %v3731 = vpop.f32.mrf.mxu0
      %v3732 = vadd.f32 %v3709, %v3731
      %3733 = vmatmul.f32.gmra.mxu0 %v3146
      %v3734 = vpop.f32.mrf.mxu0
      %v3735 = vadd.f32 %v3712, %v3734
      %3736 = vdwg.mxu0
      %3737 = vmatpush.msra.mxu0 %v3340
      %3738 = vmatpush.msra.mxu0 %v3336
      %3739 = vmatpush.msra.mxu0 %v3332
      %3740 = vmatpush.msra.mxu0 %v3328
      %3741 = vmatpush.msra.mxu0 %v3324
      %3742 = vmatpush.msra.mxu0 %v3320
      %3743 = vmatpush.msra.mxu0 %v3316
      %3744 = vmatpush.msra.mxu0 %v3312
      %3745 = vmatpush.msra.mxu0 %v3308
      %3746 = vmatpush.msra.mxu0 %v3304
      %3747 = vmatpush.msra.mxu0 %v3300
      %3748 = vmatpush.msra.mxu0 %v3296
      %3749 = vmatpush.msra.mxu0 %v3292
      %3750 = vmatpush.msra.mxu0 %v3288
      %3751 = vmatpush.msra.mxu0 %v3284
      %3752 = vmatpush.msra.mxu0 %v3280
      %3753 = vmatmul.f32.gmra.mxu0 %v3143
      %v3754 = vpop.f32.mrf.mxu0
      %v3755 = vadd.f32 %v3732, %v3754
      %3756 = vmatmul.f32.gmra.mxu0 %v3147
      %v3757 = vpop.f32.mrf.mxu0
      %v3758 = vadd.f32 %v3735, %v3757
      %3759 = vdwg.mxu0
      %3760 = vmatpush.msra.mxu0 %v3404
      %3761 = vmatpush.msra.mxu0 %v3400
      %3762 = vmatpush.msra.mxu0 %v3396
      %3763 = vmatpush.msra.mxu0 %v3392
      %3764 = vmatpush.msra.mxu0 %v3388
      %3765 = vmatpush.msra.mxu0 %v3384
      %3766 = vmatpush.msra.mxu0 %v3380
      %3767 = vmatpush.msra.mxu0 %v3376
      %3768 = vmatpush.msra.mxu0 %v3372
      %3769 = vmatpush.msra.mxu0 %v3368
      %3770 = vmatpush.msra.mxu0 %v3364
      %3771 = vmatpush.msra.mxu0 %v3360
      %3772 = vmatpush.msra.mxu0 %v3356
      %3773 = vmatpush.msra.mxu0 %v3352
      %3774 = vmatpush.msra.mxu0 %v3348
      %3775 = vmatpush.msra.mxu0 %v3344
      %3776 = vmatmul.f32.gmra.mxu0 %v3144
      %v3777 = vpop.f32.mrf.mxu0
      %v3778 = vadd.f32 %v3755, %v3777
      %3779 = vmatmul.f32.gmra.mxu0 %v3148
      %v3780 = vpop.f32.mrf.mxu0
      %v3781 = vadd.f32 %v3758, %v3780
      %3782 = vdwg.mxu0
      %v3783 = vld [vmem:[%s327] sm:$0xff]
      %v3784 = vld [vmem:[%s327 + $0x8] sm:$0xff]
      %v3785 = vld [vmem:[%s327 + $0x10] sm:$0xff]
      %v3786 = vld [vmem:[%s327 + $0x18] sm:$0xff]
      %v3787 = vld [vmem:[%s327 + $0x20] sm:$0xff]
      %v3788 = vld [vmem:[%s327 + $0x28] sm:$0xff]
      %v3789 = vld [vmem:[%s327 + $0x30] sm:$0xff]
      %v3790 = vld [vmem:[%s327 + $0x38] sm:$0xff]
      %v3791 = vadd.f32 %v3502, %v3783
      %v3792 = vadd.f32 %v3594, %v3784
      %v3793 = vadd.f32 %v3686, %v3785
      %v3794 = vadd.f32 %v3778, %v3786
      %v3795 = vadd.f32 %v3505, %v3787
      %v3796 = vadd.f32 %v3597, %v3788
      %v3797 = vadd.f32 %v3689, %v3789
      %v3798 = vadd.f32 %v3781, %v3790
      %vm3799 = vcmp.gt.f32.partialorder %v3791, 0.0
      %vm3800 = vcmp.gt.f32.partialorder %v3792, 0.0
      %vm3801 = vcmp.gt.f32.partialorder %v3793, 0.0
      %vm3802 = vcmp.gt.f32.partialorder %v3794, 0.0
      %vm3803 = vcmp.gt.f32.partialorder %v3795, 0.0
      %vm3804 = vcmp.gt.f32.partialorder %v3796, 0.0
      %vm3805 = vcmp.gt.f32.partialorder %v3797, 0.0
      %vm3806 = vcmp.gt.f32.partialorder %v3798, 0.0
      %v3807 = vmul.f32 %v3791, 0.01
      %v3808 = vmul.f32 %v3792, 0.01
      %v3809 = vmul.f32 %v3793, 0.01
      %v3810 = vmul.f32 %v3794, 0.01
      %v3811 = vmul.f32 %v3795, 0.01
      %v3812 = vmul.f32 %v3796, 0.01
      %v3813 = vmul.f32 %v3797, 0.01
      %v3814 = vmul.f32 %v3798, 0.01
      %v3815 = vsel %vm3799, %v3791, %v3807
      %v3816 = vsel %vm3800, %v3792, %v3808
      %v3817 = vsel %vm3801, %v3793, %v3809
      %v3818 = vsel %vm3802, %v3794, %v3810
      %v3819 = vsel %vm3803, %v3795, %v3811
      %v3820 = vsel %vm3804, %v3796, %v3812
      %v3821 = vsel %vm3805, %v3797, %v3813
      %v3822 = vsel %vm3806, %v3798, %v3814
      %3823 = vst [vmem:[%s332] sm:$0xff] %v3815
      %3824 = vst [vmem:[%s332 + $0x8] sm:$0xff] %v3816
      %3825 = vst [vmem:[%s332 + $0x10] sm:$0xff] %v3817
      %3826 = vst [vmem:[%s332 + $0x18] sm:$0xff] %v3818
      %3827 = vst [vmem:[%s332 + $0x20] sm:$0xff] %v3819
      %3828 = vst [vmem:[%s332 + $0x28] sm:$0xff] %v3820
      %3829 = vst [vmem:[%s332 + $0x30] sm:$0xff] %v3821
      %3830 = vst [vmem:[%s332 + $0x38] sm:$0xff] %v3822
      %p3831 = scmp.lt.s32.totalorder %s20, 1
      %s3832 = scalar_select %p3831, %s20, 1
      %s3833 = smul.addr %s3832, 8
      %s3834 = smul.addr %s3833, 8
      %s3835 = scalar_lea.vmem %s9, %s3834
      // Predicated region
      $region57: #{basic_block_sep.1} parent=55 // pred_check
        %p3836 = pneg %p232
      $region58: #{basic_block_sep.1} parent=55 // pred_check_branch
        %3838 = sbr.rel (%p3836) target = $region60
      $region59: #{basic_block_sep.1} parent=55 // pred_region
        _
      $region60: #{basic_block_sep.1} parent=55 // pred_fallthru
        _
    $region56: #{basic_block_sep.1} parent=5 // pred_fallthru
      _
    %p3839 = scmp.le.s32.totalorder 2, %s15
    // Predicated region
    $region61: #{basic_block_sep.1} parent=5 // pred_check
      %p3840 = pneg %p3839
    $region62: #{basic_block_sep.1} parent=5 // pred_check_branch
      %3842 = sbr.rel (%p3840) target = $region64
    $region63: #{basic_block_sep.1} parent=5 // pred_region
      %s3843 = ssub.s32 %s15, 2
      // Predicated region
      $region65: #{basic_block_sep.1} parent=63 // pred_check
        %p3844 = pneg %p238
      $region66: #{basic_block_sep.1} parent=63 // pred_check_branch
        %3846 = sbr.rel (%p3844) target = $region68
      $region67: #{basic_block_sep.1} parent=63 // pred_region
        %p3847 = scmp.lt.s32.totalorder %s21, 1
        %s3848 = scalar_select %p3847, %s21, 1
        %s3849 = smul.addr %s3848, 8
        %s3850 = smul.addr %s3849, 8
        %s3851 = scalar_lea.vmem %s9, %s3850
      $region68: #{basic_block_sep.1} parent=63 // pred_fallthru
        _
    $region64: #{basic_block_sep.1} parent=5 // pred_fallthru
      _
  $region6: #{basic_block_sep.1} parent=0 // loop_footer
    %s19 = sadd.s32 1, %s15
  $region7: #{basic_block_sep.1} parent=0 // loop_footer_branch
    %14 = sbr.rel target = $region3
  $region8: #{basic_block_sep.1} parent=0 // loop_exit
    _

</llo_original>
